<compile_context>
chip_gen: v7x
topology: tpu7x:2x2x1
jax: 0.10.0
libtpu: 0.0.40
codegen_flags: <defaults>
</compile_context>

<pallas_src>
import jax
import jax.numpy as jnp
from jax.experimental import pallas as pl
from jax.experimental.pallas import tpu as pltpu

S_LEN = 8      # src length
T_LEN = 9      # tgt length (before dropping the last token)
BATCH = 2
EMB = 32
HID = 32
VOCAB = 20
NEG_INF = -1e9


# ------------------------------ fused kernel --------------------------------
def _vi_nmt_fused_kernel(
    src_emb_ref,    # (S*B, E)  time-major flattened src embeddings
    valid_ref,      # (S*B, H)  1.0 where t < lengths[b], else 0.0 (broadcast to H)
    tgt_emb_ref,    # (T*B, E)  time-major flattened decoder-input embeddings
    inf_emb_ref,    # (B*T, E)  batch-major flattened inference-net embeddings
    mask_ref,       # (B, S)    additive attention mask (0 / NEG_INF)
    enc_wih_ref, enc_whh_ref, enc_b_ref,
    dec_wih_ref, dec_whh_ref, dec_b_ref,
    wa_t_ref,       # (H, H)    W_a^T so mem_a = mem @ W_a^T
    wc_ctx_ref, wc_s_ref, bc_ref,
    inf_wq_ref,
    dec_out_ref,    # (B, T, H)  batch-major decoder outputs
    p_attn_ref,     # (B, T, S)  prior attention
    q_out_ref,      # (B, T, S)  posterior attention
    dec_state_ref,  # (B, H)
    mem_scr,        # VMEM (B, S, H) memory bank scratch
    s_scr,          # VMEM (B, T, H) decoder state scratch
):
    B, T, H = dec_out_ref.shape
    S = mem_scr.shape[1]

    # ---------------- encoder ----------------
    # Hoist the input projection out of the serial recurrence: one MXU call.
    x_proj = jnp.dot(src_emb_ref[...], enc_wih_ref[...],
                     preferred_element_type=jnp.float32) + enc_b_ref[...]   # (S*B, H)
    valid = valid_ref[...]                                                  # (S*B, H)
    w_hh_e = enc_whh_ref[...]

    h = jnp.zeros((B, H), jnp.float32)
    for t in range(S):  # unrolled: S is small and static
        xt = x_proj[t * B:(t + 1) * B]                                      # (B, H)
        vt = valid[t * B:(t + 1) * B]                                       # (B, H)
        h_new = jnp.tanh(xt + jnp.dot(h, w_hh_e,
                                      preferred_element_type=jnp.float32))
        # pack_padded_sequence semantics: freeze state past `lengths`,
        # padded memory-bank rows are zero (and masked in attention anyway).
        h = vt * h_new + (1.0 - vt) * h
        mem_scr[:, pl.ds(t, 1), :] = (vt * h_new)[:, None, :]
    # h == encoder final state respecting lengths -> decoder init state

    mem = mem_scr[...]                                                      # (B, S, H)
    # Fold W_a into the bank once: score = s . mem_a (removes one matmul per
    # decoder timestep).
    mem_a = jnp.dot(mem.reshape(B * S, H), wa_t_ref[...],
                    preferred_element_type=jnp.float32).reshape(B, S, H)
    mask = mask_ref[...]                                                    # (B, S)

    # ---------------- decoder recurrence (the ONLY serial decoder work) -----
    y_proj = jnp.dot(tgt_emb_ref[...], dec_wih_ref[...],
                     preferred_element_type=jnp.float32) + dec_b_ref[...]   # (T*B, H)
    w_hh_d = dec_whh_ref[...]

    s = h  # init decoder state from encoder final state
    for t in range(T):  # unrolled serial recurrence: one (B,H)@(H,H) + tanh
        s = jnp.tanh(y_proj[t * B:(t + 1) * B]
                     + jnp.dot(s, w_hh_d, preferred_element_type=jnp.float32))
        s_scr[:, pl.ds(t, 1), :] = s[:, None, :]
    dec_state_ref[...] = s

    s_all = s_scr[...]                                                      # (B, T, H)

    # ------------- attention, batched over all timesteps at once -------------
    # Luong "general" attention with W_a pre-folded; MXU batched contractions.
    scores = jnp.einsum('bth,bsh->bts', s_all, mem_a,
                        preferred_element_type=jnp.float32) + mask[:, None, :]
    m = jnp.max(scores, axis=-1, keepdims=True)
    e = jnp.exp(scores - m)
    align = e / jnp.sum(e, axis=-1, keepdims=True)                          # (B, T, S)
    p_attn_ref[...] = align
    ctx = jnp.einsum('bts,bsh->bth', align, mem,
                     preferred_element_type=jnp.float32)                    # (B, T, H)

    # output projection tanh([ctx; s] @ W_c + b), batched over all T*B rows.
    out = jnp.tanh(
        jnp.dot(ctx.reshape(B * T, H), wc_ctx_ref[...],
                preferred_element_type=jnp.float32)
        + jnp.dot(s_all.reshape(B * T, H), wc_s_ref[...],
                  preferred_element_type=jnp.float32)
        + bc_ref[...])
    dec_out_ref[...] = out.reshape(B, T, H)

    # ------------- inference network (posterior q(a | x, y)) -------------
    # Fully batched: one projection matmul + one batched MXU contraction.
    q_inf = jnp.tanh(jnp.dot(inf_emb_ref[...], inf_wq_ref[...],
                             preferred_element_type=jnp.float32)).reshape(B, T, H)
    inf_scores = jnp.einsum('bth,bsh->bts', q_inf, mem,
                            preferred_element_type=jnp.float32) + mask[:, None, :]
    m_i = jnp.max(inf_scores, axis=-1, keepdims=True)
    e_i = jnp.exp(inf_scores - m_i)
    q_out_ref[...] = e_i / jnp.sum(e_i, axis=-1, keepdims=True)


def _full_spec(shape):
    n = len(shape)
    return pl.BlockSpec(shape, lambda i: (0,) * n)


# ------------------------------ full forward --------------------------------
def vi_nmt_forward(params, src, tgt, lengths, use_prior=False):
    """src: int32 [S, B]; tgt: int32 [T, B]; lengths: int32 [B].

    Returns (decoder_outputs, attns, dec_state, dist_info, decoder_outputs_baseline),
    mirroring ViNMTModel.forward.
    """
    # embeddings + dropout (eval mode -> identity)
    src_emb = params["src_embed"][src]                  # (S, B, E)
    tgt_emb_full = params["tgt_embed"][tgt]             # (Tfull, B, E)
    inftgt_emb = tgt_emb_full[1:]                       # tgt[1:]  (inference net input)
    tgt_emb = tgt_emb_full[:-1]                         # tgt[:-1] (decoder input)

    S, B, E = src_emb.shape
    T = tgt_emb.shape[0]
    H = params["enc_w_hh"].shape[0]

    # length masks (pack_padded / attention-mask semantics)
    valid = (jnp.arange(S)[:, None] < lengths[None, :]).astype(jnp.float32)      # (S, B)
    valid_sbh = jnp.broadcast_to(valid[:, :, None], (S, B, H)).reshape(S * B, H)
    mask = jnp.where(jnp.arange(S)[None, :] < lengths[:, None],
                     0.0, NEG_INF).astype(jnp.float32)                           # (B, S)

    # layout plumbing so in-kernel projections are single large MXU calls
    src_emb_flat = src_emb.reshape(S * B, E)
    tgt_emb_flat = tgt_emb.reshape(T * B, E)
    inf_emb_flat = jnp.transpose(inftgt_emb, (1, 0, 2)).reshape(B * T, E)
    w_a_t = params["attn_w_a"].T                        # mem_a = mem @ W_a^T

    out_shapes = (
        jax.ShapeDtypeStruct((B, T, H), jnp.float32),   # decoder outputs (batch-major)
        jax.ShapeDtypeStruct((B, T, S), jnp.float32),   # prior attention dists
        jax.ShapeDtypeStruct((B, T, S), jnp.float32),   # posterior q scores
        jax.ShapeDtypeStruct((B, H), jnp.float32),      # final decoder state
    )
    grid_spec = pltpu.PrefetchScalarGridSpec(
        num_scalar_prefetch=0,
        grid=(1,),                                      # single step: recurrences run in-kernel
        in_specs=[
            _full_spec((S * B, E)),     # src_emb_flat
            _full_spec((S * B, H)),     # valid_sbh
            _full_spec((T * B, E)),     # tgt_emb_flat
            _full_spec((B * T, E)),     # inf_emb_flat
            _full_spec((B, S)),         # mask
            _full_spec((E, H)),         # enc_w_ih
            _full_spec((H, H)),         # enc_w_hh
            _full_spec((1, H)),         # enc_b
            _full_spec((E, H)),         # dec_w_ih
            _full_spec((H, H)),         # dec_w_hh
            _full_spec((1, H)),         # dec_b
            _full_spec((H, H)),         # w_a_t
            _full_spec((H, H)),         # attn_w_c_ctx
            _full_spec((H, H)),         # attn_w_c_s
            _full_spec((1, H)),         # attn_b_c
            _full_spec((E, H)),         # inf_w_q
        ],
        out_specs=[
            _full_spec((B, T, H)),
            _full_spec((B, T, S)),
            _full_spec((B, T, S)),
            _full_spec((B, H)),
        ],
        scratch_shapes=[pltpu.VMEM((B, S, H), jnp.float32),
                        pltpu.VMEM((B, T, H), jnp.float32)],
    )

    dec_out_bth, p_attn_bts, q_bts, dec_state = pl.pallas_call(
        _vi_nmt_fused_kernel,
        out_shape=out_shapes,
        grid_spec=grid_spec,
        compiler_params=pltpu.CompilerParams(
            dimension_semantics=("arbitrary",)),
    )(src_emb_flat, valid_sbh, tgt_emb_flat, inf_emb_flat, mask,
      params["enc_w_ih"], params["enc_w_hh"], params["enc_b"],
      params["dec_w_ih"], params["dec_w_hh"], params["dec_b"],
      w_a_t, params["attn_w_c_ctx"], params["attn_w_c_s"], params["attn_b_c"],
      params["inf_w_q"])

    # module-convention (time-major) views: trivial layout glue outside the kernel
    dec_out = jnp.transpose(dec_out_bth, (1, 0, 2))                          # (T, B, H)
    p_attn = jnp.transpose(p_attn_bts, (1, 0, 2))                            # (T, B, S)
    # q_scores is computed in-kernel (fused, nearly free); dropped when
    # use_prior=True, matching ViNMTModel semantics.
    q_scores = None if use_prior else jnp.transpose(q_bts, (1, 0, 2))        # (T, B, S)

    attns = {"std": p_attn}
    dist_info = {"p_scores": p_attn, "q_scores": q_scores}
    # This simplified decoder is deterministic soft attention (no sampling), so the
    # "no-sample baseline" decoder pass coincides with the main pass.
    # TODO(synk): sampled-attention modes ('sample'/'gumbel'/'enum') with a distinct
    # baseline pass are not replicated.
    decoder_outputs_baseline = dec_out
    return dec_out, attns, dec_state, dist_info, decoder_outputs_baseline


# --------------------------------- params -----------------------------------
def init_params(key):
    ks = jax.random.split(key, 12)

    def w(k, shape, fan_in):
        return (jax.random.normal(k, shape, jnp.float32) / jnp.sqrt(fan_in)).astype(jnp.float32)

    return {
        "src_embed":    w(ks[0], (VOCAB, EMB), EMB),
        "tgt_embed":    w(ks[1], (VOCAB, EMB), EMB),
        "enc_w_ih":     w(ks[2], (EMB, HID), EMB),
        "enc_w_hh":     w(ks[3], (HID, HID), HID),
        "enc_b":        jnp.zeros((1, HID), jnp.float32),
        "dec_w_ih":     w(ks[4], (EMB, HID), EMB),
        "dec_w_hh":     w(ks[5], (HID, HID), HID),
        "dec_b":        jnp.zeros((1, HID), jnp.float32),
        "attn_w_a":     w(ks[6], (HID, HID), HID),
        "attn_w_c_ctx": w(ks[7], (HID, HID), 2 * HID),   # split of W_c [2H, H]
        "attn_w_c_s":   w(ks[8], (HID, HID), 2 * HID),
        "attn_b_c":     jnp.zeros((1, HID), jnp.float32),
        "inf_w_q":      w(ks[9], (EMB, HID), EMB),
    }


if __name__ == "__main__":
    key = jax.random.PRNGKey(0)
    k_p, k_src, k_tgt = jax.random.split(key, 3)
    params = init_params(k_p)

    src = jax.random.randint(k_src, (S_LEN, BATCH), 0, VOCAB, dtype=jnp.int32)
    tgt = jax.random.randint(k_tgt, (T_LEN, BATCH), 0, VOCAB, dtype=jnp.int32)
    lengths = jnp.array([S_LEN, S_LEN - 2], dtype=jnp.int32)

    fwd = jax.jit(vi_nmt_forward, static_argnames=("use_prior",))
    outs = fwd(params, src, tgt, lengths)
    outs = jax.block_until_ready(outs)

    dec_out, attns, dec_state, dist_info, baseline = outs
    assert dec_out.shape == (T_LEN - 1, BATCH, HID)
    assert attns["std"].shape == (T_LEN - 1, BATCH, S_LEN)
    assert dist_info["q_scores"].shape == (T_LEN - 1, BATCH, S_LEN)
    assert dec_state.shape == (BATCH, HID)
    assert baseline.shape == (T_LEN - 1, BATCH, HID)
    # attention rows are valid distributions
    assert bool(jnp.allclose(attns["std"].sum(-1), 1.0, atol=1e-5))
    assert bool(jnp.allclose(dist_info["q_scores"].sum(-1), 1.0, atol=1e-5))
    # padded source positions get (numerically) zero attention mass
    assert bool(jnp.all(attns["std"][:, 1, S_LEN - 2:] < 1e-6))
    assert bool(jnp.all(jnp.isfinite(dec_out)))

    print("KERNEL_OK")
</pallas_src>

<mosaic_0001>
module attributes {stable_mosaic.version = 11 : i64} {
  func.func @_vi_nmt_fused_kernel(%arg0: i32, %arg1: memref<16x32xf32, #tpu.memory_space<vmem>>, %arg2: memref<16x32xf32, #tpu.memory_space<vmem>>, %arg3: memref<16x32xf32, #tpu.memory_space<vmem>>, %arg4: memref<16x32xf32, #tpu.memory_space<vmem>>, %arg5: memref<2x8xf32, #tpu.memory_space<vmem>>, %arg6: memref<32x32xf32, #tpu.memory_space<vmem>>, %arg7: memref<32x32xf32, #tpu.memory_space<vmem>>, %arg8: memref<1x32xf32, #tpu.memory_space<vmem>>, %arg9: memref<32x32xf32, #tpu.memory_space<vmem>>, %arg10: memref<32x32xf32, #tpu.memory_space<vmem>>, %arg11: memref<1x32xf32, #tpu.memory_space<vmem>>, %arg12: memref<32x32xf32, #tpu.memory_space<vmem>>, %arg13: memref<32x32xf32, #tpu.memory_space<vmem>>, %arg14: memref<32x32xf32, #tpu.memory_space<vmem>>, %arg15: memref<1x32xf32, #tpu.memory_space<vmem>>, %arg16: memref<32x32xf32, #tpu.memory_space<vmem>>, %arg17: memref<2x8x32xf32, #tpu.memory_space<vmem>>, %arg18: memref<2x8x8xf32, #tpu.memory_space<vmem>>, %arg19: memref<2x8x8xf32, #tpu.memory_space<vmem>>, %arg20: memref<2x32xf32, #tpu.memory_space<vmem>>, %arg21: memref<2x8x32xf32, #tpu.memory_space<vmem>>, %arg22: memref<2x8x32xf32, #tpu.memory_space<vmem>>) attributes {dimension_semantics = [#tpu.dimension_semantics<arbitrary>], iteration_bounds = array<i64: 1>, scalar_prefetch = 0 : i64, scratch_operands = 2 : i64, tpu.core_type = #tpu.core_type<tc>, window_params = [{pipeline_mode = #tpu.pipeline_mode<synchronous>, transform_indices = @transform_0, window_bounds = array<i64: 16, 32>}, {pipeline_mode = #tpu.pipeline_mode<synchronous>, transform_indices = @transform_1, window_bounds = array<i64: 16, 32>}, {pipeline_mode = #tpu.pipeline_mode<synchronous>, transform_indices = @transform_2, window_bounds = array<i64: 16, 32>}, {pipeline_mode = #tpu.pipeline_mode<synchronous>, transform_indices = @transform_3, window_bounds = array<i64: 16, 32>}, {pipeline_mode = #tpu.pipeline_mode<synchronous>, transform_indices = @transform_4, window_bounds = array<i64: 2, 8>}, {pipeline_mode = #tpu.pipeline_mode<synchronous>, transform_indices = @transform_5, window_bounds = array<i64: 32, 32>}, {pipeline_mode = #tpu.pipeline_mode<synchronous>, transform_indices = @transform_6, window_bounds = array<i64: 32, 32>}, {pipeline_mode = #tpu.pipeline_mode<synchronous>, transform_indices = @transform_7, window_bounds = array<i64: 1, 32>}, {pipeline_mode = #tpu.pipeline_mode<synchronous>, transform_indices = @transform_8, window_bounds = array<i64: 32, 32>}, {pipeline_mode = #tpu.pipeline_mode<synchronous>, transform_indices = @transform_9, window_bounds = array<i64: 32, 32>}, {pipeline_mode = #tpu.pipeline_mode<synchronous>, transform_indices = @transform_10, window_bounds = array<i64: 1, 32>}, {pipeline_mode = #tpu.pipeline_mode<synchronous>, transform_indices = @transform_11, window_bounds = array<i64: 32, 32>}, {pipeline_mode = #tpu.pipeline_mode<synchronous>, transform_indices = @transform_12, window_bounds = array<i64: 32, 32>}, {pipeline_mode = #tpu.pipeline_mode<synchronous>, transform_indices = @transform_13, window_bounds = array<i64: 32, 32>}, {pipeline_mode = #tpu.pipeline_mode<synchronous>, transform_indices = @transform_14, window_bounds = array<i64: 1, 32>}, {pipeline_mode = #tpu.pipeline_mode<synchronous>, transform_indices = @transform_15, window_bounds = array<i64: 32, 32>}, {pipeline_mode = #tpu.pipeline_mode<synchronous>, transform_indices = @transform_16, window_bounds = array<i64: 2, 8, 32>}, {pipeline_mode = #tpu.pipeline_mode<synchronous>, transform_indices = @transform_17, window_bounds = array<i64: 2, 8, 8>}, {pipeline_mode = #tpu.pipeline_mode<synchronous>, transform_indices = @transform_18, window_bounds = array<i64: 2, 8, 8>}, {pipeline_mode = #tpu.pipeline_mode<synchronous>, transform_indices = @transform_19, window_bounds = array<i64: 2, 32>}]} {
    %c0 = arith.constant 0 : index
    %c0_0 = arith.constant 0 : index
    %0 = vector.load %arg1[%c0, %c0_0] : memref<16x32xf32, #tpu.memory_space<vmem>>, vector<16x32xf32>
    %c0_1 = arith.constant 0 : index
    %c0_2 = arith.constant 0 : index
    %1 = vector.load %arg6[%c0_1, %c0_2] : memref<32x32xf32, #tpu.memory_space<vmem>>, vector<32x32xf32>
    %cst = arith.constant dense<0.000000e+00> : vector<16x32xf32>
    %2 = tpu.matmul %0, %1, %cst {dimension_numbers = #tpu.dot_dimension_numbers<[1], [0], [0], [1], [0, 0, 1, 1], [], []>} : vector<16x32xf32>, vector<32x32xf32>, vector<16x32xf32> -> vector<16x32xf32>
    %c0_3 = arith.constant 0 : index
    %c0_4 = arith.constant 0 : index
    %3 = vector.load %arg8[%c0_3, %c0_4] : memref<1x32xf32, #tpu.memory_space<vmem>>, vector<1x32xf32>
    %4 = vector.broadcast %3 : vector<1x32xf32> to vector<16x32xf32>
    %5 = arith.addf %2, %4 : vector<16x32xf32>
    %c0_5 = arith.constant 0 : index
    %c0_6 = arith.constant 0 : index
    %6 = vector.load %arg2[%c0_5, %c0_6] : memref<16x32xf32, #tpu.memory_space<vmem>>, vector<16x32xf32>
    %c0_7 = arith.constant 0 : index
    %c0_8 = arith.constant 0 : index
    %7 = vector.load %arg7[%c0_7, %c0_8] : memref<32x32xf32, #tpu.memory_space<vmem>>, vector<32x32xf32>
    %cst_9 = arith.constant 0.000000e+00 : f32
    %8 = vector.broadcast %cst_9 : f32 to vector<2x32xf32>
    %9 = vector.extract_strided_slice %5 {offsets = [0, 0], sizes = [2, 32], strides = [1, 1]} : vector<16x32xf32> to vector<2x32xf32>
    %10 = vector.extract_strided_slice %6 {offsets = [0, 0], sizes = [2, 32], strides = [1, 1]} : vector<16x32xf32> to vector<2x32xf32>
    %cst_10 = arith.constant dense<0.000000e+00> : vector<2x32xf32>
    %11 = tpu.matmul %8, %7, %cst_10 {dimension_numbers = #tpu.dot_dimension_numbers<[1], [0], [0], [1], [0, 0, 1, 1], [], []>} : vector<2x32xf32>, vector<32x32xf32>, vector<2x32xf32> -> vector<2x32xf32>
    %12 = arith.addf %9, %11 : vector<2x32xf32>
    %13 = math.tanh %12 : vector<2x32xf32>
    %14 = arith.mulf %10, %13 : vector<2x32xf32>
    %cst_11 = arith.constant 1.000000e+00 : f32
    %15 = vector.broadcast %cst_11 : f32 to vector<2x32xf32>
    %16 = arith.subf %15, %10 : vector<2x32xf32>
    %17 = arith.mulf %16, %8 : vector<2x32xf32>
    %18 = arith.addf %14, %17 : vector<2x32xf32>
    %19 = arith.mulf %10, %13 : vector<2x32xf32>
    %20 = vector.shape_cast %19 : vector<2x32xf32> to vector<2x1x32xf32>
    %c0_12 = arith.constant 0 : index
    %c0_13 = arith.constant 0 : index
    %c0_14 = arith.constant 0 : index
    %21 = vector.load %arg21[%c0_12, %c0_13, %c0_14] : memref<2x8x32xf32, #tpu.memory_space<vmem>>, vector<2x1x32xf32>
    tpu.vector_store %arg21[%c0_12, %c0_13, %c0_14], %20 {strides = array<i32>} : memref<2x8x32xf32, #tpu.memory_space<vmem>>, vector<2x1x32xf32>,
    %22 = vector.extract_strided_slice %5 {offsets = [2, 0], sizes = [2, 32], strides = [1, 1]} : vector<16x32xf32> to vector<2x32xf32>
    %23 = vector.extract_strided_slice %6 {offsets = [2, 0], sizes = [2, 32], strides = [1, 1]} : vector<16x32xf32> to vector<2x32xf32>
    %cst_15 = arith.constant dense<0.000000e+00> : vector<2x32xf32>
    %24 = tpu.matmul %18, %7, %cst_15 {dimension_numbers = #tpu.dot_dimension_numbers<[1], [0], [0], [1], [0, 0, 1, 1], [], []>} : vector<2x32xf32>, vector<32x32xf32>, vector<2x32xf32> -> vector<2x32xf32>
    %25 = arith.addf %22, %24 : vector<2x32xf32>
    %26 = math.tanh %25 : vector<2x32xf32>
    %27 = arith.mulf %23, %26 : vector<2x32xf32>
    %cst_16 = arith.constant 1.000000e+00 : f32
    %28 = vector.broadcast %cst_16 : f32 to vector<2x32xf32>
    %29 = arith.subf %28, %23 : vector<2x32xf32>
    %30 = arith.mulf %29, %18 : vector<2x32xf32>
    %31 = arith.addf %27, %30 : vector<2x32xf32>
    %32 = arith.mulf %23, %26 : vector<2x32xf32>
    %33 = vector.shape_cast %32 : vector<2x32xf32> to vector<2x1x32xf32>
    %c0_17 = arith.constant 0 : index
    %c1 = arith.constant 1 : index
    %c0_18 = arith.constant 0 : index
    %34 = vector.load %arg21[%c0_17, %c1, %c0_18] : memref<2x8x32xf32, #tpu.memory_space<vmem>>, vector<2x1x32xf32>
    tpu.vector_store %arg21[%c0_17, %c1, %c0_18], %33 {strides = array<i32>} : memref<2x8x32xf32, #tpu.memory_space<vmem>>, vector<2x1x32xf32>,
    %35 = vector.extract_strided_slice %5 {offsets = [4, 0], sizes = [2, 32], strides = [1, 1]} : vector<16x32xf32> to vector<2x32xf32>
    %36 = vector.extract_strided_slice %6 {offsets = [4, 0], sizes = [2, 32], strides = [1, 1]} : vector<16x32xf32> to vector<2x32xf32>
    %cst_19 = arith.constant dense<0.000000e+00> : vector<2x32xf32>
    %37 = tpu.matmul %31, %7, %cst_19 {dimension_numbers = #tpu.dot_dimension_numbers<[1], [0], [0], [1], [0, 0, 1, 1], [], []>} : vector<2x32xf32>, vector<32x32xf32>, vector<2x32xf32> -> vector<2x32xf32>
    %38 = arith.addf %35, %37 : vector<2x32xf32>
    %39 = math.tanh %38 : vector<2x32xf32>
    %40 = arith.mulf %36, %39 : vector<2x32xf32>
    %cst_20 = arith.constant 1.000000e+00 : f32
    %41 = vector.broadcast %cst_20 : f32 to vector<2x32xf32>
    %42 = arith.subf %41, %36 : vector<2x32xf32>
    %43 = arith.mulf %42, %31 : vector<2x32xf32>
    %44 = arith.addf %40, %43 : vector<2x32xf32>
    %45 = arith.mulf %36, %39 : vector<2x32xf32>
    %46 = vector.shape_cast %45 : vector<2x32xf32> to vector<2x1x32xf32>
    %c0_21 = arith.constant 0 : index
    %c2 = arith.constant 2 : index
    %c0_22 = arith.constant 0 : index
    %47 = vector.load %arg21[%c0_21, %c2, %c0_22] : memref<2x8x32xf32, #tpu.memory_space<vmem>>, vector<2x1x32xf32>
    tpu.vector_store %arg21[%c0_21, %c2, %c0_22], %46 {strides = array<i32>} : memref<2x8x32xf32, #tpu.memory_space<vmem>>, vector<2x1x32xf32>,
    %48 = vector.extract_strided_slice %5 {offsets = [6, 0], sizes = [2, 32], strides = [1, 1]} : vector<16x32xf32> to vector<2x32xf32>
    %49 = vector.extract_strided_slice %6 {offsets = [6, 0], sizes = [2, 32], strides = [1, 1]} : vector<16x32xf32> to vector<2x32xf32>
    %cst_23 = arith.constant dense<0.000000e+00> : vector<2x32xf32>
    %50 = tpu.matmul %44, %7, %cst_23 {dimension_numbers = #tpu.dot_dimension_numbers<[1], [0], [0], [1], [0, 0, 1, 1], [], []>} : vector<2x32xf32>, vector<32x32xf32>, vector<2x32xf32> -> vector<2x32xf32>
    %51 = arith.addf %48, %50 : vector<2x32xf32>
    %52 = math.tanh %51 : vector<2x32xf32>
    %53 = arith.mulf %49, %52 : vector<2x32xf32>
    %cst_24 = arith.constant 1.000000e+00 : f32
    %54 = vector.broadcast %cst_24 : f32 to vector<2x32xf32>
    %55 = arith.subf %54, %49 : vector<2x32xf32>
    %56 = arith.mulf %55, %44 : vector<2x32xf32>
    %57 = arith.addf %53, %56 : vector<2x32xf32>
    %58 = arith.mulf %49, %52 : vector<2x32xf32>
    %59 = vector.shape_cast %58 : vector<2x32xf32> to vector<2x1x32xf32>
    %c0_25 = arith.constant 0 : index
    %c3 = arith.constant 3 : index
    %c0_26 = arith.constant 0 : index
    %60 = vector.load %arg21[%c0_25, %c3, %c0_26] : memref<2x8x32xf32, #tpu.memory_space<vmem>>, vector<2x1x32xf32>
    tpu.vector_store %arg21[%c0_25, %c3, %c0_26], %59 {strides = array<i32>} : memref<2x8x32xf32, #tpu.memory_space<vmem>>, vector<2x1x32xf32>,
    %61 = vector.extract_strided_slice %5 {offsets = [8, 0], sizes = [2, 32], strides = [1, 1]} : vector<16x32xf32> to vector<2x32xf32>
    %62 = vector.extract_strided_slice %6 {offsets = [8, 0], sizes = [2, 32], strides = [1, 1]} : vector<16x32xf32> to vector<2x32xf32>
    %cst_27 = arith.constant dense<0.000000e+00> : vector<2x32xf32>
    %63 = tpu.matmul %57, %7, %cst_27 {dimension_numbers = #tpu.dot_dimension_numbers<[1], [0], [0], [1], [0, 0, 1, 1], [], []>} : vector<2x32xf32>, vector<32x32xf32>, vector<2x32xf32> -> vector<2x32xf32>
    %64 = arith.addf %61, %63 : vector<2x32xf32>
    %65 = math.tanh %64 : vector<2x32xf32>
    %66 = arith.mulf %62, %65 : vector<2x32xf32>
    %cst_28 = arith.constant 1.000000e+00 : f32
    %67 = vector.broadcast %cst_28 : f32 to vector<2x32xf32>
    %68 = arith.subf %67, %62 : vector<2x32xf32>
    %69 = arith.mulf %68, %57 : vector<2x32xf32>
    %70 = arith.addf %66, %69 : vector<2x32xf32>
    %71 = arith.mulf %62, %65 : vector<2x32xf32>
    %72 = vector.shape_cast %71 : vector<2x32xf32> to vector<2x1x32xf32>
    %c0_29 = arith.constant 0 : index
    %c4 = arith.constant 4 : index
    %c0_30 = arith.constant 0 : index
    %73 = vector.load %arg21[%c0_29, %c4, %c0_30] : memref<2x8x32xf32, #tpu.memory_space<vmem>>, vector<2x1x32xf32>
    tpu.vector_store %arg21[%c0_29, %c4, %c0_30], %72 {strides = array<i32>} : memref<2x8x32xf32, #tpu.memory_space<vmem>>, vector<2x1x32xf32>,
    %74 = vector.extract_strided_slice %5 {offsets = [10, 0], sizes = [2, 32], strides = [1, 1]} : vector<16x32xf32> to vector<2x32xf32>
    %75 = vector.extract_strided_slice %6 {offsets = [10, 0], sizes = [2, 32], strides = [1, 1]} : vector<16x32xf32> to vector<2x32xf32>
    %cst_31 = arith.constant dense<0.000000e+00> : vector<2x32xf32>
    %76 = tpu.matmul %70, %7, %cst_31 {dimension_numbers = #tpu.dot_dimension_numbers<[1], [0], [0], [1], [0, 0, 1, 1], [], []>} : vector<2x32xf32>, vector<32x32xf32>, vector<2x32xf32> -> vector<2x32xf32>
    %77 = arith.addf %74, %76 : vector<2x32xf32>
    %78 = math.tanh %77 : vector<2x32xf32>
    %79 = arith.mulf %75, %78 : vector<2x32xf32>
    %cst_32 = arith.constant 1.000000e+00 : f32
    %80 = vector.broadcast %cst_32 : f32 to vector<2x32xf32>
    %81 = arith.subf %80, %75 : vector<2x32xf32>
    %82 = arith.mulf %81, %70 : vector<2x32xf32>
    %83 = arith.addf %79, %82 : vector<2x32xf32>
    %84 = arith.mulf %75, %78 : vector<2x32xf32>
    %85 = vector.shape_cast %84 : vector<2x32xf32> to vector<2x1x32xf32>
    %c0_33 = arith.constant 0 : index
    %c5 = arith.constant 5 : index
    %c0_34 = arith.constant 0 : index
    %86 = vector.load %arg21[%c0_33, %c5, %c0_34] : memref<2x8x32xf32, #tpu.memory_space<vmem>>, vector<2x1x32xf32>
    tpu.vector_store %arg21[%c0_33, %c5, %c0_34], %85 {strides = array<i32>} : memref<2x8x32xf32, #tpu.memory_space<vmem>>, vector<2x1x32xf32>,
    %87 = vector.extract_strided_slice %5 {offsets = [12, 0], sizes = [2, 32], strides = [1, 1]} : vector<16x32xf32> to vector<2x32xf32>
    %88 = vector.extract_strided_slice %6 {offsets = [12, 0], sizes = [2, 32], strides = [1, 1]} : vector<16x32xf32> to vector<2x32xf32>
    %cst_35 = arith.constant dense<0.000000e+00> : vector<2x32xf32>
    %89 = tpu.matmul %83, %7, %cst_35 {dimension_numbers = #tpu.dot_dimension_numbers<[1], [0], [0], [1], [0, 0, 1, 1], [], []>} : vector<2x32xf32>, vector<32x32xf32>, vector<2x32xf32> -> vector<2x32xf32>
    %90 = arith.addf %87, %89 : vector<2x32xf32>
    %91 = math.tanh %90 : vector<2x32xf32>
    %92 = arith.mulf %88, %91 : vector<2x32xf32>
    %cst_36 = arith.constant 1.000000e+00 : f32
    %93 = vector.broadcast %cst_36 : f32 to vector<2x32xf32>
    %94 = arith.subf %93, %88 : vector<2x32xf32>
    %95 = arith.mulf %94, %83 : vector<2x32xf32>
    %96 = arith.addf %92, %95 : vector<2x32xf32>
    %97 = arith.mulf %88, %91 : vector<2x32xf32>
    %98 = vector.shape_cast %97 : vector<2x32xf32> to vector<2x1x32xf32>
    %c0_37 = arith.constant 0 : index
    %c6 = arith.constant 6 : index
    %c0_38 = arith.constant 0 : index
    %99 = vector.load %arg21[%c0_37, %c6, %c0_38] : memref<2x8x32xf32, #tpu.memory_space<vmem>>, vector<2x1x32xf32>
    tpu.vector_store %arg21[%c0_37, %c6, %c0_38], %98 {strides = array<i32>} : memref<2x8x32xf32, #tpu.memory_space<vmem>>, vector<2x1x32xf32>,
    %100 = vector.extract_strided_slice %5 {offsets = [14, 0], sizes = [2, 32], strides = [1, 1]} : vector<16x32xf32> to vector<2x32xf32>
    %101 = vector.extract_strided_slice %6 {offsets = [14, 0], sizes = [2, 32], strides = [1, 1]} : vector<16x32xf32> to vector<2x32xf32>
    %cst_39 = arith.constant dense<0.000000e+00> : vector<2x32xf32>
    %102 = tpu.matmul %96, %7, %cst_39 {dimension_numbers = #tpu.dot_dimension_numbers<[1], [0], [0], [1], [0, 0, 1, 1], [], []>} : vector<2x32xf32>, vector<32x32xf32>, vector<2x32xf32> -> vector<2x32xf32>
    %103 = arith.addf %100, %102 : vector<2x32xf32>
    %104 = math.tanh %103 : vector<2x32xf32>
    %105 = arith.mulf %101, %104 : vector<2x32xf32>
    %cst_40 = arith.constant 1.000000e+00 : f32
    %106 = vector.broadcast %cst_40 : f32 to vector<2x32xf32>
    %107 = arith.subf %106, %101 : vector<2x32xf32>
    %108 = arith.mulf %107, %96 : vector<2x32xf32>
    %109 = arith.addf %105, %108 : vector<2x32xf32>
    %110 = arith.mulf %101, %104 : vector<2x32xf32>
    %111 = vector.shape_cast %110 : vector<2x32xf32> to vector<2x1x32xf32>
    %c0_41 = arith.constant 0 : index
    %c7 = arith.constant 7 : index
    %c0_42 = arith.constant 0 : index
    %112 = vector.load %arg21[%c0_41, %c7, %c0_42] : memref<2x8x32xf32, #tpu.memory_space<vmem>>, vector<2x1x32xf32>
    tpu.vector_store %arg21[%c0_41, %c7, %c0_42], %111 {strides = array<i32>} : memref<2x8x32xf32, #tpu.memory_space<vmem>>, vector<2x1x32xf32>,
    %c0_43 = arith.constant 0 : index
    %c0_44 = arith.constant 0 : index
    %c0_45 = arith.constant 0 : index
    %113 = vector.load %arg21[%c0_43, %c0_44, %c0_45] : memref<2x8x32xf32, #tpu.memory_space<vmem>>, vector<2x8x32xf32>
    %114 = vector.shape_cast %113 : vector<2x8x32xf32> to vector<16x32xf32>
    %c0_46 = arith.constant 0 : index
    %c0_47 = arith.constant 0 : index
    %115 = vector.load %arg12[%c0_46, %c0_47] : memref<32x32xf32, #tpu.memory_space<vmem>>, vector<32x32xf32>
    %cst_48 = arith.constant dense<0.000000e+00> : vector<16x32xf32>
    %116 = tpu.matmul %114, %115, %cst_48 {dimension_numbers = #tpu.dot_dimension_numbers<[1], [0], [0], [1], [0, 0, 1, 1], [], []>} : vector<16x32xf32>, vector<32x32xf32>, vector<16x32xf32> -> vector<16x32xf32>
    %117 = vector.shape_cast %116 : vector<16x32xf32> to vector<2x8x32xf32>
    %c0_49 = arith.constant 0 : index
    %c0_50 = arith.constant 0 : index
    %118 = vector.load %arg5[%c0_49, %c0_50] : memref<2x8xf32, #tpu.memory_space<vmem>>, vector<2x8xf32>
    %c0_51 = arith.constant 0 : index
    %c0_52 = arith.constant 0 : index
    %119 = vector.load %arg3[%c0_51, %c0_52] : memref<16x32xf32, #tpu.memory_space<vmem>>, vector<16x32xf32>
    %c0_53 = arith.constant 0 : index
    %c0_54 = arith.constant 0 : index
    %120 = vector.load %arg9[%c0_53, %c0_54] : memref<32x32xf32, #tpu.memory_space<vmem>>, vector<32x32xf32>
    %cst_55 = arith.constant dense<0.000000e+00> : vector<16x32xf32>
    %121 = tpu.matmul %119, %120, %cst_55 {dimension_numbers = #tpu.dot_dimension_numbers<[1], [0], [0], [1], [0, 0, 1, 1], [], []>} : vector<16x32xf32>, vector<32x32xf32>, vector<16x32xf32> -> vector<16x32xf32>
    %c0_56 = arith.constant 0 : index
    %c0_57 = arith.constant 0 : index
    %122 = vector.load %arg11[%c0_56, %c0_57] : memref<1x32xf32, #tpu.memory_space<vmem>>, vector<1x32xf32>
    %123 = vector.broadcast %122 : vector<1x32xf32> to vector<16x32xf32>
    %124 = arith.addf %121, %123 : vector<16x32xf32>
    %c0_58 = arith.constant 0 : index
    %c0_59 = arith.constant 0 : index
    %125 = vector.load %arg10[%c0_58, %c0_59] : memref<32x32xf32, #tpu.memory_space<vmem>>, vector<32x32xf32>
    %126 = vector.extract_strided_slice %124 {offsets = [0, 0], sizes = [2, 32], strides = [1, 1]} : vector<16x32xf32> to vector<2x32xf32>
    %cst_60 = arith.constant dense<0.000000e+00> : vector<2x32xf32>
    %127 = tpu.matmul %109, %125, %cst_60 {dimension_numbers = #tpu.dot_dimension_numbers<[1], [0], [0], [1], [0, 0, 1, 1], [], []>} : vector<2x32xf32>, vector<32x32xf32>, vector<2x32xf32> -> vector<2x32xf32>
    %128 = arith.addf %126, %127 : vector<2x32xf32>
    %129 = math.tanh %128 : vector<2x32xf32>
    %130 = vector.shape_cast %129 : vector<2x32xf32> to vector<2x1x32xf32>
    %c0_61 = arith.constant 0 : index
    %c0_62 = arith.constant 0 : index
    %c0_63 = arith.constant 0 : index
    %131 = vector.load %arg22[%c0_61, %c0_62, %c0_63] : memref<2x8x32xf32, #tpu.memory_space<vmem>>, vector<2x1x32xf32>
    tpu.vector_store %arg22[%c0_61, %c0_62, %c0_63], %130 {strides = array<i32>} : memref<2x8x32xf32, #tpu.memory_space<vmem>>, vector<2x1x32xf32>,
    %132 = vector.extract_strided_slice %124 {offsets = [2, 0], sizes = [2, 32], strides = [1, 1]} : vector<16x32xf32> to vector<2x32xf32>
    %cst_64 = arith.constant dense<0.000000e+00> : vector<2x32xf32>
    %133 = tpu.matmul %129, %125, %cst_64 {dimension_numbers = #tpu.dot_dimension_numbers<[1], [0], [0], [1], [0, 0, 1, 1], [], []>} : vector<2x32xf32>, vector<32x32xf32>, vector<2x32xf32> -> vector<2x32xf32>
    %134 = arith.addf %132, %133 : vector<2x32xf32>
    %135 = math.tanh %134 : vector<2x32xf32>
    %136 = vector.shape_cast %135 : vector<2x32xf32> to vector<2x1x32xf32>
    %c0_65 = arith.constant 0 : index
    %c1_66 = arith.constant 1 : index
    %c0_67 = arith.constant 0 : index
    %137 = vector.load %arg22[%c0_65, %c1_66, %c0_67] : memref<2x8x32xf32, #tpu.memory_space<vmem>>, vector<2x1x32xf32>
    tpu.vector_store %arg22[%c0_65, %c1_66, %c0_67], %136 {strides = array<i32>} : memref<2x8x32xf32, #tpu.memory_space<vmem>>, vector<2x1x32xf32>,
    %138 = vector.extract_strided_slice %124 {offsets = [4, 0], sizes = [2, 32], strides = [1, 1]} : vector<16x32xf32> to vector<2x32xf32>
    %cst_68 = arith.constant dense<0.000000e+00> : vector<2x32xf32>
    %139 = tpu.matmul %135, %125, %cst_68 {dimension_numbers = #tpu.dot_dimension_numbers<[1], [0], [0], [1], [0, 0, 1, 1], [], []>} : vector<2x32xf32>, vector<32x32xf32>, vector<2x32xf32> -> vector<2x32xf32>
    %140 = arith.addf %138, %139 : vector<2x32xf32>
    %141 = math.tanh %140 : vector<2x32xf32>
    %142 = vector.shape_cast %141 : vector<2x32xf32> to vector<2x1x32xf32>
    %c0_69 = arith.constant 0 : index
    %c2_70 = arith.constant 2 : index
    %c0_71 = arith.constant 0 : index
    %143 = vector.load %arg22[%c0_69, %c2_70, %c0_71] : memref<2x8x32xf32, #tpu.memory_space<vmem>>, vector<2x1x32xf32>
    tpu.vector_store %arg22[%c0_69, %c2_70, %c0_71], %142 {strides = array<i32>} : memref<2x8x32xf32, #tpu.memory_space<vmem>>, vector<2x1x32xf32>,
    %144 = vector.extract_strided_slice %124 {offsets = [6, 0], sizes = [2, 32], strides = [1, 1]} : vector<16x32xf32> to vector<2x32xf32>
    %cst_72 = arith.constant dense<0.000000e+00> : vector<2x32xf32>
    %145 = tpu.matmul %141, %125, %cst_72 {dimension_numbers = #tpu.dot_dimension_numbers<[1], [0], [0], [1], [0, 0, 1, 1], [], []>} : vector<2x32xf32>, vector<32x32xf32>, vector<2x32xf32> -> vector<2x32xf32>
    %146 = arith.addf %144, %145 : vector<2x32xf32>
    %147 = math.tanh %146 : vector<2x32xf32>
    %148 = vector.shape_cast %147 : vector<2x32xf32> to vector<2x1x32xf32>
    %c0_73 = arith.constant 0 : index
    %c3_74 = arith.constant 3 : index
    %c0_75 = arith.constant 0 : index
    %149 = vector.load %arg22[%c0_73, %c3_74, %c0_75] : memref<2x8x32xf32, #tpu.memory_space<vmem>>, vector<2x1x32xf32>
    tpu.vector_store %arg22[%c0_73, %c3_74, %c0_75], %148 {strides = array<i32>} : memref<2x8x32xf32, #tpu.memory_space<vmem>>, vector<2x1x32xf32>,
    %150 = vector.extract_strided_slice %124 {offsets = [8, 0], sizes = [2, 32], strides = [1, 1]} : vector<16x32xf32> to vector<2x32xf32>
    %cst_76 = arith.constant dense<0.000000e+00> : vector<2x32xf32>
    %151 = tpu.matmul %147, %125, %cst_76 {dimension_numbers = #tpu.dot_dimension_numbers<[1], [0], [0], [1], [0, 0, 1, 1], [], []>} : vector<2x32xf32>, vector<32x32xf32>, vector<2x32xf32> -> vector<2x32xf32>
    %152 = arith.addf %150, %151 : vector<2x32xf32>
    %153 = math.tanh %152 : vector<2x32xf32>
    %154 = vector.shape_cast %153 : vector<2x32xf32> to vector<2x1x32xf32>
    %c0_77 = arith.constant 0 : index
    %c4_78 = arith.constant 4 : index
    %c0_79 = arith.constant 0 : index
    %155 = vector.load %arg22[%c0_77, %c4_78, %c0_79] : memref<2x8x32xf32, #tpu.memory_space<vmem>>, vector<2x1x32xf32>
    tpu.vector_store %arg22[%c0_77, %c4_78, %c0_79], %154 {strides = array<i32>} : memref<2x8x32xf32, #tpu.memory_space<vmem>>, vector<2x1x32xf32>,
    %156 = vector.extract_strided_slice %124 {offsets = [10, 0], sizes = [2, 32], strides = [1, 1]} : vector<16x32xf32> to vector<2x32xf32>
    %cst_80 = arith.constant dense<0.000000e+00> : vector<2x32xf32>
    %157 = tpu.matmul %153, %125, %cst_80 {dimension_numbers = #tpu.dot_dimension_numbers<[1], [0], [0], [1], [0, 0, 1, 1], [], []>} : vector<2x32xf32>, vector<32x32xf32>, vector<2x32xf32> -> vector<2x32xf32>
    %158 = arith.addf %156, %157 : vector<2x32xf32>
    %159 = math.tanh %158 : vector<2x32xf32>
    %160 = vector.shape_cast %159 : vector<2x32xf32> to vector<2x1x32xf32>
    %c0_81 = arith.constant 0 : index
    %c5_82 = arith.constant 5 : index
    %c0_83 = arith.constant 0 : index
    %161 = vector.load %arg22[%c0_81, %c5_82, %c0_83] : memref<2x8x32xf32, #tpu.memory_space<vmem>>, vector<2x1x32xf32>
    tpu.vector_store %arg22[%c0_81, %c5_82, %c0_83], %160 {strides = array<i32>} : memref<2x8x32xf32, #tpu.memory_space<vmem>>, vector<2x1x32xf32>,
    %162 = vector.extract_strided_slice %124 {offsets = [12, 0], sizes = [2, 32], strides = [1, 1]} : vector<16x32xf32> to vector<2x32xf32>
    %cst_84 = arith.constant dense<0.000000e+00> : vector<2x32xf32>
    %163 = tpu.matmul %159, %125, %cst_84 {dimension_numbers = #tpu.dot_dimension_numbers<[1], [0], [0], [1], [0, 0, 1, 1], [], []>} : vector<2x32xf32>, vector<32x32xf32>, vector<2x32xf32> -> vector<2x32xf32>
    %164 = arith.addf %162, %163 : vector<2x32xf32>
    %165 = math.tanh %164 : vector<2x32xf32>
    %166 = vector.shape_cast %165 : vector<2x32xf32> to vector<2x1x32xf32>
    %c0_85 = arith.constant 0 : index
    %c6_86 = arith.constant 6 : index
    %c0_87 = arith.constant 0 : index
    %167 = vector.load %arg22[%c0_85, %c6_86, %c0_87] : memref<2x8x32xf32, #tpu.memory_space<vmem>>, vector<2x1x32xf32>
    tpu.vector_store %arg22[%c0_85, %c6_86, %c0_87], %166 {strides = array<i32>} : memref<2x8x32xf32, #tpu.memory_space<vmem>>, vector<2x1x32xf32>,
    %168 = vector.extract_strided_slice %124 {offsets = [14, 0], sizes = [2, 32], strides = [1, 1]} : vector<16x32xf32> to vector<2x32xf32>
    %cst_88 = arith.constant dense<0.000000e+00> : vector<2x32xf32>
    %169 = tpu.matmul %165, %125, %cst_88 {dimension_numbers = #tpu.dot_dimension_numbers<[1], [0], [0], [1], [0, 0, 1, 1], [], []>} : vector<2x32xf32>, vector<32x32xf32>, vector<2x32xf32> -> vector<2x32xf32>
    %170 = arith.addf %168, %169 : vector<2x32xf32>
    %171 = math.tanh %170 : vector<2x32xf32>
    %172 = vector.shape_cast %171 : vector<2x32xf32> to vector<2x1x32xf32>
    %c0_89 = arith.constant 0 : index
    %c7_90 = arith.constant 7 : index
    %c0_91 = arith.constant 0 : index
    %173 = vector.load %arg22[%c0_89, %c7_90, %c0_91] : memref<2x8x32xf32, #tpu.memory_space<vmem>>, vector<2x1x32xf32>
    tpu.vector_store %arg22[%c0_89, %c7_90, %c0_91], %172 {strides = array<i32>} : memref<2x8x32xf32, #tpu.memory_space<vmem>>, vector<2x1x32xf32>,
    %c0_92 = arith.constant 0 : index
    %c0_93 = arith.constant 0 : index
    %174 = vector.load %arg20[%c0_92, %c0_93] : memref<2x32xf32, #tpu.memory_space<vmem>>, vector<2x32xf32>
    tpu.vector_store %arg20[%c0_92, %c0_93], %171 {strides = array<i32>} : memref<2x32xf32, #tpu.memory_space<vmem>>, vector<2x32xf32>,
    %c0_94 = arith.constant 0 : index
    %c0_95 = arith.constant 0 : index
    %c0_96 = arith.constant 0 : index
    %175 = vector.load %arg22[%c0_94, %c0_95, %c0_96] : memref<2x8x32xf32, #tpu.memory_space<vmem>>, vector<2x8x32xf32>
    "tpu.trace_start"() <{level = 10 : i32, message = "bth,bsh->bts"}> : () -> ()
    %cst_97 = arith.constant dense<0.000000e+00> : vector<2x8x8xf32>
    %176 = tpu.matmul %175, %117, %cst_97 {dimension_numbers = #tpu.dot_dimension_numbers<[2], [2], [1], [1], [0, 0, 0, 1, 1, 1], [0], [0]>} : vector<2x8x32xf32>, vector<2x8x32xf32>, vector<2x8x8xf32> -> vector<2x8x8xf32>
    "tpu.trace_stop"() : () -> ()
    %177 = vector.shape_cast %118 : vector<2x8xf32> to vector<2x1x8xf32>
    %178 = vector.broadcast %177 : vector<2x1x8xf32> to vector<2x8x8xf32>
    %179 = arith.addf %176, %178 : vector<2x8x8xf32>
    %cst_98 = arith.constant dense<0xFF800000> : vector<2x8xf32>
    %180 = vector.multi_reduction <maximumf>, %179, %cst_98 [2] : vector<2x8x8xf32> to vector<2x8xf32>
    %181 = vector.shape_cast %180 : vector<2x8xf32> to vector<2x8x1xf32>
    %182 = vector.broadcast %181 : vector<2x8x1xf32> to vector<2x8x8xf32>
    %183 = arith.subf %179, %182 : vector<2x8x8xf32>
    %184 = math.exp %183 : vector<2x8x8xf32>
    %cst_99 = arith.constant dense<0.000000e+00> : vector<2x8xf32>
    %185 = vector.multi_reduction <add>, %184, %cst_99 [2] : vector<2x8x8xf32> to vector<2x8xf32>
    %186 = vector.shape_cast %185 : vector<2x8xf32> to vector<2x8x1xf32>
    %187 = vector.broadcast %186 : vector<2x8x1xf32> to vector<2x8x8xf32>
    %188 = arith.divf %184, %187 : vector<2x8x8xf32>
    %c0_100 = arith.constant 0 : index
    %c0_101 = arith.constant 0 : index
    %c0_102 = arith.constant 0 : index
    %189 = vector.load %arg18[%c0_100, %c0_101, %c0_102] : memref<2x8x8xf32, #tpu.memory_space<vmem>>, vector<2x8x8xf32>
    tpu.vector_store %arg18[%c0_100, %c0_101, %c0_102], %188 {strides = array<i32>} : memref<2x8x8xf32, #tpu.memory_space<vmem>>, vector<2x8x8xf32>,
    "tpu.trace_start"() <{level = 10 : i32, message = "bts,bsh->bth"}> : () -> ()
    %cst_103 = arith.constant dense<0.000000e+00> : vector<2x8x32xf32>
    %190 = tpu.matmul %188, %113, %cst_103 {dimension_numbers = #tpu.dot_dimension_numbers<[2], [1], [1], [2], [0, 0, 0, 1, 1, 2], [0], [0]>} : vector<2x8x8xf32>, vector<2x8x32xf32>, vector<2x8x32xf32> -> vector<2x8x32xf32>
    "tpu.trace_stop"() : () -> ()
    %191 = vector.shape_cast %190 : vector<2x8x32xf32> to vector<16x32xf32>
    %c0_104 = arith.constant 0 : index
    %c0_105 = arith.constant 0 : index
    %192 = vector.load %arg13[%c0_104, %c0_105] : memref<32x32xf32, #tpu.memory_space<vmem>>, vector<32x32xf32>
    %cst_106 = arith.constant dense<0.000000e+00> : vector<16x32xf32>
    %193 = tpu.matmul %191, %192, %cst_106 {dimension_numbers = #tpu.dot_dimension_numbers<[1], [0], [0], [1], [0, 0, 1, 1], [], []>} : vector<16x32xf32>, vector<32x32xf32>, vector<16x32xf32> -> vector<16x32xf32>
    %194 = vector.shape_cast %175 : vector<2x8x32xf32> to vector<16x32xf32>
    %c0_107 = arith.constant 0 : index
    %c0_108 = arith.constant 0 : index
    %195 = vector.load %arg14[%c0_107, %c0_108] : memref<32x32xf32, #tpu.memory_space<vmem>>, vector<32x32xf32>
    %cst_109 = arith.constant dense<0.000000e+00> : vector<16x32xf32>
    %196 = tpu.matmul %194, %195, %cst_109 {dimension_numbers = #tpu.dot_dimension_numbers<[1], [0], [0], [1], [0, 0, 1, 1], [], []>} : vector<16x32xf32>, vector<32x32xf32>, vector<16x32xf32> -> vector<16x32xf32>
    %197 = arith.addf %193, %196 : vector<16x32xf32>
    %c0_110 = arith.constant 0 : index
    %c0_111 = arith.constant 0 : index
    %198 = vector.load %arg15[%c0_110, %c0_111] : memref<1x32xf32, #tpu.memory_space<vmem>>, vector<1x32xf32>
    %199 = vector.broadcast %198 : vector<1x32xf32> to vector<16x32xf32>
    %200 = arith.addf %197, %199 : vector<16x32xf32>
    %201 = math.tanh %200 : vector<16x32xf32>
    %202 = vector.shape_cast %201 : vector<16x32xf32> to vector<2x8x32xf32>
    %c0_112 = arith.constant 0 : index
    %c0_113 = arith.constant 0 : index
    %c0_114 = arith.constant 0 : index
    %203 = vector.load %arg17[%c0_112, %c0_113, %c0_114] : memref<2x8x32xf32, #tpu.memory_space<vmem>>, vector<2x8x32xf32>
    tpu.vector_store %arg17[%c0_112, %c0_113, %c0_114], %202 {strides = array<i32>} : memref<2x8x32xf32, #tpu.memory_space<vmem>>, vector<2x8x32xf32>,
    %c0_115 = arith.constant 0 : index
    %c0_116 = arith.constant 0 : index
    %204 = vector.load %arg4[%c0_115, %c0_116] : memref<16x32xf32, #tpu.memory_space<vmem>>, vector<16x32xf32>
    %c0_117 = arith.constant 0 : index
    %c0_118 = arith.constant 0 : index
    %205 = vector.load %arg16[%c0_117, %c0_118] : memref<32x32xf32, #tpu.memory_space<vmem>>, vector<32x32xf32>
    %cst_119 = arith.constant dense<0.000000e+00> : vector<16x32xf32>
    %206 = tpu.matmul %204, %205, %cst_119 {dimension_numbers = #tpu.dot_dimension_numbers<[1], [0], [0], [1], [0, 0, 1, 1], [], []>} : vector<16x32xf32>, vector<32x32xf32>, vector<16x32xf32> -> vector<16x32xf32>
    %207 = math.tanh %206 : vector<16x32xf32>
    %208 = vector.shape_cast %207 : vector<16x32xf32> to vector<2x8x32xf32>
    "tpu.trace_start"() <{level = 10 : i32, message = "bth,bsh->bts"}> : () -> ()
    %cst_120 = arith.constant dense<0.000000e+00> : vector<2x8x8xf32>
    %209 = tpu.matmul %208, %113, %cst_120 {dimension_numbers = #tpu.dot_dimension_numbers<[2], [2], [1], [1], [0, 0, 0, 1, 1, 1], [0], [0]>} : vector<2x8x32xf32>, vector<2x8x32xf32>, vector<2x8x8xf32> -> vector<2x8x8xf32>
    "tpu.trace_stop"() : () -> ()
    %210 = vector.shape_cast %118 : vector<2x8xf32> to vector<2x1x8xf32>
    %211 = vector.broadcast %210 : vector<2x1x8xf32> to vector<2x8x8xf32>
    %212 = arith.addf %209, %211 : vector<2x8x8xf32>
    %cst_121 = arith.constant dense<0xFF800000> : vector<2x8xf32>
    %213 = vector.multi_reduction <maximumf>, %212, %cst_121 [2] : vector<2x8x8xf32> to vector<2x8xf32>
    %214 = vector.shape_cast %213 : vector<2x8xf32> to vector<2x8x1xf32>
    %215 = vector.broadcast %214 : vector<2x8x1xf32> to vector<2x8x8xf32>
    %216 = arith.subf %212, %215 : vector<2x8x8xf32>
    %217 = math.exp %216 : vector<2x8x8xf32>
    %cst_122 = arith.constant dense<0.000000e+00> : vector<2x8xf32>
    %218 = vector.multi_reduction <add>, %217, %cst_122 [2] : vector<2x8x8xf32> to vector<2x8xf32>
    %219 = vector.shape_cast %218 : vector<2x8xf32> to vector<2x8x1xf32>
    %220 = vector.broadcast %219 : vector<2x8x1xf32> to vector<2x8x8xf32>
    %221 = arith.divf %217, %220 : vector<2x8x8xf32>
    %c0_123 = arith.constant 0 : index
    %c0_124 = arith.constant 0 : index
    %c0_125 = arith.constant 0 : index
    %222 = vector.load %arg19[%c0_123, %c0_124, %c0_125] : memref<2x8x8xf32, #tpu.memory_space<vmem>>, vector<2x8x8xf32>
    tpu.vector_store %arg19[%c0_123, %c0_124, %c0_125], %221 {strides = array<i32>} : memref<2x8x8xf32, #tpu.memory_space<vmem>>, vector<2x8x8xf32>,
    return
  }
  func.func @transform_0(%arg0: i32) -> (i32, i32) {
    %c0_i32 = arith.constant 0 : i32
    %c0_i32_0 = arith.constant 0 : i32
    %c0_i32_1 = arith.constant 0 : i32
    return %c0_i32, %c0_i32_0 : i32, i32
  }
  func.func @transform_1(%arg0: i32) -> (i32, i32) {
    %c0_i32 = arith.constant 0 : i32
    %c0_i32_0 = arith.constant 0 : i32
    %c0_i32_1 = arith.constant 0 : i32
    return %c0_i32, %c0_i32_0 : i32, i32
  }
  func.func @transform_2(%arg0: i32) -> (i32, i32) {
    %c0_i32 = arith.constant 0 : i32
    %c0_i32_0 = arith.constant 0 : i32
    %c0_i32_1 = arith.constant 0 : i32
    return %c0_i32, %c0_i32_0 : i32, i32
  }
  func.func @transform_3(%arg0: i32) -> (i32, i32) {
    %c0_i32 = arith.constant 0 : i32
    %c0_i32_0 = arith.constant 0 : i32
    %c0_i32_1 = arith.constant 0 : i32
    return %c0_i32, %c0_i32_0 : i32, i32
  }
  func.func @transform_4(%arg0: i32) -> (i32, i32) {
    %c0_i32 = arith.constant 0 : i32
    %c0_i32_0 = arith.constant 0 : i32
    %c0_i32_1 = arith.constant 0 : i32
    return %c0_i32, %c0_i32_0 : i32, i32
  }
  func.func @transform_5(%arg0: i32) -> (i32, i32) {
    %c0_i32 = arith.constant 0 : i32
    %c0_i32_0 = arith.constant 0 : i32
    %c0_i32_1 = arith.constant 0 : i32
    return %c0_i32, %c0_i32_0 : i32, i32
  }
  func.func @transform_6(%arg0: i32) -> (i32, i32) {
    %c0_i32 = arith.constant 0 : i32
    %c0_i32_0 = arith.constant 0 : i32
    %c0_i32_1 = arith.constant 0 : i32
    return %c0_i32, %c0_i32_0 : i32, i32
  }
  func.func @transform_7(%arg0: i32) -> (i32, i32) {
    %c0_i32 = arith.constant 0 : i32
    %c0_i32_0 = arith.constant 0 : i32
    %c0_i32_1 = arith.constant 0 : i32
    return %c0_i32, %c0_i32_0 : i32, i32
  }
  func.func @transform_8(%arg0: i32) -> (i32, i32) {
    %c0_i32 = arith.constant 0 : i32
    %c0_i32_0 = arith.constant 0 : i32
    %c0_i32_1 = arith.constant 0 : i32
    return %c0_i32, %c0_i32_0 : i32, i32
  }
  func.func @transform_9(%arg0: i32) -> (i32, i32) {
    %c0_i32 = arith.constant 0 : i32
    %c0_i32_0 = arith.constant 0 : i32
    %c0_i32_1 = arith.constant 0 : i32
    return %c0_i32, %c0_i32_0 : i32, i32
  }
  func.func @transform_10(%arg0: i32) -> (i32, i32) {
    %c0_i32 = arith.constant 0 : i32
    %c0_i32_0 = arith.constant 0 : i32
    %c0_i32_1 = arith.constant 0 : i32
    return %c0_i32, %c0_i32_0 : i32, i32
  }
  func.func @transform_11(%arg0: i32) -> (i32, i32) {
    %c0_i32 = arith.constant 0 : i32
    %c0_i32_0 = arith.constant 0 : i32
    %c0_i32_1 = arith.constant 0 : i32
    return %c0_i32, %c0_i32_0 : i32, i32
  }
  func.func @transform_12(%arg0: i32) -> (i32, i32) {
    %c0_i32 = arith.constant 0 : i32
    %c0_i32_0 = arith.constant 0 : i32
    %c0_i32_1 = arith.constant 0 : i32
    return %c0_i32, %c0_i32_0 : i32, i32
  }
  func.func @transform_13(%arg0: i32) -> (i32, i32) {
    %c0_i32 = arith.constant 0 : i32
    %c0_i32_0 = arith.constant 0 : i32
    %c0_i32_1 = arith.constant 0 : i32
    return %c0_i32, %c0_i32_0 : i32, i32
  }
  func.func @transform_14(%arg0: i32) -> (i32, i32) {
    %c0_i32 = arith.constant 0 : i32
    %c0_i32_0 = arith.constant 0 : i32
    %c0_i32_1 = arith.constant 0 : i32
    return %c0_i32, %c0_i32_0 : i32, i32
  }
  func.func @transform_15(%arg0: i32) -> (i32, i32) {
    %c0_i32 = arith.constant 0 : i32
    %c0_i32_0 = arith.constant 0 : i32
    %c0_i32_1 = arith.constant 0 : i32
    return %c0_i32, %c0_i32_0 : i32, i32
  }
  func.func @transform_16(%arg0: i32) -> (i32, i32, i32) {
    %c0_i32 = arith.constant 0 : i32
    %c0_i32_0 = arith.constant 0 : i32
    %c0_i32_1 = arith.constant 0 : i32
    %c0_i32_2 = arith.constant 0 : i32
    return %c0_i32, %c0_i32_0, %c0_i32_1 : i32, i32, i32
  }
  func.func @transform_17(%arg0: i32) -> (i32, i32, i32) {
    %c0_i32 = arith.constant 0 : i32
    %c0_i32_0 = arith.constant 0 : i32
    %c0_i32_1 = arith.constant 0 : i32
    %c0_i32_2 = arith.constant 0 : i32
    return %c0_i32, %c0_i32_0, %c0_i32_1 : i32, i32, i32
  }
  func.func @transform_18(%arg0: i32) -> (i32, i32, i32) {
    %c0_i32 = arith.constant 0 : i32
    %c0_i32_0 = arith.constant 0 : i32
    %c0_i32_1 = arith.constant 0 : i32
    %c0_i32_2 = arith.constant 0 : i32
    return %c0_i32, %c0_i32_0, %c0_i32_1 : i32, i32, i32
  }
  func.func @transform_19(%arg0: i32) -> (i32, i32) {
    %c0_i32 = arith.constant 0 : i32
    %c0_i32_0 = arith.constant 0 : i32
    %c0_i32_1 = arith.constant 0 : i32
    return %c0_i32, %c0_i32_0 : i32, i32
  }
}

</mosaic_0001>

<llo_original>
// kernel: vi_nmt_forward.1
$region0: #{vi_nmt_forward.1}
  #allocation0 [shape = 'u32[]', space=smem, size = 0x4, offset = 0x4, fixed_abs, tag = 'smem constant byte address 0x4 - core index']
  #allocation1 [shape = 'u32[144,128]{1,0:T(1,128)}', space=vmem, size = 0x12000, scoped, tag = 'internal scratch']
  #allocation2 [shape = 'f32[2,8,32]{2,1,0:T(8,128)}', space=vmem, size = 0x2000, scoped, tag = 'scratch operand']
  #allocation3 [shape = 'f32[2,8,32]{2,1,0:T(8,128)}', space=vmem, size = 0x2000, scoped, tag = 'scratch operand']
  %s0 = inlined_call_operand.vmem [shape: f32[16,32], index: 0, kind: input, shape index: {}]
  %s1 = inlined_call_operand.vmem [shape: f32[16,32], index: 1, kind: input, shape index: {}]
  %s2 = inlined_call_operand.vmem [shape: f32[16,32], index: 2, kind: input, shape index: {}]
  %s3 = inlined_call_operand.vmem [shape: f32[16,32], index: 3, kind: input, shape index: {}]
  %s4 = inlined_call_operand.vmem [shape: f32[2,8], index: 4, kind: input, shape index: {}]
  %s5 = inlined_call_operand.vmem [shape: f32[32,32], index: 5, kind: input, shape index: {}]
  %s6 = inlined_call_operand.vmem [shape: f32[32,32], index: 6, kind: input, shape index: {}]
  %s7 = inlined_call_operand.vmem [shape: f32[1,32], index: 7, kind: input, shape index: {}]
  %s8 = inlined_call_operand.vmem [shape: f32[32,32], index: 8, kind: input, shape index: {}]
  %s9 = inlined_call_operand.vmem [shape: f32[32,32], index: 9, kind: input, shape index: {}]
  %s10 = inlined_call_operand.vmem [shape: f32[1,32], index: 10, kind: input, shape index: {}]
  %s11 = inlined_call_operand.vmem [shape: f32[32,32], index: 11, kind: input, shape index: {}]
  %s12 = inlined_call_operand.vmem [shape: f32[32,32], index: 12, kind: input, shape index: {}]
  %s13 = inlined_call_operand.vmem [shape: f32[32,32], index: 13, kind: input, shape index: {}]
  %s14 = inlined_call_operand.vmem [shape: f32[1,32], index: 14, kind: input, shape index: {}]
  %s15 = inlined_call_operand.vmem [shape: f32[32,32], index: 15, kind: input, shape index: {}]
  %s16 = inlined_call_operand.vmem [shape: f32[2,8,32], index: 16, kind: output, shape index: {0}]
  %s17 = inlined_call_operand.vmem [shape: f32[2,8,8], index: 17, kind: output, shape index: {1}]
  %s18 = inlined_call_operand.vmem [shape: f32[2,8,8], index: 18, kind: output, shape index: {2}]
  %s19 = inlined_call_operand.hbm [shape: f32[2,32], index: 19, kind: output, shape index: {3}]
  %20 = xla_tuple %s16, %s17, %s18, %s19
  %s21 = sld [smem:[#allocation0]]
  $region98: #{vi_nmt_forward.1} parent=0
    _
  %s23 = ssub.s32 1, %s21
  %s24 = scalar_select 0, %s23, %s21
  $region1: #{vi_nmt_forward.1} parent=0
    #allocation4 [shape = 'u8[1024]{0}', space=vmem, size = 0x400, scoped, tag = 'output window, operand 3, single buffered']
    #allocation5 [shape = 's32[1]{0}', space=sflag, size = 0x4, scoped, tag = 'scoped memory for vi_nmt_forward.1']
    %25 = vsyncpa [#allocation5], 0
    // Predicated region
    $region2: #{vi_nmt_forward.1} parent=1 // pred_check
      _
    $region3: #{vi_nmt_forward.1} parent=1 // pred_check_branch
      %27 = sbr.rel (0) target = $region5
    $region4: #{vi_nmt_forward.1} parent=1 // pred_region
      _
    $region5: #{vi_nmt_forward.1} parent=1 // pred_fallthru
      _
    // Predicated region
    $region6: #{vi_nmt_forward.1} parent=1 // pred_check
      _
    $region7: #{vi_nmt_forward.1} parent=1 // pred_check_branch
      %29 = sbr.rel (0) target = $region9
    $region8: #{vi_nmt_forward.1} parent=1 // pred_region
      _
    $region9: #{vi_nmt_forward.1} parent=1 // pred_fallthru
      _
    // Predicated region
    $region10: #{vi_nmt_forward.1} parent=1 // pred_check
      _
    $region11: #{vi_nmt_forward.1} parent=1 // pred_check_branch
      %31 = sbr.rel (0) target = $region13
    $region12: #{vi_nmt_forward.1} parent=1 // pred_region
      _
    $region13: #{vi_nmt_forward.1} parent=1 // pred_fallthru
      _
    // Predicated region
    $region14: #{vi_nmt_forward.1} parent=1 // pred_check
      _
    $region15: #{vi_nmt_forward.1} parent=1 // pred_check_branch
      %33 = sbr.rel (0) target = $region17
    $region16: #{vi_nmt_forward.1} parent=1 // pred_region
      _
    $region17: #{vi_nmt_forward.1} parent=1 // pred_fallthru
      _
    // Predicated region
    $region18: #{vi_nmt_forward.1} parent=1 // pred_check
      _
    $region19: #{vi_nmt_forward.1} parent=1 // pred_check_branch
      %35 = sbr.rel (0) target = $region21
    $region20: #{vi_nmt_forward.1} parent=1 // pred_region
      _
    $region21: #{vi_nmt_forward.1} parent=1 // pred_fallthru
      _
    // Predicated region
    $region22: #{vi_nmt_forward.1} parent=1 // pred_check
      _
    $region23: #{vi_nmt_forward.1} parent=1 // pred_check_branch
      %37 = sbr.rel (0) target = $region25
    $region24: #{vi_nmt_forward.1} parent=1 // pred_region
      _
    $region25: #{vi_nmt_forward.1} parent=1 // pred_fallthru
      _
    // Predicated region
    $region26: #{vi_nmt_forward.1} parent=1 // pred_check
      _
    $region27: #{vi_nmt_forward.1} parent=1 // pred_check_branch
      %39 = sbr.rel (0) target = $region29
    $region28: #{vi_nmt_forward.1} parent=1 // pred_region
      _
    $region29: #{vi_nmt_forward.1} parent=1 // pred_fallthru
      _
    // Predicated region
    $region30: #{vi_nmt_forward.1} parent=1 // pred_check
      _
    $region31: #{vi_nmt_forward.1} parent=1 // pred_check_branch
      %41 = sbr.rel (0) target = $region33
    $region32: #{vi_nmt_forward.1} parent=1 // pred_region
      _
    $region33: #{vi_nmt_forward.1} parent=1 // pred_fallthru
      _
    // Predicated region
    $region34: #{vi_nmt_forward.1} parent=1 // pred_check
      _
    $region35: #{vi_nmt_forward.1} parent=1 // pred_check_branch
      %43 = sbr.rel (0) target = $region37
    $region36: #{vi_nmt_forward.1} parent=1 // pred_region
      _
    $region37: #{vi_nmt_forward.1} parent=1 // pred_fallthru
      _
    // Predicated region
    $region38: #{vi_nmt_forward.1} parent=1 // pred_check
      _
    $region39: #{vi_nmt_forward.1} parent=1 // pred_check_branch
      %45 = sbr.rel (0) target = $region41
    $region40: #{vi_nmt_forward.1} parent=1 // pred_region
      _
    $region41: #{vi_nmt_forward.1} parent=1 // pred_fallthru
      _
    // Predicated region
    $region42: #{vi_nmt_forward.1} parent=1 // pred_check
      _
    $region43: #{vi_nmt_forward.1} parent=1 // pred_check_branch
      %47 = sbr.rel (0) target = $region45
    $region44: #{vi_nmt_forward.1} parent=1 // pred_region
      _
    $region45: #{vi_nmt_forward.1} parent=1 // pred_fallthru
      _
    // Predicated region
    $region46: #{vi_nmt_forward.1} parent=1 // pred_check
      _
    $region47: #{vi_nmt_forward.1} parent=1 // pred_check_branch
      %49 = sbr.rel (0) target = $region49
    $region48: #{vi_nmt_forward.1} parent=1 // pred_region
      _
    $region49: #{vi_nmt_forward.1} parent=1 // pred_fallthru
      _
    // Predicated region
    $region50: #{vi_nmt_forward.1} parent=1 // pred_check
      _
    $region51: #{vi_nmt_forward.1} parent=1 // pred_check_branch
      %51 = sbr.rel (0) target = $region53
    $region52: #{vi_nmt_forward.1} parent=1 // pred_region
      _
    $region53: #{vi_nmt_forward.1} parent=1 // pred_fallthru
      _
    // Predicated region
    $region54: #{vi_nmt_forward.1} parent=1 // pred_check
      _
    $region55: #{vi_nmt_forward.1} parent=1 // pred_check_branch
      %53 = sbr.rel (0) target = $region57
    $region56: #{vi_nmt_forward.1} parent=1 // pred_region
      _
    $region57: #{vi_nmt_forward.1} parent=1 // pred_fallthru
      _
    // Predicated region
    $region58: #{vi_nmt_forward.1} parent=1 // pred_check
      _
    $region59: #{vi_nmt_forward.1} parent=1 // pred_check_branch
      %55 = sbr.rel (0) target = $region61
    $region60: #{vi_nmt_forward.1} parent=1 // pred_region
      _
    $region61: #{vi_nmt_forward.1} parent=1 // pred_fallthru
      _
    // Predicated region
    $region62: #{vi_nmt_forward.1} parent=1 // pred_check
      _
    $region63: #{vi_nmt_forward.1} parent=1 // pred_check_branch
      %57 = sbr.rel (0) target = $region65
    $region64: #{vi_nmt_forward.1} parent=1 // pred_region
      _
    $region65: #{vi_nmt_forward.1} parent=1 // pred_fallthru
      _
    %v58 = vld [vmem:[%s0] sm:$0xff]
    %v59 = vld [vmem:[%s0 + $0x8] sm:$0xff]
    %v60 = vld [vmem:[%s5] sm:$0xff]
    %v61 = vld [vmem:[%s5 + $0x8] sm:$0xff]
    %v62 = vld [vmem:[%s5 + $0x10] sm:$0xff]
    %v63 = vld [vmem:[%s5 + $0x18] sm:$0xff]
    %v64 = vld [vmem:[%s7] sm:$0x1]
    %v66 = vlaneseq
    %v67 = vshrl.u32 %v66, 7
    %v68 = vsub.s32 0, %v67
    %v69 = vrot.slane %v64, %v68
    %vm71 = vcmask 261120
    %v73 = vsel %vm71, %v58, 0
    %v76 = vsel %vm71, %v59, 0
    %78 = vmatprep.subr.mxu0 0.0
    %79 = vmatpush1.msra.mxu0 %v60
    %80 = vmatprep.subr.mxu0 0.0
    %81 = vmatpush1.msra.mxu0 %v61
    %82 = vmatprep.subr.mxu0 0.0
    %83 = vmatpush1.msra.mxu0 %v62
    %84 = vmatprep.subr.mxu0 0.0
    %85 = vmatpush1.msra.mxu0 %v63
    %86 = vmatprep.subr.mxu0 0.0
    %87 = vmatpush1.msra.mxu0 0.0
    %88 = vmatprep.subr.mxu0 0.0
    %89 = vmatpush1.msra.mxu0 0.0
    %90 = vmatprep.subr.mxu0 0.0
    %91 = vmatpush1.msra.mxu0 0.0
    %92 = vmatprep.subr.mxu0 0.0
    %93 = vmatpush1.msra.mxu0 0.0
    %94 = vmatprep.subr.mxu0 0.0
    %95 = vmatpush1.msra.mxu0 0.0
    %96 = vmatprep.subr.mxu0 0.0
    %97 = vmatpush1.msra.mxu0 0.0
    %98 = vmatprep.subr.mxu0 0.0
    %99 = vmatpush1.msra.mxu0 0.0
    %100 = vmatprep.subr.mxu0 0.0
    %101 = vmatpush1.msra.mxu0 0.0
    %102 = vmatprep.subr.mxu0 0.0
    %103 = vmatpush1.msra.mxu0 0.0
    %104 = vmatprep.subr.mxu0 0.0
    %105 = vmatpush1.msra.mxu0 0.0
    %106 = vmatprep.subr.mxu0 0.0
    %107 = vmatpush1.msra.mxu0 0.0
    %108 = vmatprep.subr.mxu0 0.0
    %109 = vmatpush1.msra.mxu0 0.0
    %110 = vmatprep.subr.mxu0 0.0
    %111 = vmatpush1.msra.mxu0 0.0
    %112 = vmatprep.subr.mxu0 0.0
    %113 = vmatpush1.msra.mxu0 0.0
    %114 = vmatprep.subr.mxu0 0.0
    %115 = vmatpush1.msra.mxu0 0.0
    %116 = vmatprep.subr.mxu0 0.0
    %117 = vmatpush1.msra.mxu0 0.0
    %118 = vmatprep.subr.mxu0 0.0
    %119 = vmatpush1.msra.mxu0 0.0
    %120 = vmatprep.subr.mxu0 0.0
    %121 = vmatpush1.msra.mxu0 0.0
    %122 = vmatprep.subr.mxu0 0.0
    %123 = vmatpush1.msra.mxu0 0.0
    %124 = vmatprep.subr.mxu0 0.0
    %125 = vmatpush1.msra.mxu0 0.0
    %126 = vmatprep.subr.mxu0 0.0
    %127 = vmatpush1.msra.mxu0 0.0
    %128 = vmatprep.subr.mxu0 0.0
    %129 = vmatpush1.msra.mxu0 0.0
    %130 = vmatprep.subr.mxu0 0.0
    %131 = vmatpush1.msra.mxu0 0.0
    %132 = vmatprep.subr.mxu0 0.0
    %133 = vmatpush1.msra.mxu0 0.0
    %134 = vmatprep.subr.mxu0 0.0
    %135 = vmatpush1.msra.mxu0 0.0
    %136 = vmatprep.subr.mxu0 0.0
    %137 = vmatpush1.msra.mxu0 0.0
    %138 = vmatprep.subr.mxu0 0.0
    %139 = vmatpush1.msra.mxu0 0.0
    %140 = vmatprep.subr.mxu0 0.0
    %141 = vmatpush1.msra.mxu0 0.0
    %142 = vmatprep.mubr.f32.mxu0 0.0
    %143 = vmatmul.mubr.f32.gmra.mrb[0].mxu0 %v73
    %v144 = vpop.f32.mrb[0].mxu0
    %v145 = vadd.f32 %v69, %v144
    %v146 = vpop.f32.mrb[0].mxu0
    %147 = vmatprep.mubr.f32.mxu0 0.0
    %148 = vmatmul.mubr.f32.gmra.mrb[0].mxu0 %v76
    %v149 = vpop.f32.mrb[0].mxu0
    %v150 = vadd.f32 %v69, %v149
    %v151 = vpop.f32.mrb[0].mxu0
    %152 = vdwg.mxu0
    %v153 = vld [vmem:[%s1] sm:$0xff]
    %v154 = vld [vmem:[%s1 + $0x8] sm:$0xff]
    %v155 = vld [vmem:[%s6] sm:$0xff]
    %v156 = vld [vmem:[%s6 + $0x8] sm:$0xff]
    %v157 = vld [vmem:[%s6 + $0x10] sm:$0xff]
    %v158 = vld [vmem:[%s6 + $0x18] sm:$0xff]
    %v160 = vsel %vm71, 0.0, 0
    %162 = vmatprep.subr.mxu0 0.0
    %163 = vmatpush1.msra.mxu0 %v155
    %164 = vmatprep.subr.mxu0 0.0
    %165 = vmatpush1.msra.mxu0 %v156
    %166 = vmatprep.subr.mxu0 0.0
    %167 = vmatpush1.msra.mxu0 %v157
    %168 = vmatprep.subr.mxu0 0.0
    %169 = vmatpush1.msra.mxu0 %v158
    %170 = vmatprep.subr.mxu0 0.0
    %171 = vmatpush1.msra.mxu0 0.0
    %172 = vmatprep.subr.mxu0 0.0
    %173 = vmatpush1.msra.mxu0 0.0
    %174 = vmatprep.subr.mxu0 0.0
    %175 = vmatpush1.msra.mxu0 0.0
    %176 = vmatprep.subr.mxu0 0.0
    %177 = vmatpush1.msra.mxu0 0.0
    %178 = vmatprep.subr.mxu0 0.0
    %179 = vmatpush1.msra.mxu0 0.0
    %180 = vmatprep.subr.mxu0 0.0
    %181 = vmatpush1.msra.mxu0 0.0
    %182 = vmatprep.subr.mxu0 0.0
    %183 = vmatpush1.msra.mxu0 0.0
    %184 = vmatprep.subr.mxu0 0.0
    %185 = vmatpush1.msra.mxu0 0.0
    %186 = vmatprep.subr.mxu0 0.0
    %187 = vmatpush1.msra.mxu0 0.0
    %188 = vmatprep.subr.mxu0 0.0
    %189 = vmatpush1.msra.mxu0 0.0
    %190 = vmatprep.subr.mxu0 0.0
    %191 = vmatpush1.msra.mxu0 0.0
    %192 = vmatprep.subr.mxu0 0.0
    %193 = vmatpush1.msra.mxu0 0.0
    %194 = vmatprep.subr.mxu0 0.0
    %195 = vmatpush1.msra.mxu0 0.0
    %196 = vmatprep.subr.mxu0 0.0
    %197 = vmatpush1.msra.mxu0 0.0
    %198 = vmatprep.subr.mxu0 0.0
    %199 = vmatpush1.msra.mxu0 0.0
    %200 = vmatprep.subr.mxu0 0.0
    %201 = vmatpush1.msra.mxu0 0.0
    %202 = vmatprep.subr.mxu0 0.0
    %203 = vmatpush1.msra.mxu0 0.0
    %204 = vmatprep.subr.mxu0 0.0
    %205 = vmatpush1.msra.mxu0 0.0
    %206 = vmatprep.subr.mxu0 0.0
    %207 = vmatpush1.msra.mxu0 0.0
    %208 = vmatprep.subr.mxu0 0.0
    %209 = vmatpush1.msra.mxu0 0.0
    %210 = vmatprep.subr.mxu0 0.0
    %211 = vmatpush1.msra.mxu0 0.0
    %212 = vmatprep.subr.mxu0 0.0
    %213 = vmatpush1.msra.mxu0 0.0
    %214 = vmatprep.subr.mxu0 0.0
    %215 = vmatpush1.msra.mxu0 0.0
    %216 = vmatprep.subr.mxu0 0.0
    %217 = vmatpush1.msra.mxu0 0.0
    %218 = vmatprep.subr.mxu0 0.0
    %219 = vmatpush1.msra.mxu0 0.0
    %220 = vmatprep.subr.mxu0 0.0
    %221 = vmatpush1.msra.mxu0 0.0
    %222 = vmatprep.subr.mxu0 0.0
    %223 = vmatpush1.msra.mxu0 0.0
    %224 = vmatprep.subr.mxu0 0.0
    %225 = vmatpush1.msra.mxu0 0.0
    %226 = vmatprep.mubr.f32.mxu0 0.0
    %227 = vmatmul.mubr.f32.gmra.mrb[0].mxu0 %v160
    %v228 = vpop.f32.mrb[0].mxu0
    %v229 = vadd.f32 0.0, %v228
    %v230 = vpop.f32.mrb[0].mxu0
    %231 = vdwg.mxu0
    %v232 = vadd.f32 %v145, %v229
    %v233 = vtanh.pop %v232
    %v234 = vmul.f32 %v153, %v233
    %v235 = vsub.f32 1.0, %v153
    %v236 = vmul.f32 %v235, 0.0
    %v237 = vadd.f32 %v234, %v236
    %v240 = vunpack.c.l.s4 1966171168
    %v241 = vunpack.c.0.s8 %v240
    %v242 = vlaneseq
    %v243 = vshrl.u32 %v242, 7
    %v244 = vsub.s32 %v241, %v243
    %v245 = vrot.slane %v234, %v244
    %v246 = vcombine.high %v245, %v245
    %v248 = vunpack.c.l.s4 1966171168
    %v249 = vunpack.c.0.s8 %v248
    %v250 = vlaneseq
    %v251 = vshrl.u32 %v250, 7
    %v252 = vsub.s32 %v249, %v251
    %v253 = vrot.slane %v245, %v252
    %v255 = vunpack.c.l.s4 1966171168
    %v256 = vunpack.c.0.s8 %v255
    %v257 = vlaneseq
    %v258 = vshrl.u32 %v257, 7
    %v259 = vsub.s32 %v256, %v258
    %v260 = vrot.slane %v246, %v259
    %vm263 = vcmask 253952
    %264 = vst.msk [vmem:[#allocation2] sm:$0x1] %vm263, %v253
    %265 = vst.msk [vmem:[#allocation2 + $0x8] sm:$0x1] %vm263, %v260
    %v267 = vsel %vm71, %v237, 0
    %269 = vmatprep.subr.mxu0 0.0
    %270 = vmatpush1.msra.mxu0 %v155
    %271 = vmatprep.subr.mxu0 0.0
    %272 = vmatpush1.msra.mxu0 %v156
    %273 = vmatprep.subr.mxu0 0.0
    %274 = vmatpush1.msra.mxu0 %v157
    %275 = vmatprep.subr.mxu0 0.0
    %276 = vmatpush1.msra.mxu0 %v158
    %277 = vmatprep.subr.mxu0 0.0
    %278 = vmatpush1.msra.mxu0 0.0
    %279 = vmatprep.subr.mxu0 0.0
    %280 = vmatpush1.msra.mxu0 0.0
    %281 = vmatprep.subr.mxu0 0.0
    %282 = vmatpush1.msra.mxu0 0.0
    %283 = vmatprep.subr.mxu0 0.0
    %284 = vmatpush1.msra.mxu0 0.0
    %285 = vmatprep.subr.mxu0 0.0
    %286 = vmatpush1.msra.mxu0 0.0
    %287 = vmatprep.subr.mxu0 0.0
    %288 = vmatpush1.msra.mxu0 0.0
    %289 = vmatprep.subr.mxu0 0.0
    %290 = vmatpush1.msra.mxu0 0.0
    %291 = vmatprep.subr.mxu0 0.0
    %292 = vmatpush1.msra.mxu0 0.0
    %293 = vmatprep.subr.mxu0 0.0
    %294 = vmatpush1.msra.mxu0 0.0
    %295 = vmatprep.subr.mxu0 0.0
    %296 = vmatpush1.msra.mxu0 0.0
    %297 = vmatprep.subr.mxu0 0.0
    %298 = vmatpush1.msra.mxu0 0.0
    %299 = vmatprep.subr.mxu0 0.0
    %300 = vmatpush1.msra.mxu0 0.0
    %301 = vmatprep.subr.mxu0 0.0
    %302 = vmatpush1.msra.mxu0 0.0
    %303 = vmatprep.subr.mxu0 0.0
    %304 = vmatpush1.msra.mxu0 0.0
    %305 = vmatprep.subr.mxu0 0.0
    %306 = vmatpush1.msra.mxu0 0.0
    %307 = vmatprep.subr.mxu0 0.0
    %308 = vmatpush1.msra.mxu0 0.0
    %309 = vmatprep.subr.mxu0 0.0
    %310 = vmatpush1.msra.mxu0 0.0
    %311 = vmatprep.subr.mxu0 0.0
    %312 = vmatpush1.msra.mxu0 0.0
    %313 = vmatprep.subr.mxu0 0.0
    %314 = vmatpush1.msra.mxu0 0.0
    %315 = vmatprep.subr.mxu0 0.0
    %316 = vmatpush1.msra.mxu0 0.0
    %317 = vmatprep.subr.mxu0 0.0
    %318 = vmatpush1.msra.mxu0 0.0
    %319 = vmatprep.subr.mxu0 0.0
    %320 = vmatpush1.msra.mxu0 0.0
    %321 = vmatprep.subr.mxu0 0.0
    %322 = vmatpush1.msra.mxu0 0.0
    %323 = vmatprep.subr.mxu0 0.0
    %324 = vmatpush1.msra.mxu0 0.0
    %325 = vmatprep.subr.mxu0 0.0
    %326 = vmatpush1.msra.mxu0 0.0
    %327 = vmatprep.subr.mxu0 0.0
    %328 = vmatpush1.msra.mxu0 0.0
    %329 = vmatprep.subr.mxu0 0.0
    %330 = vmatpush1.msra.mxu0 0.0
    %331 = vmatprep.subr.mxu0 0.0
    %332 = vmatpush1.msra.mxu0 0.0
    %333 = vmatprep.mubr.f32.mxu0 0.0
    %334 = vmatmul.mubr.f32.gmra.mrb[0].mxu0 %v267
    %v335 = vpop.f32.mrb[0].mxu0
    %v336 = vadd.f32 0.0, %v335
    %v337 = vpop.f32.mrb[0].mxu0
    %338 = vdwg.mxu0
    %v340 = vrot.slane %v336, 6
    %v342 = vadd.f32 %v145, %v340
    %v343 = vtanh.pop %v342
    %v344 = vmul.f32 %v153, %v343
    %v345 = vrot.slane %v237, 6
    %v347 = vmul.f32 %v235, %v345
    %v348 = vadd.f32 %v344, %v347
    %v351 = vunpack.c.l.s4 1966171168
    %v352 = vunpack.c.0.s8 %v351
    %v353 = vlaneseq
    %v354 = vshrl.u32 %v353, 7
    %v355 = vsub.s32 %v352, %v354
    %v356 = vrot.slane %v344, %v355
    %v357 = vcombine.high %v356, %v356
    %v359 = vunpack.c.l.s4 1966171168
    %v360 = vunpack.c.0.s8 %v359
    %v361 = vlaneseq
    %v362 = vshrl.u32 %v361, 7
    %v363 = vsub.s32 %v360, %v362
    %v364 = vrot.slane %v356, %v363
    %v366 = vunpack.c.l.s4 1966171168
    %v367 = vunpack.c.0.s8 %v366
    %v368 = vlaneseq
    %v369 = vshrl.u32 %v368, 7
    %v370 = vsub.s32 %v367, %v369
    %v371 = vrot.slane %v357, %v370
    %v372 = vcombine.high %v364, %v364
    %v373 = vcombine.high %v371, %v371
    %376 = vst.msk [vmem:[#allocation2 + $0x1] sm:$0x1] %vm263, %v372
    %377 = vst.msk [vmem:[#allocation2 + $0x9] sm:$0x1] %vm263, %v373
    %v379 = vrot.slane %v348, 2
    %v380 = vsel %vm71, %v379, 0
    %382 = vmatprep.subr.mxu0 0.0
    %383 = vmatpush1.msra.mxu0 %v155
    %384 = vmatprep.subr.mxu0 0.0
    %385 = vmatpush1.msra.mxu0 %v156
    %386 = vmatprep.subr.mxu0 0.0
    %387 = vmatpush1.msra.mxu0 %v157
    %388 = vmatprep.subr.mxu0 0.0
    %389 = vmatpush1.msra.mxu0 %v158
    %390 = vmatprep.subr.mxu0 0.0
    %391 = vmatpush1.msra.mxu0 0.0
    %392 = vmatprep.subr.mxu0 0.0
    %393 = vmatpush1.msra.mxu0 0.0
    %394 = vmatprep.subr.mxu0 0.0
    %395 = vmatpush1.msra.mxu0 0.0
    %396 = vmatprep.subr.mxu0 0.0
    %397 = vmatpush1.msra.mxu0 0.0
    %398 = vmatprep.subr.mxu0 0.0
    %399 = vmatpush1.msra.mxu0 0.0
    %400 = vmatprep.subr.mxu0 0.0
    %401 = vmatpush1.msra.mxu0 0.0
    %402 = vmatprep.subr.mxu0 0.0
    %403 = vmatpush1.msra.mxu0 0.0
    %404 = vmatprep.subr.mxu0 0.0
    %405 = vmatpush1.msra.mxu0 0.0
    %406 = vmatprep.subr.mxu0 0.0
    %407 = vmatpush1.msra.mxu0 0.0
    %408 = vmatprep.subr.mxu0 0.0
    %409 = vmatpush1.msra.mxu0 0.0
    %410 = vmatprep.subr.mxu0 0.0
    %411 = vmatpush1.msra.mxu0 0.0
    %412 = vmatprep.subr.mxu0 0.0
    %413 = vmatpush1.msra.mxu0 0.0
    %414 = vmatprep.subr.mxu0 0.0
    %415 = vmatpush1.msra.mxu0 0.0
    %416 = vmatprep.subr.mxu0 0.0
    %417 = vmatpush1.msra.mxu0 0.0
    %418 = vmatprep.subr.mxu0 0.0
    %419 = vmatpush1.msra.mxu0 0.0
    %420 = vmatprep.subr.mxu0 0.0
    %421 = vmatpush1.msra.mxu0 0.0
    %422 = vmatprep.subr.mxu0 0.0
    %423 = vmatpush1.msra.mxu0 0.0
    %424 = vmatprep.subr.mxu0 0.0
    %425 = vmatpush1.msra.mxu0 0.0
    %426 = vmatprep.subr.mxu0 0.0
    %427 = vmatpush1.msra.mxu0 0.0
    %428 = vmatprep.subr.mxu0 0.0
    %429 = vmatpush1.msra.mxu0 0.0
    %430 = vmatprep.subr.mxu0 0.0
    %431 = vmatpush1.msra.mxu0 0.0
    %432 = vmatprep.subr.mxu0 0.0
    %433 = vmatpush1.msra.mxu0 0.0
    %434 = vmatprep.subr.mxu0 0.0
    %435 = vmatpush1.msra.mxu0 0.0
    %436 = vmatprep.subr.mxu0 0.0
    %437 = vmatpush1.msra.mxu0 0.0
    %438 = vmatprep.subr.mxu0 0.0
    %439 = vmatpush1.msra.mxu0 0.0
    %440 = vmatprep.subr.mxu0 0.0
    %441 = vmatpush1.msra.mxu0 0.0
    %442 = vmatprep.subr.mxu0 0.0
    %443 = vmatpush1.msra.mxu0 0.0
    %444 = vmatprep.subr.mxu0 0.0
    %445 = vmatpush1.msra.mxu0 0.0
    %446 = vmatprep.mubr.f32.mxu0 0.0
    %447 = vmatmul.mubr.f32.gmra.mrb[0].mxu0 %v380
    %v448 = vpop.f32.mrb[0].mxu0
    %v449 = vadd.f32 0.0, %v448
    %v450 = vpop.f32.mrb[0].mxu0
    %451 = vdwg.mxu0
    %v453 = vrot.slane %v449, 4
    %v455 = vadd.f32 %v145, %v453
    %v456 = vtanh.pop %v455
    %v457 = vmul.f32 %v153, %v456
    %v458 = vrot.slane %v348, 6
    %v460 = vmul.f32 %v235, %v458
    %v461 = vadd.f32 %v457, %v460
    %v463 = vcombine.high %v457, %v457
    %v465 = vunpack.c.l.s4 1966171168
    %v466 = vunpack.c.0.s8 %v465
    %v467 = vlaneseq
    %v468 = vshrl.u32 %v467, 7
    %v469 = vsub.s32 %v466, %v468
    %v470 = vrot.slane %v463, %v469
    %v471 = vcombine.high %v470, %v470
    %v473 = vunpack.c.l.s4 1966171168
    %v474 = vunpack.c.0.s8 %v473
    %v475 = vlaneseq
    %v476 = vshrl.u32 %v475, 7
    %v477 = vsub.s32 %v474, %v476
    %v478 = vrot.slane %v470, %v477
    %v480 = vunpack.c.l.s4 1966171168
    %v481 = vunpack.c.0.s8 %v480
    %v482 = vlaneseq
    %v483 = vshrl.u32 %v482, 7
    %v484 = vsub.s32 %v481, %v483
    %v485 = vrot.slane %v471, %v484
    %488 = vst.msk [vmem:[#allocation2 + $0x2] sm:$0x1] %vm263, %v478
    %489 = vst.msk [vmem:[#allocation2 + $0xa] sm:$0x1] %vm263, %v485
    %v491 = vrot.slane %v461, 4
    %v492 = vsel %vm71, %v491, 0
    %494 = vmatprep.subr.mxu0 0.0
    %495 = vmatpush1.msra.mxu0 %v155
    %496 = vmatprep.subr.mxu0 0.0
    %497 = vmatpush1.msra.mxu0 %v156
    %498 = vmatprep.subr.mxu0 0.0
    %499 = vmatpush1.msra.mxu0 %v157
    %500 = vmatprep.subr.mxu0 0.0
    %501 = vmatpush1.msra.mxu0 %v158
    %502 = vmatprep.subr.mxu0 0.0
    %503 = vmatpush1.msra.mxu0 0.0
    %504 = vmatprep.subr.mxu0 0.0
    %505 = vmatpush1.msra.mxu0 0.0
    %506 = vmatprep.subr.mxu0 0.0
    %507 = vmatpush1.msra.mxu0 0.0
    %508 = vmatprep.subr.mxu0 0.0
    %509 = vmatpush1.msra.mxu0 0.0
    %510 = vmatprep.subr.mxu0 0.0
    %511 = vmatpush1.msra.mxu0 0.0
    %512 = vmatprep.subr.mxu0 0.0
    %513 = vmatpush1.msra.mxu0 0.0
    %514 = vmatprep.subr.mxu0 0.0
    %515 = vmatpush1.msra.mxu0 0.0
    %516 = vmatprep.subr.mxu0 0.0
    %517 = vmatpush1.msra.mxu0 0.0
    %518 = vmatprep.subr.mxu0 0.0
    %519 = vmatpush1.msra.mxu0 0.0
    %520 = vmatprep.subr.mxu0 0.0
    %521 = vmatpush1.msra.mxu0 0.0
    %522 = vmatprep.subr.mxu0 0.0
    %523 = vmatpush1.msra.mxu0 0.0
    %524 = vmatprep.subr.mxu0 0.0
    %525 = vmatpush1.msra.mxu0 0.0
    %526 = vmatprep.subr.mxu0 0.0
    %527 = vmatpush1.msra.mxu0 0.0
    %528 = vmatprep.subr.mxu0 0.0
    %529 = vmatpush1.msra.mxu0 0.0
    %530 = vmatprep.subr.mxu0 0.0
    %531 = vmatpush1.msra.mxu0 0.0
    %532 = vmatprep.subr.mxu0 0.0
    %533 = vmatpush1.msra.mxu0 0.0
    %534 = vmatprep.subr.mxu0 0.0
    %535 = vmatpush1.msra.mxu0 0.0
    %536 = vmatprep.subr.mxu0 0.0
    %537 = vmatpush1.msra.mxu0 0.0
    %538 = vmatprep.subr.mxu0 0.0
    %539 = vmatpush1.msra.mxu0 0.0
    %540 = vmatprep.subr.mxu0 0.0
    %541 = vmatpush1.msra.mxu0 0.0
    %542 = vmatprep.subr.mxu0 0.0
    %543 = vmatpush1.msra.mxu0 0.0
    %544 = vmatprep.subr.mxu0 0.0
    %545 = vmatpush1.msra.mxu0 0.0
    %546 = vmatprep.subr.mxu0 0.0
    %547 = vmatpush1.msra.mxu0 0.0
    %548 = vmatprep.subr.mxu0 0.0
    %549 = vmatpush1.msra.mxu0 0.0
    %550 = vmatprep.subr.mxu0 0.0
    %551 = vmatpush1.msra.mxu0 0.0
    %552 = vmatprep.subr.mxu0 0.0
    %553 = vmatpush1.msra.mxu0 0.0
    %554 = vmatprep.subr.mxu0 0.0
    %555 = vmatpush1.msra.mxu0 0.0
    %556 = vmatprep.subr.mxu0 0.0
    %557 = vmatpush1.msra.mxu0 0.0
    %558 = vmatprep.mubr.f32.mxu0 0.0
    %559 = vmatmul.mubr.f32.gmra.mrb[0].mxu0 %v492
    %v560 = vpop.f32.mrb[0].mxu0
    %v561 = vadd.f32 0.0, %v560
    %v562 = vpop.f32.mrb[0].mxu0
    %563 = vdwg.mxu0
    %v565 = vrot.slane %v561, 2
    %v567 = vadd.f32 %v145, %v565
    %v568 = vtanh.pop %v567
    %v569 = vmul.f32 %v153, %v568
    %v570 = vrot.slane %v461, 6
    %v572 = vmul.f32 %v235, %v570
    %v573 = vadd.f32 %v569, %v572
    %v575 = vcombine.high %v569, %v569
    %v577 = vunpack.c.l.s4 1966171168
    %v578 = vunpack.c.0.s8 %v577
    %v579 = vlaneseq
    %v580 = vshrl.u32 %v579, 7
    %v581 = vsub.s32 %v578, %v580
    %v582 = vrot.slane %v575, %v581
    %v583 = vcombine.high %v582, %v582
    %v585 = vunpack.c.l.s4 1966171168
    %v586 = vunpack.c.0.s8 %v585
    %v587 = vlaneseq
    %v588 = vshrl.u32 %v587, 7
    %v589 = vsub.s32 %v586, %v588
    %v590 = vrot.slane %v582, %v589
    %v592 = vunpack.c.l.s4 1966171168
    %v593 = vunpack.c.0.s8 %v592
    %v594 = vlaneseq
    %v595 = vshrl.u32 %v594, 7
    %v596 = vsub.s32 %v593, %v595
    %v597 = vrot.slane %v583, %v596
    %v598 = vcombine.high %v590, %v590
    %v599 = vcombine.high %v597, %v597
    %602 = vst.msk [vmem:[#allocation2 + $0x3] sm:$0x1] %vm263, %v598
    %603 = vst.msk [vmem:[#allocation2 + $0xb] sm:$0x1] %vm263, %v599
    %v605 = vrot.slane %v573, 6
    %v606 = vsel %vm71, %v605, 0
    %608 = vmatprep.subr.mxu0 0.0
    %609 = vmatpush1.msra.mxu0 %v155
    %610 = vmatprep.subr.mxu0 0.0
    %611 = vmatpush1.msra.mxu0 %v156
    %612 = vmatprep.subr.mxu0 0.0
    %613 = vmatpush1.msra.mxu0 %v157
    %614 = vmatprep.subr.mxu0 0.0
    %615 = vmatpush1.msra.mxu0 %v158
    %616 = vmatprep.subr.mxu0 0.0
    %617 = vmatpush1.msra.mxu0 0.0
    %618 = vmatprep.subr.mxu0 0.0
    %619 = vmatpush1.msra.mxu0 0.0
    %620 = vmatprep.subr.mxu0 0.0
    %621 = vmatpush1.msra.mxu0 0.0
    %622 = vmatprep.subr.mxu0 0.0
    %623 = vmatpush1.msra.mxu0 0.0
    %624 = vmatprep.subr.mxu0 0.0
    %625 = vmatpush1.msra.mxu0 0.0
    %626 = vmatprep.subr.mxu0 0.0
    %627 = vmatpush1.msra.mxu0 0.0
    %628 = vmatprep.subr.mxu0 0.0
    %629 = vmatpush1.msra.mxu0 0.0
    %630 = vmatprep.subr.mxu0 0.0
    %631 = vmatpush1.msra.mxu0 0.0
    %632 = vmatprep.subr.mxu0 0.0
    %633 = vmatpush1.msra.mxu0 0.0
    %634 = vmatprep.subr.mxu0 0.0
    %635 = vmatpush1.msra.mxu0 0.0
    %636 = vmatprep.subr.mxu0 0.0
    %637 = vmatpush1.msra.mxu0 0.0
    %638 = vmatprep.subr.mxu0 0.0
    %639 = vmatpush1.msra.mxu0 0.0
    %640 = vmatprep.subr.mxu0 0.0
    %641 = vmatpush1.msra.mxu0 0.0
    %642 = vmatprep.subr.mxu0 0.0
    %643 = vmatpush1.msra.mxu0 0.0
    %644 = vmatprep.subr.mxu0 0.0
    %645 = vmatpush1.msra.mxu0 0.0
    %646 = vmatprep.subr.mxu0 0.0
    %647 = vmatpush1.msra.mxu0 0.0
    %648 = vmatprep.subr.mxu0 0.0
    %649 = vmatpush1.msra.mxu0 0.0
    %650 = vmatprep.subr.mxu0 0.0
    %651 = vmatpush1.msra.mxu0 0.0
    %652 = vmatprep.subr.mxu0 0.0
    %653 = vmatpush1.msra.mxu0 0.0
    %654 = vmatprep.subr.mxu0 0.0
    %655 = vmatpush1.msra.mxu0 0.0
    %656 = vmatprep.subr.mxu0 0.0
    %657 = vmatpush1.msra.mxu0 0.0
    %658 = vmatprep.subr.mxu0 0.0
    %659 = vmatpush1.msra.mxu0 0.0
    %660 = vmatprep.subr.mxu0 0.0
    %661 = vmatpush1.msra.mxu0 0.0
    %662 = vmatprep.subr.mxu0 0.0
    %663 = vmatpush1.msra.mxu0 0.0
    %664 = vmatprep.subr.mxu0 0.0
    %665 = vmatpush1.msra.mxu0 0.0
    %666 = vmatprep.subr.mxu0 0.0
    %667 = vmatpush1.msra.mxu0 0.0
    %668 = vmatprep.subr.mxu0 0.0
    %669 = vmatpush1.msra.mxu0 0.0
    %670 = vmatprep.subr.mxu0 0.0
    %671 = vmatpush1.msra.mxu0 0.0
    %672 = vmatprep.mubr.f32.mxu0 0.0
    %673 = vmatmul.mubr.f32.gmra.mrb[0].mxu0 %v606
    %v674 = vpop.f32.mrb[0].mxu0
    %v675 = vadd.f32 0.0, %v674
    %v676 = vpop.f32.mrb[0].mxu0
    %677 = vdwg.mxu0
    %v678 = vadd.f32 %v150, %v675
    %v679 = vtanh.pop %v678
    %v680 = vmul.f32 %v154, %v679
    %v681 = vsub.f32 1.0, %v154
    %v683 = vmul.f32 %v681, %v605
    %v684 = vadd.f32 %v680, %v683
    %v687 = vunpack.c.l.s4 1966171168
    %v688 = vunpack.c.0.s8 %v687
    %v689 = vlaneseq
    %v690 = vshrl.u32 %v689, 7
    %v691 = vsub.s32 %v688, %v690
    %v692 = vrot.slane %v680, %v691
    %v693 = vcombine.high %v692, %v692
    %v695 = vunpack.c.l.s4 1966171168
    %v696 = vunpack.c.0.s8 %v695
    %v697 = vlaneseq
    %v698 = vshrl.u32 %v697, 7
    %v699 = vsub.s32 %v696, %v698
    %v700 = vrot.slane %v692, %v699
    %v702 = vunpack.c.l.s4 1966171168
    %v703 = vunpack.c.0.s8 %v702
    %v704 = vlaneseq
    %v705 = vshrl.u32 %v704, 7
    %v706 = vsub.s32 %v703, %v705
    %v707 = vrot.slane %v693, %v706
    %710 = vst.msk [vmem:[#allocation2 + $0x4] sm:$0x1] %vm263, %v700
    %711 = vst.msk [vmem:[#allocation2 + $0xc] sm:$0x1] %vm263, %v707
    %v713 = vsel %vm71, %v684, 0
    %715 = vmatprep.subr.mxu0 0.0
    %716 = vmatpush1.msra.mxu0 %v155
    %717 = vmatprep.subr.mxu0 0.0
    %718 = vmatpush1.msra.mxu0 %v156
    %719 = vmatprep.subr.mxu0 0.0
    %720 = vmatpush1.msra.mxu0 %v157
    %721 = vmatprep.subr.mxu0 0.0
    %722 = vmatpush1.msra.mxu0 %v158
    %723 = vmatprep.subr.mxu0 0.0
    %724 = vmatpush1.msra.mxu0 0.0
    %725 = vmatprep.subr.mxu0 0.0
    %726 = vmatpush1.msra.mxu0 0.0
    %727 = vmatprep.subr.mxu0 0.0
    %728 = vmatpush1.msra.mxu0 0.0
    %729 = vmatprep.subr.mxu0 0.0
    %730 = vmatpush1.msra.mxu0 0.0
    %731 = vmatprep.subr.mxu0 0.0
    %732 = vmatpush1.msra.mxu0 0.0
    %733 = vmatprep.subr.mxu0 0.0
    %734 = vmatpush1.msra.mxu0 0.0
    %735 = vmatprep.subr.mxu0 0.0
    %736 = vmatpush1.msra.mxu0 0.0
    %737 = vmatprep.subr.mxu0 0.0
    %738 = vmatpush1.msra.mxu0 0.0
    %739 = vmatprep.subr.mxu0 0.0
    %740 = vmatpush1.msra.mxu0 0.0
    %741 = vmatprep.subr.mxu0 0.0
    %742 = vmatpush1.msra.mxu0 0.0
    %743 = vmatprep.subr.mxu0 0.0
    %744 = vmatpush1.msra.mxu0 0.0
    %745 = vmatprep.subr.mxu0 0.0
    %746 = vmatpush1.msra.mxu0 0.0
    %747 = vmatprep.subr.mxu0 0.0
    %748 = vmatpush1.msra.mxu0 0.0
    %749 = vmatprep.subr.mxu0 0.0
    %750 = vmatpush1.msra.mxu0 0.0
    %751 = vmatprep.subr.mxu0 0.0
    %752 = vmatpush1.msra.mxu0 0.0
    %753 = vmatprep.subr.mxu0 0.0
    %754 = vmatpush1.msra.mxu0 0.0
    %755 = vmatprep.subr.mxu0 0.0
    %756 = vmatpush1.msra.mxu0 0.0
    %757 = vmatprep.subr.mxu0 0.0
    %758 = vmatpush1.msra.mxu0 0.0
    %759 = vmatprep.subr.mxu0 0.0
    %760 = vmatpush1.msra.mxu0 0.0
    %761 = vmatprep.subr.mxu0 0.0
    %762 = vmatpush1.msra.mxu0 0.0
    %763 = vmatprep.subr.mxu0 0.0
    %764 = vmatpush1.msra.mxu0 0.0
    %765 = vmatprep.subr.mxu0 0.0
    %766 = vmatpush1.msra.mxu0 0.0
    %767 = vmatprep.subr.mxu0 0.0
    %768 = vmatpush1.msra.mxu0 0.0
    %769 = vmatprep.subr.mxu0 0.0
    %770 = vmatpush1.msra.mxu0 0.0
    %771 = vmatprep.subr.mxu0 0.0
    %772 = vmatpush1.msra.mxu0 0.0
    %773 = vmatprep.subr.mxu0 0.0
    %774 = vmatpush1.msra.mxu0 0.0
    %775 = vmatprep.subr.mxu0 0.0
    %776 = vmatpush1.msra.mxu0 0.0
    %777 = vmatprep.subr.mxu0 0.0
    %778 = vmatpush1.msra.mxu0 0.0
    %779 = vmatprep.mubr.f32.mxu0 0.0
    %780 = vmatmul.mubr.f32.gmra.mrb[0].mxu0 %v713
    %v781 = vpop.f32.mrb[0].mxu0
    %v782 = vadd.f32 0.0, %v781
    %v783 = vpop.f32.mrb[0].mxu0
    %784 = vdwg.mxu0
    %v786 = vrot.slane %v782, 6
    %v788 = vadd.f32 %v150, %v786
    %v789 = vtanh.pop %v788
    %v790 = vmul.f32 %v154, %v789
    %v791 = vrot.slane %v684, 6
    %v793 = vmul.f32 %v681, %v791
    %v794 = vadd.f32 %v790, %v793
    %v797 = vunpack.c.l.s4 1966171168
    %v798 = vunpack.c.0.s8 %v797
    %v799 = vlaneseq
    %v800 = vshrl.u32 %v799, 7
    %v801 = vsub.s32 %v798, %v800
    %v802 = vrot.slane %v790, %v801
    %v803 = vcombine.high %v802, %v802
    %v805 = vunpack.c.l.s4 1966171168
    %v806 = vunpack.c.0.s8 %v805
    %v807 = vlaneseq
    %v808 = vshrl.u32 %v807, 7
    %v809 = vsub.s32 %v806, %v808
    %v810 = vrot.slane %v802, %v809
    %v812 = vunpack.c.l.s4 1966171168
    %v813 = vunpack.c.0.s8 %v812
    %v814 = vlaneseq
    %v815 = vshrl.u32 %v814, 7
    %v816 = vsub.s32 %v813, %v815
    %v817 = vrot.slane %v803, %v816
    %v818 = vcombine.high %v810, %v810
    %v819 = vcombine.high %v817, %v817
    %822 = vst.msk [vmem:[#allocation2 + $0x5] sm:$0x1] %vm263, %v818
    %823 = vst.msk [vmem:[#allocation2 + $0xd] sm:$0x1] %vm263, %v819
    %v825 = vrot.slane %v794, 2
    %v826 = vsel %vm71, %v825, 0
    %828 = vmatprep.subr.mxu0 0.0
    %829 = vmatpush1.msra.mxu0 %v155
    %830 = vmatprep.subr.mxu0 0.0
    %831 = vmatpush1.msra.mxu0 %v156
    %832 = vmatprep.subr.mxu0 0.0
    %833 = vmatpush1.msra.mxu0 %v157
    %834 = vmatprep.subr.mxu0 0.0
    %835 = vmatpush1.msra.mxu0 %v158
    %836 = vmatprep.subr.mxu0 0.0
    %837 = vmatpush1.msra.mxu0 0.0
    %838 = vmatprep.subr.mxu0 0.0
    %839 = vmatpush1.msra.mxu0 0.0
    %840 = vmatprep.subr.mxu0 0.0
    %841 = vmatpush1.msra.mxu0 0.0
    %842 = vmatprep.subr.mxu0 0.0
    %843 = vmatpush1.msra.mxu0 0.0
    %844 = vmatprep.subr.mxu0 0.0
    %845 = vmatpush1.msra.mxu0 0.0
    %846 = vmatprep.subr.mxu0 0.0
    %847 = vmatpush1.msra.mxu0 0.0
    %848 = vmatprep.subr.mxu0 0.0
    %849 = vmatpush1.msra.mxu0 0.0
    %850 = vmatprep.subr.mxu0 0.0
    %851 = vmatpush1.msra.mxu0 0.0
    %852 = vmatprep.subr.mxu0 0.0
    %853 = vmatpush1.msra.mxu0 0.0
    %854 = vmatprep.subr.mxu0 0.0
    %855 = vmatpush1.msra.mxu0 0.0
    %856 = vmatprep.subr.mxu0 0.0
    %857 = vmatpush1.msra.mxu0 0.0
    %858 = vmatprep.subr.mxu0 0.0
    %859 = vmatpush1.msra.mxu0 0.0
    %860 = vmatprep.subr.mxu0 0.0
    %861 = vmatpush1.msra.mxu0 0.0
    %862 = vmatprep.subr.mxu0 0.0
    %863 = vmatpush1.msra.mxu0 0.0
    %864 = vmatprep.subr.mxu0 0.0
    %865 = vmatpush1.msra.mxu0 0.0
    %866 = vmatprep.subr.mxu0 0.0
    %867 = vmatpush1.msra.mxu0 0.0
    %868 = vmatprep.subr.mxu0 0.0
    %869 = vmatpush1.msra.mxu0 0.0
    %870 = vmatprep.subr.mxu0 0.0
    %871 = vmatpush1.msra.mxu0 0.0
    %872 = vmatprep.subr.mxu0 0.0
    %873 = vmatpush1.msra.mxu0 0.0
    %874 = vmatprep.subr.mxu0 0.0
    %875 = vmatpush1.msra.mxu0 0.0
    %876 = vmatprep.subr.mxu0 0.0
    %877 = vmatpush1.msra.mxu0 0.0
    %878 = vmatprep.subr.mxu0 0.0
    %879 = vmatpush1.msra.mxu0 0.0
    %880 = vmatprep.subr.mxu0 0.0
    %881 = vmatpush1.msra.mxu0 0.0
    %882 = vmatprep.subr.mxu0 0.0
    %883 = vmatpush1.msra.mxu0 0.0
    %884 = vmatprep.subr.mxu0 0.0
    %885 = vmatpush1.msra.mxu0 0.0
    %886 = vmatprep.subr.mxu0 0.0
    %887 = vmatpush1.msra.mxu0 0.0
    %888 = vmatprep.subr.mxu0 0.0
    %889 = vmatpush1.msra.mxu0 0.0
    %890 = vmatprep.subr.mxu0 0.0
    %891 = vmatpush1.msra.mxu0 0.0
    %892 = vmatprep.mubr.f32.mxu0 0.0
    %893 = vmatmul.mubr.f32.gmra.mrb[0].mxu0 %v826
    %v894 = vpop.f32.mrb[0].mxu0
    %v895 = vadd.f32 0.0, %v894
    %v896 = vpop.f32.mrb[0].mxu0
    %897 = vdwg.mxu0
    %v899 = vrot.slane %v895, 4
    %v901 = vadd.f32 %v150, %v899
    %v902 = vtanh.pop %v901
    %v903 = vmul.f32 %v154, %v902
    %v904 = vrot.slane %v794, 6
    %v906 = vmul.f32 %v681, %v904
    %v907 = vadd.f32 %v903, %v906
    %v909 = vcombine.high %v903, %v903
    %v911 = vunpack.c.l.s4 1966171168
    %v912 = vunpack.c.0.s8 %v911
    %v913 = vlaneseq
    %v914 = vshrl.u32 %v913, 7
    %v915 = vsub.s32 %v912, %v914
    %v916 = vrot.slane %v909, %v915
    %v917 = vcombine.high %v916, %v916
    %v919 = vunpack.c.l.s4 1966171168
    %v920 = vunpack.c.0.s8 %v919
    %v921 = vlaneseq
    %v922 = vshrl.u32 %v921, 7
    %v923 = vsub.s32 %v920, %v922
    %v924 = vrot.slane %v916, %v923
    %v926 = vunpack.c.l.s4 1966171168
    %v927 = vunpack.c.0.s8 %v926
    %v928 = vlaneseq
    %v929 = vshrl.u32 %v928, 7
    %v930 = vsub.s32 %v927, %v929
    %v931 = vrot.slane %v917, %v930
    %934 = vst.msk [vmem:[#allocation2 + $0x6] sm:$0x1] %vm263, %v924
    %935 = vst.msk [vmem:[#allocation2 + $0xe] sm:$0x1] %vm263, %v931
    %v937 = vrot.slane %v907, 4
    %v938 = vsel %vm71, %v937, 0
    %940 = vmatprep.subr.mxu0 0.0
    %941 = vmatpush1.msra.mxu0 %v155
    %942 = vmatprep.subr.mxu0 0.0
    %943 = vmatpush1.msra.mxu0 %v156
    %944 = vmatprep.subr.mxu0 0.0
    %945 = vmatpush1.msra.mxu0 %v157
    %946 = vmatprep.subr.mxu0 0.0
    %947 = vmatpush1.msra.mxu0 %v158
    %948 = vmatprep.subr.mxu0 0.0
    %949 = vmatpush1.msra.mxu0 0.0
    %950 = vmatprep.subr.mxu0 0.0
    %951 = vmatpush1.msra.mxu0 0.0
    %952 = vmatprep.subr.mxu0 0.0
    %953 = vmatpush1.msra.mxu0 0.0
    %954 = vmatprep.subr.mxu0 0.0
    %955 = vmatpush1.msra.mxu0 0.0
    %956 = vmatprep.subr.mxu0 0.0
    %957 = vmatpush1.msra.mxu0 0.0
    %958 = vmatprep.subr.mxu0 0.0
    %959 = vmatpush1.msra.mxu0 0.0
    %960 = vmatprep.subr.mxu0 0.0
    %961 = vmatpush1.msra.mxu0 0.0
    %962 = vmatprep.subr.mxu0 0.0
    %963 = vmatpush1.msra.mxu0 0.0
    %964 = vmatprep.subr.mxu0 0.0
    %965 = vmatpush1.msra.mxu0 0.0
    %966 = vmatprep.subr.mxu0 0.0
    %967 = vmatpush1.msra.mxu0 0.0
    %968 = vmatprep.subr.mxu0 0.0
    %969 = vmatpush1.msra.mxu0 0.0
    %970 = vmatprep.subr.mxu0 0.0
    %971 = vmatpush1.msra.mxu0 0.0
    %972 = vmatprep.subr.mxu0 0.0
    %973 = vmatpush1.msra.mxu0 0.0
    %974 = vmatprep.subr.mxu0 0.0
    %975 = vmatpush1.msra.mxu0 0.0
    %976 = vmatprep.subr.mxu0 0.0
    %977 = vmatpush1.msra.mxu0 0.0
    %978 = vmatprep.subr.mxu0 0.0
    %979 = vmatpush1.msra.mxu0 0.0
    %980 = vmatprep.subr.mxu0 0.0
    %981 = vmatpush1.msra.mxu0 0.0
    %982 = vmatprep.subr.mxu0 0.0
    %983 = vmatpush1.msra.mxu0 0.0
    %984 = vmatprep.subr.mxu0 0.0
    %985 = vmatpush1.msra.mxu0 0.0
    %986 = vmatprep.subr.mxu0 0.0
    %987 = vmatpush1.msra.mxu0 0.0
    %988 = vmatprep.subr.mxu0 0.0
    %989 = vmatpush1.msra.mxu0 0.0
    %990 = vmatprep.subr.mxu0 0.0
    %991 = vmatpush1.msra.mxu0 0.0
    %992 = vmatprep.subr.mxu0 0.0
    %993 = vmatpush1.msra.mxu0 0.0
    %994 = vmatprep.subr.mxu0 0.0
    %995 = vmatpush1.msra.mxu0 0.0
    %996 = vmatprep.subr.mxu0 0.0
    %997 = vmatpush1.msra.mxu0 0.0
    %998 = vmatprep.subr.mxu0 0.0
    %999 = vmatpush1.msra.mxu0 0.0
    %1000 = vmatprep.subr.mxu0 0.0
    %1001 = vmatpush1.msra.mxu0 0.0
    %1002 = vmatprep.subr.mxu0 0.0
    %1003 = vmatpush1.msra.mxu0 0.0
    %1004 = vmatprep.mubr.f32.mxu0 0.0
    %1005 = vmatmul.mubr.f32.gmra.mrb[0].mxu0 %v938
    %v1006 = vpop.f32.mrb[0].mxu0
    %v1007 = vadd.f32 0.0, %v1006
    %v1008 = vpop.f32.mrb[0].mxu0
    %1009 = vdwg.mxu0
    %v1011 = vrot.slane %v1007, 2
    %v1013 = vadd.f32 %v150, %v1011
    %v1014 = vtanh.pop %v1013
    %v1015 = vmul.f32 %v154, %v1014
    %v1016 = vrot.slane %v907, 6
    %v1018 = vmul.f32 %v681, %v1016
    %v1019 = vadd.f32 %v1015, %v1018
    %v1021 = vcombine.high %v1015, %v1015
    %v1023 = vunpack.c.l.s4 1966171168
    %v1024 = vunpack.c.0.s8 %v1023
    %v1025 = vlaneseq
    %v1026 = vshrl.u32 %v1025, 7
    %v1027 = vsub.s32 %v1024, %v1026
    %v1028 = vrot.slane %v1021, %v1027
    %v1029 = vcombine.high %v1028, %v1028
    %v1031 = vunpack.c.l.s4 1966171168
    %v1032 = vunpack.c.0.s8 %v1031
    %v1033 = vlaneseq
    %v1034 = vshrl.u32 %v1033, 7
    %v1035 = vsub.s32 %v1032, %v1034
    %v1036 = vrot.slane %v1028, %v1035
    %v1038 = vunpack.c.l.s4 1966171168
    %v1039 = vunpack.c.0.s8 %v1038
    %v1040 = vlaneseq
    %v1041 = vshrl.u32 %v1040, 7
    %v1042 = vsub.s32 %v1039, %v1041
    %v1043 = vrot.slane %v1029, %v1042
    %v1044 = vcombine.high %v1036, %v1036
    %v1045 = vcombine.high %v1043, %v1043
    %1048 = vst.msk [vmem:[#allocation2 + $0x7] sm:$0x1] %vm263, %v1044
    %1049 = vst.msk [vmem:[#allocation2 + $0xf] sm:$0x1] %vm263, %v1045
    %v1050 = vld [vmem:[#allocation2] sm:$0xff]
    %v1051 = vld [vmem:[#allocation2 + $0x8] sm:$0xff]
    %v1052 = vld [vmem:[%s11] sm:$0xff]
    %v1053 = vld [vmem:[%s11 + $0x8] sm:$0xff]
    %v1054 = vld [vmem:[%s11 + $0x10] sm:$0xff]
    %v1055 = vld [vmem:[%s11 + $0x18] sm:$0xff]
    %v1057 = vsel %vm71, %v1050, 0
    %v1060 = vsel %vm71, %v1051, 0
    %1062 = vmatprep.subr.mxu0 0.0
    %1063 = vmatpush1.msra.mxu0 %v1052
    %1064 = vmatprep.subr.mxu0 0.0
    %1065 = vmatpush1.msra.mxu0 %v1053
    %1066 = vmatprep.subr.mxu0 0.0
    %1067 = vmatpush1.msra.mxu0 %v1054
    %1068 = vmatprep.subr.mxu0 0.0
    %1069 = vmatpush1.msra.mxu0 %v1055
    %1070 = vmatprep.subr.mxu0 0.0
    %1071 = vmatpush1.msra.mxu0 0.0
    %1072 = vmatprep.subr.mxu0 0.0
    %1073 = vmatpush1.msra.mxu0 0.0
    %1074 = vmatprep.subr.mxu0 0.0
    %1075 = vmatpush1.msra.mxu0 0.0
    %1076 = vmatprep.subr.mxu0 0.0
    %1077 = vmatpush1.msra.mxu0 0.0
    %1078 = vmatprep.subr.mxu0 0.0
    %1079 = vmatpush1.msra.mxu0 0.0
    %1080 = vmatprep.subr.mxu0 0.0
    %1081 = vmatpush1.msra.mxu0 0.0
    %1082 = vmatprep.subr.mxu0 0.0
    %1083 = vmatpush1.msra.mxu0 0.0
    %1084 = vmatprep.subr.mxu0 0.0
    %1085 = vmatpush1.msra.mxu0 0.0
    %1086 = vmatprep.subr.mxu0 0.0
    %1087 = vmatpush1.msra.mxu0 0.0
    %1088 = vmatprep.subr.mxu0 0.0
    %1089 = vmatpush1.msra.mxu0 0.0
    %1090 = vmatprep.subr.mxu0 0.0
    %1091 = vmatpush1.msra.mxu0 0.0
    %1092 = vmatprep.subr.mxu0 0.0
    %1093 = vmatpush1.msra.mxu0 0.0
    %1094 = vmatprep.subr.mxu0 0.0
    %1095 = vmatpush1.msra.mxu0 0.0
    %1096 = vmatprep.subr.mxu0 0.0
    %1097 = vmatpush1.msra.mxu0 0.0
    %1098 = vmatprep.subr.mxu0 0.0
    %1099 = vmatpush1.msra.mxu0 0.0
    %1100 = vmatprep.subr.mxu0 0.0
    %1101 = vmatpush1.msra.mxu0 0.0
    %1102 = vmatprep.subr.mxu0 0.0
    %1103 = vmatpush1.msra.mxu0 0.0
    %1104 = vmatprep.subr.mxu0 0.0
    %1105 = vmatpush1.msra.mxu0 0.0
    %1106 = vmatprep.subr.mxu0 0.0
    %1107 = vmatpush1.msra.mxu0 0.0
    %1108 = vmatprep.subr.mxu0 0.0
    %1109 = vmatpush1.msra.mxu0 0.0
    %1110 = vmatprep.subr.mxu0 0.0
    %1111 = vmatpush1.msra.mxu0 0.0
    %1112 = vmatprep.subr.mxu0 0.0
    %1113 = vmatpush1.msra.mxu0 0.0
    %1114 = vmatprep.subr.mxu0 0.0
    %1115 = vmatpush1.msra.mxu0 0.0
    %1116 = vmatprep.subr.mxu0 0.0
    %1117 = vmatpush1.msra.mxu0 0.0
    %1118 = vmatprep.subr.mxu0 0.0
    %1119 = vmatpush1.msra.mxu0 0.0
    %1120 = vmatprep.subr.mxu0 0.0
    %1121 = vmatpush1.msra.mxu0 0.0
    %1122 = vmatprep.subr.mxu0 0.0
    %1123 = vmatpush1.msra.mxu0 0.0
    %1124 = vmatprep.subr.mxu0 0.0
    %1125 = vmatpush1.msra.mxu0 0.0
    %1126 = vmatprep.mubr.f32.mxu0 0.0
    %1127 = vmatmul.mubr.f32.gmra.mrb[0].mxu0 %v1057
    %v1128 = vpop.f32.mrb[0].mxu0
    %v1129 = vadd.f32 0.0, %v1128
    %v1130 = vpop.f32.mrb[0].mxu0
    %1131 = vmatprep.mubr.f32.mxu0 0.0
    %1132 = vmatmul.mubr.f32.gmra.mrb[0].mxu0 %v1060
    %v1133 = vpop.f32.mrb[0].mxu0
    %v1134 = vadd.f32 0.0, %v1133
    %v1135 = vpop.f32.mrb[0].mxu0
    %1136 = vdwg.mxu0
    %v1137 = vld [vmem:[%s4] sm:$0x3]
    %v1138 = vld [vmem:[%s2] sm:$0xff]
    %v1139 = vld [vmem:[%s2 + $0x8] sm:$0xff]
    %v1140 = vld [vmem:[%s8] sm:$0xff]
    %v1141 = vld [vmem:[%s8 + $0x8] sm:$0xff]
    %v1142 = vld [vmem:[%s8 + $0x10] sm:$0xff]
    %v1143 = vld [vmem:[%s8 + $0x18] sm:$0xff]
    %v1144 = vld [vmem:[%s10] sm:$0x1]
    %v1146 = vlaneseq
    %v1147 = vshrl.u32 %v1146, 7
    %v1148 = vsub.s32 0, %v1147
    %v1149 = vrot.slane %v1144, %v1148
    %v1152 = vsel %vm71, %v1138, 0
    %v1155 = vsel %vm71, %v1139, 0
    %1157 = vmatprep.subr.mxu0 0.0
    %1158 = vmatpush1.msra.mxu0 %v1140
    %1159 = vmatprep.subr.mxu0 0.0
    %1160 = vmatpush1.msra.mxu0 %v1141
    %1161 = vmatprep.subr.mxu0 0.0
    %1162 = vmatpush1.msra.mxu0 %v1142
    %1163 = vmatprep.subr.mxu0 0.0
    %1164 = vmatpush1.msra.mxu0 %v1143
    %1165 = vmatprep.subr.mxu0 0.0
    %1166 = vmatpush1.msra.mxu0 0.0
    %1167 = vmatprep.subr.mxu0 0.0
    %1168 = vmatpush1.msra.mxu0 0.0
    %1169 = vmatprep.subr.mxu0 0.0
    %1170 = vmatpush1.msra.mxu0 0.0
    %1171 = vmatprep.subr.mxu0 0.0
    %1172 = vmatpush1.msra.mxu0 0.0
    %1173 = vmatprep.subr.mxu0 0.0
    %1174 = vmatpush1.msra.mxu0 0.0
    %1175 = vmatprep.subr.mxu0 0.0
    %1176 = vmatpush1.msra.mxu0 0.0
    %1177 = vmatprep.subr.mxu0 0.0
    %1178 = vmatpush1.msra.mxu0 0.0
    %1179 = vmatprep.subr.mxu0 0.0
    %1180 = vmatpush1.msra.mxu0 0.0
    %1181 = vmatprep.subr.mxu0 0.0
    %1182 = vmatpush1.msra.mxu0 0.0
    %1183 = vmatprep.subr.mxu0 0.0
    %1184 = vmatpush1.msra.mxu0 0.0
    %1185 = vmatprep.subr.mxu0 0.0
    %1186 = vmatpush1.msra.mxu0 0.0
    %1187 = vmatprep.subr.mxu0 0.0
    %1188 = vmatpush1.msra.mxu0 0.0
    %1189 = vmatprep.subr.mxu0 0.0
    %1190 = vmatpush1.msra.mxu0 0.0
    %1191 = vmatprep.subr.mxu0 0.0
    %1192 = vmatpush1.msra.mxu0 0.0
    %1193 = vmatprep.subr.mxu0 0.0
    %1194 = vmatpush1.msra.mxu0 0.0
    %1195 = vmatprep.subr.mxu0 0.0
    %1196 = vmatpush1.msra.mxu0 0.0
    %1197 = vmatprep.subr.mxu0 0.0
    %1198 = vmatpush1.msra.mxu0 0.0
    %1199 = vmatprep.subr.mxu0 0.0
    %1200 = vmatpush1.msra.mxu0 0.0
    %1201 = vmatprep.subr.mxu0 0.0
    %1202 = vmatpush1.msra.mxu0 0.0
    %1203 = vmatprep.subr.mxu0 0.0
    %1204 = vmatpush1.msra.mxu0 0.0
    %1205 = vmatprep.subr.mxu0 0.0
    %1206 = vmatpush1.msra.mxu0 0.0
    %1207 = vmatprep.subr.mxu0 0.0
    %1208 = vmatpush1.msra.mxu0 0.0
    %1209 = vmatprep.subr.mxu0 0.0
    %1210 = vmatpush1.msra.mxu0 0.0
    %1211 = vmatprep.subr.mxu0 0.0
    %1212 = vmatpush1.msra.mxu0 0.0
    %1213 = vmatprep.subr.mxu0 0.0
    %1214 = vmatpush1.msra.mxu0 0.0
    %1215 = vmatprep.subr.mxu0 0.0
    %1216 = vmatpush1.msra.mxu0 0.0
    %1217 = vmatprep.subr.mxu0 0.0
    %1218 = vmatpush1.msra.mxu0 0.0
    %1219 = vmatprep.subr.mxu0 0.0
    %1220 = vmatpush1.msra.mxu0 0.0
    %1221 = vmatprep.mubr.f32.mxu0 0.0
    %1222 = vmatmul.mubr.f32.gmra.mrb[0].mxu0 %v1152
    %v1223 = vpop.f32.mrb[0].mxu0
    %v1224 = vadd.f32 %v1149, %v1223
    %v1225 = vpop.f32.mrb[0].mxu0
    %1226 = vmatprep.mubr.f32.mxu0 0.0
    %1227 = vmatmul.mubr.f32.gmra.mrb[0].mxu0 %v1155
    %v1228 = vpop.f32.mrb[0].mxu0
    %v1229 = vadd.f32 %v1149, %v1228
    %v1230 = vpop.f32.mrb[0].mxu0
    %1231 = vdwg.mxu0
    %v1232 = vld [vmem:[%s9] sm:$0xff]
    %v1233 = vld [vmem:[%s9 + $0x8] sm:$0xff]
    %v1234 = vld [vmem:[%s9 + $0x10] sm:$0xff]
    %v1235 = vld [vmem:[%s9 + $0x18] sm:$0xff]
    %v1237 = vrot.slane %v1019, 6
    %v1238 = vsel %vm71, %v1237, 0
    %1240 = vmatprep.subr.mxu0 0.0
    %1241 = vmatpush1.msra.mxu0 %v1232
    %1242 = vmatprep.subr.mxu0 0.0
    %1243 = vmatpush1.msra.mxu0 %v1233
    %1244 = vmatprep.subr.mxu0 0.0
    %1245 = vmatpush1.msra.mxu0 %v1234
    %1246 = vmatprep.subr.mxu0 0.0
    %1247 = vmatpush1.msra.mxu0 %v1235
    %1248 = vmatprep.subr.mxu0 0.0
    %1249 = vmatpush1.msra.mxu0 0.0
    %1250 = vmatprep.subr.mxu0 0.0
    %1251 = vmatpush1.msra.mxu0 0.0
    %1252 = vmatprep.subr.mxu0 0.0
    %1253 = vmatpush1.msra.mxu0 0.0
    %1254 = vmatprep.subr.mxu0 0.0
    %1255 = vmatpush1.msra.mxu0 0.0
    %1256 = vmatprep.subr.mxu0 0.0
    %1257 = vmatpush1.msra.mxu0 0.0
    %1258 = vmatprep.subr.mxu0 0.0
    %1259 = vmatpush1.msra.mxu0 0.0
    %1260 = vmatprep.subr.mxu0 0.0
    %1261 = vmatpush1.msra.mxu0 0.0
    %1262 = vmatprep.subr.mxu0 0.0
    %1263 = vmatpush1.msra.mxu0 0.0
    %1264 = vmatprep.subr.mxu0 0.0
    %1265 = vmatpush1.msra.mxu0 0.0
    %1266 = vmatprep.subr.mxu0 0.0
    %1267 = vmatpush1.msra.mxu0 0.0
    %1268 = vmatprep.subr.mxu0 0.0
    %1269 = vmatpush1.msra.mxu0 0.0
    %1270 = vmatprep.subr.mxu0 0.0
    %1271 = vmatpush1.msra.mxu0 0.0
    %1272 = vmatprep.subr.mxu0 0.0
    %1273 = vmatpush1.msra.mxu0 0.0
    %1274 = vmatprep.subr.mxu0 0.0
    %1275 = vmatpush1.msra.mxu0 0.0
    %1276 = vmatprep.subr.mxu0 0.0
    %1277 = vmatpush1.msra.mxu0 0.0
    %1278 = vmatprep.subr.mxu0 0.0
    %1279 = vmatpush1.msra.mxu0 0.0
    %1280 = vmatprep.subr.mxu0 0.0
    %1281 = vmatpush1.msra.mxu0 0.0
    %1282 = vmatprep.subr.mxu0 0.0
    %1283 = vmatpush1.msra.mxu0 0.0
    %1284 = vmatprep.subr.mxu0 0.0
    %1285 = vmatpush1.msra.mxu0 0.0
    %1286 = vmatprep.subr.mxu0 0.0
    %1287 = vmatpush1.msra.mxu0 0.0
    %1288 = vmatprep.subr.mxu0 0.0
    %1289 = vmatpush1.msra.mxu0 0.0
    %1290 = vmatprep.subr.mxu0 0.0
    %1291 = vmatpush1.msra.mxu0 0.0
    %1292 = vmatprep.subr.mxu0 0.0
    %1293 = vmatpush1.msra.mxu0 0.0
    %1294 = vmatprep.subr.mxu0 0.0
    %1295 = vmatpush1.msra.mxu0 0.0
    %1296 = vmatprep.subr.mxu0 0.0
    %1297 = vmatpush1.msra.mxu0 0.0
    %1298 = vmatprep.subr.mxu0 0.0
    %1299 = vmatpush1.msra.mxu0 0.0
    %1300 = vmatprep.subr.mxu0 0.0
    %1301 = vmatpush1.msra.mxu0 0.0
    %1302 = vmatprep.subr.mxu0 0.0
    %1303 = vmatpush1.msra.mxu0 0.0
    %1304 = vmatprep.mubr.f32.mxu0 0.0
    %1305 = vmatmul.mubr.f32.gmra.mrb[0].mxu0 %v1238
    %v1306 = vpop.f32.mrb[0].mxu0
    %v1307 = vadd.f32 0.0, %v1306
    %v1308 = vpop.f32.mrb[0].mxu0
    %1309 = vdwg.mxu0
    %v1310 = vadd.f32 %v1224, %v1307
    %v1311 = vtanh.pop %v1310
    %v1314 = vunpack.c.l.s4 1966171168
    %v1315 = vunpack.c.0.s8 %v1314
    %v1316 = vlaneseq
    %v1317 = vshrl.u32 %v1316, 7
    %v1318 = vsub.s32 %v1315, %v1317
    %v1319 = vrot.slane %v1311, %v1318
    %v1320 = vcombine.high %v1319, %v1319
    %v1322 = vunpack.c.l.s4 1966171168
    %v1323 = vunpack.c.0.s8 %v1322
    %v1324 = vlaneseq
    %v1325 = vshrl.u32 %v1324, 7
    %v1326 = vsub.s32 %v1323, %v1325
    %v1327 = vrot.slane %v1319, %v1326
    %v1329 = vunpack.c.l.s4 1966171168
    %v1330 = vunpack.c.0.s8 %v1329
    %v1331 = vlaneseq
    %v1332 = vshrl.u32 %v1331, 7
    %v1333 = vsub.s32 %v1330, %v1332
    %v1334 = vrot.slane %v1320, %v1333
    %1337 = vst.msk [vmem:[#allocation3] sm:$0x1] %vm263, %v1327
    %1338 = vst.msk [vmem:[#allocation3 + $0x8] sm:$0x1] %vm263, %v1334
    %v1339 = vsel %vm71, %v1311, 0
    %1341 = vmatprep.subr.mxu0 0.0
    %1342 = vmatpush1.msra.mxu0 %v1232
    %1343 = vmatprep.subr.mxu0 0.0
    %1344 = vmatpush1.msra.mxu0 %v1233
    %1345 = vmatprep.subr.mxu0 0.0
    %1346 = vmatpush1.msra.mxu0 %v1234
    %1347 = vmatprep.subr.mxu0 0.0
    %1348 = vmatpush1.msra.mxu0 %v1235
    %1349 = vmatprep.subr.mxu0 0.0
    %1350 = vmatpush1.msra.mxu0 0.0
    %1351 = vmatprep.subr.mxu0 0.0
    %1352 = vmatpush1.msra.mxu0 0.0
    %1353 = vmatprep.subr.mxu0 0.0
    %1354 = vmatpush1.msra.mxu0 0.0
    %1355 = vmatprep.subr.mxu0 0.0
    %1356 = vmatpush1.msra.mxu0 0.0
    %1357 = vmatprep.subr.mxu0 0.0
    %1358 = vmatpush1.msra.mxu0 0.0
    %1359 = vmatprep.subr.mxu0 0.0
    %1360 = vmatpush1.msra.mxu0 0.0
    %1361 = vmatprep.subr.mxu0 0.0
    %1362 = vmatpush1.msra.mxu0 0.0
    %1363 = vmatprep.subr.mxu0 0.0
    %1364 = vmatpush1.msra.mxu0 0.0
    %1365 = vmatprep.subr.mxu0 0.0
    %1366 = vmatpush1.msra.mxu0 0.0
    %1367 = vmatprep.subr.mxu0 0.0
    %1368 = vmatpush1.msra.mxu0 0.0
    %1369 = vmatprep.subr.mxu0 0.0
    %1370 = vmatpush1.msra.mxu0 0.0
    %1371 = vmatprep.subr.mxu0 0.0
    %1372 = vmatpush1.msra.mxu0 0.0
    %1373 = vmatprep.subr.mxu0 0.0
    %1374 = vmatpush1.msra.mxu0 0.0
    %1375 = vmatprep.subr.mxu0 0.0
    %1376 = vmatpush1.msra.mxu0 0.0
    %1377 = vmatprep.subr.mxu0 0.0
    %1378 = vmatpush1.msra.mxu0 0.0
    %1379 = vmatprep.subr.mxu0 0.0
    %1380 = vmatpush1.msra.mxu0 0.0
    %1381 = vmatprep.subr.mxu0 0.0
    %1382 = vmatpush1.msra.mxu0 0.0
    %1383 = vmatprep.subr.mxu0 0.0
    %1384 = vmatpush1.msra.mxu0 0.0
    %1385 = vmatprep.subr.mxu0 0.0
    %1386 = vmatpush1.msra.mxu0 0.0
    %1387 = vmatprep.subr.mxu0 0.0
    %1388 = vmatpush1.msra.mxu0 0.0
    %1389 = vmatprep.subr.mxu0 0.0
    %1390 = vmatpush1.msra.mxu0 0.0
    %1391 = vmatprep.subr.mxu0 0.0
    %1392 = vmatpush1.msra.mxu0 0.0
    %1393 = vmatprep.subr.mxu0 0.0
    %1394 = vmatpush1.msra.mxu0 0.0
    %1395 = vmatprep.subr.mxu0 0.0
    %1396 = vmatpush1.msra.mxu0 0.0
    %1397 = vmatprep.subr.mxu0 0.0
    %1398 = vmatpush1.msra.mxu0 0.0
    %1399 = vmatprep.subr.mxu0 0.0
    %1400 = vmatpush1.msra.mxu0 0.0
    %1401 = vmatprep.subr.mxu0 0.0
    %1402 = vmatpush1.msra.mxu0 0.0
    %1403 = vmatprep.subr.mxu0 0.0
    %1404 = vmatpush1.msra.mxu0 0.0
    %1405 = vmatprep.mubr.f32.mxu0 0.0
    %1406 = vmatmul.mubr.f32.gmra.mrb[0].mxu0 %v1339
    %v1407 = vpop.f32.mrb[0].mxu0
    %v1408 = vadd.f32 0.0, %v1407
    %v1409 = vpop.f32.mrb[0].mxu0
    %1410 = vdwg.mxu0
    %v1412 = vrot.slane %v1408, 6
    %v1414 = vadd.f32 %v1224, %v1412
    %v1415 = vtanh.pop %v1414
    %v1418 = vunpack.c.l.s4 1966171168
    %v1419 = vunpack.c.0.s8 %v1418
    %v1420 = vlaneseq
    %v1421 = vshrl.u32 %v1420, 7
    %v1422 = vsub.s32 %v1419, %v1421
    %v1423 = vrot.slane %v1415, %v1422
    %v1424 = vcombine.high %v1423, %v1423
    %v1426 = vunpack.c.l.s4 1966171168
    %v1427 = vunpack.c.0.s8 %v1426
    %v1428 = vlaneseq
    %v1429 = vshrl.u32 %v1428, 7
    %v1430 = vsub.s32 %v1427, %v1429
    %v1431 = vrot.slane %v1423, %v1430
    %v1433 = vunpack.c.l.s4 1966171168
    %v1434 = vunpack.c.0.s8 %v1433
    %v1435 = vlaneseq
    %v1436 = vshrl.u32 %v1435, 7
    %v1437 = vsub.s32 %v1434, %v1436
    %v1438 = vrot.slane %v1424, %v1437
    %v1439 = vcombine.high %v1431, %v1431
    %v1440 = vcombine.high %v1438, %v1438
    %1443 = vst.msk [vmem:[#allocation3 + $0x1] sm:$0x1] %vm263, %v1439
    %1444 = vst.msk [vmem:[#allocation3 + $0x9] sm:$0x1] %vm263, %v1440
    %v1445 = vrot.slane %v1415, 2
    %v1446 = vsel %vm71, %v1445, 0
    %1448 = vmatprep.subr.mxu0 0.0
    %1449 = vmatpush1.msra.mxu0 %v1232
    %1450 = vmatprep.subr.mxu0 0.0
    %1451 = vmatpush1.msra.mxu0 %v1233
    %1452 = vmatprep.subr.mxu0 0.0
    %1453 = vmatpush1.msra.mxu0 %v1234
    %1454 = vmatprep.subr.mxu0 0.0
    %1455 = vmatpush1.msra.mxu0 %v1235
    %1456 = vmatprep.subr.mxu0 0.0
    %1457 = vmatpush1.msra.mxu0 0.0
    %1458 = vmatprep.subr.mxu0 0.0
    %1459 = vmatpush1.msra.mxu0 0.0
    %1460 = vmatprep.subr.mxu0 0.0
    %1461 = vmatpush1.msra.mxu0 0.0
    %1462 = vmatprep.subr.mxu0 0.0
    %1463 = vmatpush1.msra.mxu0 0.0
    %1464 = vmatprep.subr.mxu0 0.0
    %1465 = vmatpush1.msra.mxu0 0.0
    %1466 = vmatprep.subr.mxu0 0.0
    %1467 = vmatpush1.msra.mxu0 0.0
    %1468 = vmatprep.subr.mxu0 0.0
    %1469 = vmatpush1.msra.mxu0 0.0
    %1470 = vmatprep.subr.mxu0 0.0
    %1471 = vmatpush1.msra.mxu0 0.0
    %1472 = vmatprep.subr.mxu0 0.0
    %1473 = vmatpush1.msra.mxu0 0.0
    %1474 = vmatprep.subr.mxu0 0.0
    %1475 = vmatpush1.msra.mxu0 0.0
    %1476 = vmatprep.subr.mxu0 0.0
    %1477 = vmatpush1.msra.mxu0 0.0
    %1478 = vmatprep.subr.mxu0 0.0
    %1479 = vmatpush1.msra.mxu0 0.0
    %1480 = vmatprep.subr.mxu0 0.0
    %1481 = vmatpush1.msra.mxu0 0.0
    %1482 = vmatprep.subr.mxu0 0.0
    %1483 = vmatpush1.msra.mxu0 0.0
    %1484 = vmatprep.subr.mxu0 0.0
    %1485 = vmatpush1.msra.mxu0 0.0
    %1486 = vmatprep.subr.mxu0 0.0
    %1487 = vmatpush1.msra.mxu0 0.0
    %1488 = vmatprep.subr.mxu0 0.0
    %1489 = vmatpush1.msra.mxu0 0.0
    %1490 = vmatprep.subr.mxu0 0.0
    %1491 = vmatpush1.msra.mxu0 0.0
    %1492 = vmatprep.subr.mxu0 0.0
    %1493 = vmatpush1.msra.mxu0 0.0
    %1494 = vmatprep.subr.mxu0 0.0
    %1495 = vmatpush1.msra.mxu0 0.0
    %1496 = vmatprep.subr.mxu0 0.0
    %1497 = vmatpush1.msra.mxu0 0.0
    %1498 = vmatprep.subr.mxu0 0.0
    %1499 = vmatpush1.msra.mxu0 0.0
    %1500 = vmatprep.subr.mxu0 0.0
    %1501 = vmatpush1.msra.mxu0 0.0
    %1502 = vmatprep.subr.mxu0 0.0
    %1503 = vmatpush1.msra.mxu0 0.0
    %1504 = vmatprep.subr.mxu0 0.0
    %1505 = vmatpush1.msra.mxu0 0.0
    %1506 = vmatprep.subr.mxu0 0.0
    %1507 = vmatpush1.msra.mxu0 0.0
    %1508 = vmatprep.subr.mxu0 0.0
    %1509 = vmatpush1.msra.mxu0 0.0
    %1510 = vmatprep.subr.mxu0 0.0
    %1511 = vmatpush1.msra.mxu0 0.0
    %1512 = vmatprep.mubr.f32.mxu0 0.0
    %1513 = vmatmul.mubr.f32.gmra.mrb[0].mxu0 %v1446
    %v1514 = vpop.f32.mrb[0].mxu0
    %v1515 = vadd.f32 0.0, %v1514
    %v1516 = vpop.f32.mrb[0].mxu0
    %1517 = vdwg.mxu0
    %v1519 = vrot.slane %v1515, 4
    %v1521 = vadd.f32 %v1224, %v1519
    %v1522 = vtanh.pop %v1521
    %v1524 = vcombine.high %v1522, %v1522
    %v1526 = vunpack.c.l.s4 1966171168
    %v1527 = vunpack.c.0.s8 %v1526
    %v1528 = vlaneseq
    %v1529 = vshrl.u32 %v1528, 7
    %v1530 = vsub.s32 %v1527, %v1529
    %v1531 = vrot.slane %v1524, %v1530
    %v1532 = vcombine.high %v1531, %v1531
    %v1534 = vunpack.c.l.s4 1966171168
    %v1535 = vunpack.c.0.s8 %v1534
    %v1536 = vlaneseq
    %v1537 = vshrl.u32 %v1536, 7
    %v1538 = vsub.s32 %v1535, %v1537
    %v1539 = vrot.slane %v1531, %v1538
    %v1541 = vunpack.c.l.s4 1966171168
    %v1542 = vunpack.c.0.s8 %v1541
    %v1543 = vlaneseq
    %v1544 = vshrl.u32 %v1543, 7
    %v1545 = vsub.s32 %v1542, %v1544
    %v1546 = vrot.slane %v1532, %v1545
    %1549 = vst.msk [vmem:[#allocation3 + $0x2] sm:$0x1] %vm263, %v1539
    %1550 = vst.msk [vmem:[#allocation3 + $0xa] sm:$0x1] %vm263, %v1546
    %v1551 = vrot.slane %v1522, 4
    %v1552 = vsel %vm71, %v1551, 0
    %1554 = vmatprep.subr.mxu0 0.0
    %1555 = vmatpush1.msra.mxu0 %v1232
    %1556 = vmatprep.subr.mxu0 0.0
    %1557 = vmatpush1.msra.mxu0 %v1233
    %1558 = vmatprep.subr.mxu0 0.0
    %1559 = vmatpush1.msra.mxu0 %v1234
    %1560 = vmatprep.subr.mxu0 0.0
    %1561 = vmatpush1.msra.mxu0 %v1235
    %1562 = vmatprep.subr.mxu0 0.0
    %1563 = vmatpush1.msra.mxu0 0.0
    %1564 = vmatprep.subr.mxu0 0.0
    %1565 = vmatpush1.msra.mxu0 0.0
    %1566 = vmatprep.subr.mxu0 0.0
    %1567 = vmatpush1.msra.mxu0 0.0
    %1568 = vmatprep.subr.mxu0 0.0
    %1569 = vmatpush1.msra.mxu0 0.0
    %1570 = vmatprep.subr.mxu0 0.0
    %1571 = vmatpush1.msra.mxu0 0.0
    %1572 = vmatprep.subr.mxu0 0.0
    %1573 = vmatpush1.msra.mxu0 0.0
    %1574 = vmatprep.subr.mxu0 0.0
    %1575 = vmatpush1.msra.mxu0 0.0
    %1576 = vmatprep.subr.mxu0 0.0
    %1577 = vmatpush1.msra.mxu0 0.0
    %1578 = vmatprep.subr.mxu0 0.0
    %1579 = vmatpush1.msra.mxu0 0.0
    %1580 = vmatprep.subr.mxu0 0.0
    %1581 = vmatpush1.msra.mxu0 0.0
    %1582 = vmatprep.subr.mxu0 0.0
    %1583 = vmatpush1.msra.mxu0 0.0
    %1584 = vmatprep.subr.mxu0 0.0
    %1585 = vmatpush1.msra.mxu0 0.0
    %1586 = vmatprep.subr.mxu0 0.0
    %1587 = vmatpush1.msra.mxu0 0.0
    %1588 = vmatprep.subr.mxu0 0.0
    %1589 = vmatpush1.msra.mxu0 0.0
    %1590 = vmatprep.subr.mxu0 0.0
    %1591 = vmatpush1.msra.mxu0 0.0
    %1592 = vmatprep.subr.mxu0 0.0
    %1593 = vmatpush1.msra.mxu0 0.0
    %1594 = vmatprep.subr.mxu0 0.0
    %1595 = vmatpush1.msra.mxu0 0.0
    %1596 = vmatprep.subr.mxu0 0.0
    %1597 = vmatpush1.msra.mxu0 0.0
    %1598 = vmatprep.subr.mxu0 0.0
    %1599 = vmatpush1.msra.mxu0 0.0
    %1600 = vmatprep.subr.mxu0 0.0
    %1601 = vmatpush1.msra.mxu0 0.0
    %1602 = vmatprep.subr.mxu0 0.0
    %1603 = vmatpush1.msra.mxu0 0.0
    %1604 = vmatprep.subr.mxu0 0.0
    %1605 = vmatpush1.msra.mxu0 0.0
    %1606 = vmatprep.subr.mxu0 0.0
    %1607 = vmatpush1.msra.mxu0 0.0
    %1608 = vmatprep.subr.mxu0 0.0
    %1609 = vmatpush1.msra.mxu0 0.0
    %1610 = vmatprep.subr.mxu0 0.0
    %1611 = vmatpush1.msra.mxu0 0.0
    %1612 = vmatprep.subr.mxu0 0.0
    %1613 = vmatpush1.msra.mxu0 0.0
    %1614 = vmatprep.subr.mxu0 0.0
    %1615 = vmatpush1.msra.mxu0 0.0
    %1616 = vmatprep.subr.mxu0 0.0
    %1617 = vmatpush1.msra.mxu0 0.0
    %1618 = vmatprep.mubr.f32.mxu0 0.0
    %1619 = vmatmul.mubr.f32.gmra.mrb[0].mxu0 %v1552
    %v1620 = vpop.f32.mrb[0].mxu0
    %v1621 = vadd.f32 0.0, %v1620
    %v1622 = vpop.f32.mrb[0].mxu0
    %1623 = vdwg.mxu0
    %v1625 = vrot.slane %v1621, 2
    %v1627 = vadd.f32 %v1224, %v1625
    %v1628 = vtanh.pop %v1627
    %v1630 = vcombine.high %v1628, %v1628
    %v1632 = vunpack.c.l.s4 1966171168
    %v1633 = vunpack.c.0.s8 %v1632
    %v1634 = vlaneseq
    %v1635 = vshrl.u32 %v1634, 7
    %v1636 = vsub.s32 %v1633, %v1635
    %v1637 = vrot.slane %v1630, %v1636
    %v1638 = vcombine.high %v1637, %v1637
    %v1640 = vunpack.c.l.s4 1966171168
    %v1641 = vunpack.c.0.s8 %v1640
    %v1642 = vlaneseq
    %v1643 = vshrl.u32 %v1642, 7
    %v1644 = vsub.s32 %v1641, %v1643
    %v1645 = vrot.slane %v1637, %v1644
    %v1647 = vunpack.c.l.s4 1966171168
    %v1648 = vunpack.c.0.s8 %v1647
    %v1649 = vlaneseq
    %v1650 = vshrl.u32 %v1649, 7
    %v1651 = vsub.s32 %v1648, %v1650
    %v1652 = vrot.slane %v1638, %v1651
    %v1653 = vcombine.high %v1645, %v1645
    %v1654 = vcombine.high %v1652, %v1652
    %1657 = vst.msk [vmem:[#allocation3 + $0x3] sm:$0x1] %vm263, %v1653
    %1658 = vst.msk [vmem:[#allocation3 + $0xb] sm:$0x1] %vm263, %v1654
    %v1659 = vrot.slane %v1628, 6
    %v1660 = vsel %vm71, %v1659, 0
    %1662 = vmatprep.subr.mxu0 0.0
    %1663 = vmatpush1.msra.mxu0 %v1232
    %1664 = vmatprep.subr.mxu0 0.0
    %1665 = vmatpush1.msra.mxu0 %v1233
    %1666 = vmatprep.subr.mxu0 0.0
    %1667 = vmatpush1.msra.mxu0 %v1234
    %1668 = vmatprep.subr.mxu0 0.0
    %1669 = vmatpush1.msra.mxu0 %v1235
    %1670 = vmatprep.subr.mxu0 0.0
    %1671 = vmatpush1.msra.mxu0 0.0
    %1672 = vmatprep.subr.mxu0 0.0
    %1673 = vmatpush1.msra.mxu0 0.0
    %1674 = vmatprep.subr.mxu0 0.0
    %1675 = vmatpush1.msra.mxu0 0.0
    %1676 = vmatprep.subr.mxu0 0.0
    %1677 = vmatpush1.msra.mxu0 0.0
    %1678 = vmatprep.subr.mxu0 0.0
    %1679 = vmatpush1.msra.mxu0 0.0
    %1680 = vmatprep.subr.mxu0 0.0
    %1681 = vmatpush1.msra.mxu0 0.0
    %1682 = vmatprep.subr.mxu0 0.0
    %1683 = vmatpush1.msra.mxu0 0.0
    %1684 = vmatprep.subr.mxu0 0.0
    %1685 = vmatpush1.msra.mxu0 0.0
    %1686 = vmatprep.subr.mxu0 0.0
    %1687 = vmatpush1.msra.mxu0 0.0
    %1688 = vmatprep.subr.mxu0 0.0
    %1689 = vmatpush1.msra.mxu0 0.0
    %1690 = vmatprep.subr.mxu0 0.0
    %1691 = vmatpush1.msra.mxu0 0.0
    %1692 = vmatprep.subr.mxu0 0.0
    %1693 = vmatpush1.msra.mxu0 0.0
    %1694 = vmatprep.subr.mxu0 0.0
    %1695 = vmatpush1.msra.mxu0 0.0
    %1696 = vmatprep.subr.mxu0 0.0
    %1697 = vmatpush1.msra.mxu0 0.0
    %1698 = vmatprep.subr.mxu0 0.0
    %1699 = vmatpush1.msra.mxu0 0.0
    %1700 = vmatprep.subr.mxu0 0.0
    %1701 = vmatpush1.msra.mxu0 0.0
    %1702 = vmatprep.subr.mxu0 0.0
    %1703 = vmatpush1.msra.mxu0 0.0
    %1704 = vmatprep.subr.mxu0 0.0
    %1705 = vmatpush1.msra.mxu0 0.0
    %1706 = vmatprep.subr.mxu0 0.0
    %1707 = vmatpush1.msra.mxu0 0.0
    %1708 = vmatprep.subr.mxu0 0.0
    %1709 = vmatpush1.msra.mxu0 0.0
    %1710 = vmatprep.subr.mxu0 0.0
    %1711 = vmatpush1.msra.mxu0 0.0
    %1712 = vmatprep.subr.mxu0 0.0
    %1713 = vmatpush1.msra.mxu0 0.0
    %1714 = vmatprep.subr.mxu0 0.0
    %1715 = vmatpush1.msra.mxu0 0.0
    %1716 = vmatprep.subr.mxu0 0.0
    %1717 = vmatpush1.msra.mxu0 0.0
    %1718 = vmatprep.subr.mxu0 0.0
    %1719 = vmatpush1.msra.mxu0 0.0
    %1720 = vmatprep.subr.mxu0 0.0
    %1721 = vmatpush1.msra.mxu0 0.0
    %1722 = vmatprep.subr.mxu0 0.0
    %1723 = vmatpush1.msra.mxu0 0.0
    %1724 = vmatprep.subr.mxu0 0.0
    %1725 = vmatpush1.msra.mxu0 0.0
    %1726 = vmatprep.mubr.f32.mxu0 0.0
    %1727 = vmatmul.mubr.f32.gmra.mrb[0].mxu0 %v1660
    %v1728 = vpop.f32.mrb[0].mxu0
    %v1729 = vadd.f32 0.0, %v1728
    %v1730 = vpop.f32.mrb[0].mxu0
    %1731 = vdwg.mxu0
    %v1732 = vadd.f32 %v1229, %v1729
    %v1733 = vtanh.pop %v1732
    %v1736 = vunpack.c.l.s4 1966171168
    %v1737 = vunpack.c.0.s8 %v1736
    %v1738 = vlaneseq
    %v1739 = vshrl.u32 %v1738, 7
    %v1740 = vsub.s32 %v1737, %v1739
    %v1741 = vrot.slane %v1733, %v1740
    %v1742 = vcombine.high %v1741, %v1741
    %v1744 = vunpack.c.l.s4 1966171168
    %v1745 = vunpack.c.0.s8 %v1744
    %v1746 = vlaneseq
    %v1747 = vshrl.u32 %v1746, 7
    %v1748 = vsub.s32 %v1745, %v1747
    %v1749 = vrot.slane %v1741, %v1748
    %v1751 = vunpack.c.l.s4 1966171168
    %v1752 = vunpack.c.0.s8 %v1751
    %v1753 = vlaneseq
    %v1754 = vshrl.u32 %v1753, 7
    %v1755 = vsub.s32 %v1752, %v1754
    %v1756 = vrot.slane %v1742, %v1755
    %1759 = vst.msk [vmem:[#allocation3 + $0x4] sm:$0x1] %vm263, %v1749
    %1760 = vst.msk [vmem:[#allocation3 + $0xc] sm:$0x1] %vm263, %v1756
    %v1761 = vsel %vm71, %v1733, 0
    %1763 = vmatprep.subr.mxu0 0.0
    %1764 = vmatpush1.msra.mxu0 %v1232
    %1765 = vmatprep.subr.mxu0 0.0
    %1766 = vmatpush1.msra.mxu0 %v1233
    %1767 = vmatprep.subr.mxu0 0.0
    %1768 = vmatpush1.msra.mxu0 %v1234
    %1769 = vmatprep.subr.mxu0 0.0
    %1770 = vmatpush1.msra.mxu0 %v1235
    %1771 = vmatprep.subr.mxu0 0.0
    %1772 = vmatpush1.msra.mxu0 0.0
    %1773 = vmatprep.subr.mxu0 0.0
    %1774 = vmatpush1.msra.mxu0 0.0
    %1775 = vmatprep.subr.mxu0 0.0
    %1776 = vmatpush1.msra.mxu0 0.0
    %1777 = vmatprep.subr.mxu0 0.0
    %1778 = vmatpush1.msra.mxu0 0.0
    %1779 = vmatprep.subr.mxu0 0.0
    %1780 = vmatpush1.msra.mxu0 0.0
    %1781 = vmatprep.subr.mxu0 0.0
    %1782 = vmatpush1.msra.mxu0 0.0
    %1783 = vmatprep.subr.mxu0 0.0
    %1784 = vmatpush1.msra.mxu0 0.0
    %1785 = vmatprep.subr.mxu0 0.0
    %1786 = vmatpush1.msra.mxu0 0.0
    %1787 = vmatprep.subr.mxu0 0.0
    %1788 = vmatpush1.msra.mxu0 0.0
    %1789 = vmatprep.subr.mxu0 0.0
    %1790 = vmatpush1.msra.mxu0 0.0
    %1791 = vmatprep.subr.mxu0 0.0
    %1792 = vmatpush1.msra.mxu0 0.0
    %1793 = vmatprep.subr.mxu0 0.0
    %1794 = vmatpush1.msra.mxu0 0.0
    %1795 = vmatprep.subr.mxu0 0.0
    %1796 = vmatpush1.msra.mxu0 0.0
    %1797 = vmatprep.subr.mxu0 0.0
    %1798 = vmatpush1.msra.mxu0 0.0
    %1799 = vmatprep.subr.mxu0 0.0
    %1800 = vmatpush1.msra.mxu0 0.0
    %1801 = vmatprep.subr.mxu0 0.0
    %1802 = vmatpush1.msra.mxu0 0.0
    %1803 = vmatprep.subr.mxu0 0.0
    %1804 = vmatpush1.msra.mxu0 0.0
    %1805 = vmatprep.subr.mxu0 0.0
    %1806 = vmatpush1.msra.mxu0 0.0
    %1807 = vmatprep.subr.mxu0 0.0
    %1808 = vmatpush1.msra.mxu0 0.0
    %1809 = vmatprep.subr.mxu0 0.0
    %1810 = vmatpush1.msra.mxu0 0.0
    %1811 = vmatprep.subr.mxu0 0.0
    %1812 = vmatpush1.msra.mxu0 0.0
    %1813 = vmatprep.subr.mxu0 0.0
    %1814 = vmatpush1.msra.mxu0 0.0
    %1815 = vmatprep.subr.mxu0 0.0
    %1816 = vmatpush1.msra.mxu0 0.0
    %1817 = vmatprep.subr.mxu0 0.0
    %1818 = vmatpush1.msra.mxu0 0.0
    %1819 = vmatprep.subr.mxu0 0.0
    %1820 = vmatpush1.msra.mxu0 0.0
    %1821 = vmatprep.subr.mxu0 0.0
    %1822 = vmatpush1.msra.mxu0 0.0
    %1823 = vmatprep.subr.mxu0 0.0
    %1824 = vmatpush1.msra.mxu0 0.0
    %1825 = vmatprep.subr.mxu0 0.0
    %1826 = vmatpush1.msra.mxu0 0.0
    %1827 = vmatprep.mubr.f32.mxu0 0.0
    %1828 = vmatmul.mubr.f32.gmra.mrb[0].mxu0 %v1761
    %v1829 = vpop.f32.mrb[0].mxu0
    %v1830 = vadd.f32 0.0, %v1829
    %v1831 = vpop.f32.mrb[0].mxu0
    %1832 = vdwg.mxu0
    %v1834 = vrot.slane %v1830, 6
    %v1836 = vadd.f32 %v1229, %v1834
    %v1837 = vtanh.pop %v1836
    %v1840 = vunpack.c.l.s4 1966171168
    %v1841 = vunpack.c.0.s8 %v1840
    %v1842 = vlaneseq
    %v1843 = vshrl.u32 %v1842, 7
    %v1844 = vsub.s32 %v1841, %v1843
    %v1845 = vrot.slane %v1837, %v1844
    %v1846 = vcombine.high %v1845, %v1845
    %v1848 = vunpack.c.l.s4 1966171168
    %v1849 = vunpack.c.0.s8 %v1848
    %v1850 = vlaneseq
    %v1851 = vshrl.u32 %v1850, 7
    %v1852 = vsub.s32 %v1849, %v1851
    %v1853 = vrot.slane %v1845, %v1852
    %v1855 = vunpack.c.l.s4 1966171168
    %v1856 = vunpack.c.0.s8 %v1855
    %v1857 = vlaneseq
    %v1858 = vshrl.u32 %v1857, 7
    %v1859 = vsub.s32 %v1856, %v1858
    %v1860 = vrot.slane %v1846, %v1859
    %v1861 = vcombine.high %v1853, %v1853
    %v1862 = vcombine.high %v1860, %v1860
    %1865 = vst.msk [vmem:[#allocation3 + $0x5] sm:$0x1] %vm263, %v1861
    %1866 = vst.msk [vmem:[#allocation3 + $0xd] sm:$0x1] %vm263, %v1862
    %v1867 = vrot.slane %v1837, 2
    %v1868 = vsel %vm71, %v1867, 0
    %1870 = vmatprep.subr.mxu0 0.0
    %1871 = vmatpush1.msra.mxu0 %v1232
    %1872 = vmatprep.subr.mxu0 0.0
    %1873 = vmatpush1.msra.mxu0 %v1233
    %1874 = vmatprep.subr.mxu0 0.0
    %1875 = vmatpush1.msra.mxu0 %v1234
    %1876 = vmatprep.subr.mxu0 0.0
    %1877 = vmatpush1.msra.mxu0 %v1235
    %1878 = vmatprep.subr.mxu0 0.0
    %1879 = vmatpush1.msra.mxu0 0.0
    %1880 = vmatprep.subr.mxu0 0.0
    %1881 = vmatpush1.msra.mxu0 0.0
    %1882 = vmatprep.subr.mxu0 0.0
    %1883 = vmatpush1.msra.mxu0 0.0
    %1884 = vmatprep.subr.mxu0 0.0
    %1885 = vmatpush1.msra.mxu0 0.0
    %1886 = vmatprep.subr.mxu0 0.0
    %1887 = vmatpush1.msra.mxu0 0.0
    %1888 = vmatprep.subr.mxu0 0.0
    %1889 = vmatpush1.msra.mxu0 0.0
    %1890 = vmatprep.subr.mxu0 0.0
    %1891 = vmatpush1.msra.mxu0 0.0
    %1892 = vmatprep.subr.mxu0 0.0
    %1893 = vmatpush1.msra.mxu0 0.0
    %1894 = vmatprep.subr.mxu0 0.0
    %1895 = vmatpush1.msra.mxu0 0.0
    %1896 = vmatprep.subr.mxu0 0.0
    %1897 = vmatpush1.msra.mxu0 0.0
    %1898 = vmatprep.subr.mxu0 0.0
    %1899 = vmatpush1.msra.mxu0 0.0
    %1900 = vmatprep.subr.mxu0 0.0
    %1901 = vmatpush1.msra.mxu0 0.0
    %1902 = vmatprep.subr.mxu0 0.0
    %1903 = vmatpush1.msra.mxu0 0.0
    %1904 = vmatprep.subr.mxu0 0.0
    %1905 = vmatpush1.msra.mxu0 0.0
    %1906 = vmatprep.subr.mxu0 0.0
    %1907 = vmatpush1.msra.mxu0 0.0
    %1908 = vmatprep.subr.mxu0 0.0
    %1909 = vmatpush1.msra.mxu0 0.0
    %1910 = vmatprep.subr.mxu0 0.0
    %1911 = vmatpush1.msra.mxu0 0.0
    %1912 = vmatprep.subr.mxu0 0.0
    %1913 = vmatpush1.msra.mxu0 0.0
    %1914 = vmatprep.subr.mxu0 0.0
    %1915 = vmatpush1.msra.mxu0 0.0
    %1916 = vmatprep.subr.mxu0 0.0
    %1917 = vmatpush1.msra.mxu0 0.0
    %1918 = vmatprep.subr.mxu0 0.0
    %1919 = vmatpush1.msra.mxu0 0.0
    %1920 = vmatprep.subr.mxu0 0.0
    %1921 = vmatpush1.msra.mxu0 0.0
    %1922 = vmatprep.subr.mxu0 0.0
    %1923 = vmatpush1.msra.mxu0 0.0
    %1924 = vmatprep.subr.mxu0 0.0
    %1925 = vmatpush1.msra.mxu0 0.0
    %1926 = vmatprep.subr.mxu0 0.0
    %1927 = vmatpush1.msra.mxu0 0.0
    %1928 = vmatprep.subr.mxu0 0.0
    %1929 = vmatpush1.msra.mxu0 0.0
    %1930 = vmatprep.subr.mxu0 0.0
    %1931 = vmatpush1.msra.mxu0 0.0
    %1932 = vmatprep.subr.mxu0 0.0
    %1933 = vmatpush1.msra.mxu0 0.0
    %1934 = vmatprep.mubr.f32.mxu0 0.0
    %1935 = vmatmul.mubr.f32.gmra.mrb[0].mxu0 %v1868
    %v1936 = vpop.f32.mrb[0].mxu0
    %v1937 = vadd.f32 0.0, %v1936
    %v1938 = vpop.f32.mrb[0].mxu0
    %1939 = vdwg.mxu0
    %v1941 = vrot.slane %v1937, 4
    %v1943 = vadd.f32 %v1229, %v1941
    %v1944 = vtanh.pop %v1943
    %v1946 = vcombine.high %v1944, %v1944
    %v1948 = vunpack.c.l.s4 1966171168
    %v1949 = vunpack.c.0.s8 %v1948
    %v1950 = vlaneseq
    %v1951 = vshrl.u32 %v1950, 7
    %v1952 = vsub.s32 %v1949, %v1951
    %v1953 = vrot.slane %v1946, %v1952
    %v1954 = vcombine.high %v1953, %v1953
    %v1956 = vunpack.c.l.s4 1966171168
    %v1957 = vunpack.c.0.s8 %v1956
    %v1958 = vlaneseq
    %v1959 = vshrl.u32 %v1958, 7
    %v1960 = vsub.s32 %v1957, %v1959
    %v1961 = vrot.slane %v1953, %v1960
    %v1963 = vunpack.c.l.s4 1966171168
    %v1964 = vunpack.c.0.s8 %v1963
    %v1965 = vlaneseq
    %v1966 = vshrl.u32 %v1965, 7
    %v1967 = vsub.s32 %v1964, %v1966
    %v1968 = vrot.slane %v1954, %v1967
    %1971 = vst.msk [vmem:[#allocation3 + $0x6] sm:$0x1] %vm263, %v1961
    %1972 = vst.msk [vmem:[#allocation3 + $0xe] sm:$0x1] %vm263, %v1968
    %v1973 = vrot.slane %v1944, 4
    %v1974 = vsel %vm71, %v1973, 0
    %1976 = vmatprep.subr.mxu0 0.0
    %1977 = vmatpush1.msra.mxu0 %v1232
    %1978 = vmatprep.subr.mxu0 0.0
    %1979 = vmatpush1.msra.mxu0 %v1233
    %1980 = vmatprep.subr.mxu0 0.0
    %1981 = vmatpush1.msra.mxu0 %v1234
    %1982 = vmatprep.subr.mxu0 0.0
    %1983 = vmatpush1.msra.mxu0 %v1235
    %1984 = vmatprep.subr.mxu0 0.0
    %1985 = vmatpush1.msra.mxu0 0.0
    %1986 = vmatprep.subr.mxu0 0.0
    %1987 = vmatpush1.msra.mxu0 0.0
    %1988 = vmatprep.subr.mxu0 0.0
    %1989 = vmatpush1.msra.mxu0 0.0
    %1990 = vmatprep.subr.mxu0 0.0
    %1991 = vmatpush1.msra.mxu0 0.0
    %1992 = vmatprep.subr.mxu0 0.0
    %1993 = vmatpush1.msra.mxu0 0.0
    %1994 = vmatprep.subr.mxu0 0.0
    %1995 = vmatpush1.msra.mxu0 0.0
    %1996 = vmatprep.subr.mxu0 0.0
    %1997 = vmatpush1.msra.mxu0 0.0
    %1998 = vmatprep.subr.mxu0 0.0
    %1999 = vmatpush1.msra.mxu0 0.0
    %2000 = vmatprep.subr.mxu0 0.0
    %2001 = vmatpush1.msra.mxu0 0.0
    %2002 = vmatprep.subr.mxu0 0.0
    %2003 = vmatpush1.msra.mxu0 0.0
    %2004 = vmatprep.subr.mxu0 0.0
    %2005 = vmatpush1.msra.mxu0 0.0
    %2006 = vmatprep.subr.mxu0 0.0
    %2007 = vmatpush1.msra.mxu0 0.0
    %2008 = vmatprep.subr.mxu0 0.0
    %2009 = vmatpush1.msra.mxu0 0.0
    %2010 = vmatprep.subr.mxu0 0.0
    %2011 = vmatpush1.msra.mxu0 0.0
    %2012 = vmatprep.subr.mxu0 0.0
    %2013 = vmatpush1.msra.mxu0 0.0
    %2014 = vmatprep.subr.mxu0 0.0
    %2015 = vmatpush1.msra.mxu0 0.0
    %2016 = vmatprep.subr.mxu0 0.0
    %2017 = vmatpush1.msra.mxu0 0.0
    %2018 = vmatprep.subr.mxu0 0.0
    %2019 = vmatpush1.msra.mxu0 0.0
    %2020 = vmatprep.subr.mxu0 0.0
    %2021 = vmatpush1.msra.mxu0 0.0
    %2022 = vmatprep.subr.mxu0 0.0
    %2023 = vmatpush1.msra.mxu0 0.0
    %2024 = vmatprep.subr.mxu0 0.0
    %2025 = vmatpush1.msra.mxu0 0.0
    %2026 = vmatprep.subr.mxu0 0.0
    %2027 = vmatpush1.msra.mxu0 0.0
    %2028 = vmatprep.subr.mxu0 0.0
    %2029 = vmatpush1.msra.mxu0 0.0
    %2030 = vmatprep.subr.mxu0 0.0
    %2031 = vmatpush1.msra.mxu0 0.0
    %2032 = vmatprep.subr.mxu0 0.0
    %2033 = vmatpush1.msra.mxu0 0.0
    %2034 = vmatprep.subr.mxu0 0.0
    %2035 = vmatpush1.msra.mxu0 0.0
    %2036 = vmatprep.subr.mxu0 0.0
    %2037 = vmatpush1.msra.mxu0 0.0
    %2038 = vmatprep.subr.mxu0 0.0
    %2039 = vmatpush1.msra.mxu0 0.0
    %2040 = vmatprep.mubr.f32.mxu0 0.0
    %2041 = vmatmul.mubr.f32.gmra.mrb[0].mxu0 %v1974
    %v2042 = vpop.f32.mrb[0].mxu0
    %v2043 = vadd.f32 0.0, %v2042
    %v2044 = vpop.f32.mrb[0].mxu0
    %2045 = vdwg.mxu0
    %v2047 = vrot.slane %v2043, 2
    %v2049 = vadd.f32 %v1229, %v2047
    %v2050 = vtanh.pop %v2049
    %v2052 = vcombine.high %v2050, %v2050
    %v2054 = vunpack.c.l.s4 1966171168
    %v2055 = vunpack.c.0.s8 %v2054
    %v2056 = vlaneseq
    %v2057 = vshrl.u32 %v2056, 7
    %v2058 = vsub.s32 %v2055, %v2057
    %v2059 = vrot.slane %v2052, %v2058
    %v2060 = vcombine.high %v2059, %v2059
    %v2062 = vunpack.c.l.s4 1966171168
    %v2063 = vunpack.c.0.s8 %v2062
    %v2064 = vlaneseq
    %v2065 = vshrl.u32 %v2064, 7
    %v2066 = vsub.s32 %v2063, %v2065
    %v2067 = vrot.slane %v2059, %v2066
    %v2069 = vunpack.c.l.s4 1966171168
    %v2070 = vunpack.c.0.s8 %v2069
    %v2071 = vlaneseq
    %v2072 = vshrl.u32 %v2071, 7
    %v2073 = vsub.s32 %v2070, %v2072
    %v2074 = vrot.slane %v2060, %v2073
    %v2075 = vcombine.high %v2067, %v2067
    %v2076 = vcombine.high %v2074, %v2074
    %2079 = vst.msk [vmem:[#allocation3 + $0x7] sm:$0x1] %vm263, %v2075
    %2080 = vst.msk [vmem:[#allocation3 + $0xf] sm:$0x1] %vm263, %v2076
    %vm2081 = vcmask 261126
    %2082 = vst.msk [vmem:[#allocation4 - $0x6] sm:$0xc0] %vm2081, %v2050
    %v2083 = vld [vmem:[#allocation3] sm:$0xff]
    %v2084 = vld [vmem:[#allocation3 + $0x8] sm:$0xff]
    %v2087 = vunpack.c.l.s4 1966171168
    %v2088 = vunpack.c.0.s8 %v2087
    %v2089 = vlaneseq
    %v2090 = vshrl.u32 %v2089, 7
    %v2091 = vsub.s32 %v2088, %v2090
    %v2092 = vrot.slane %v1137, %v2091
    %v2093 = vcombine.high %v2092, %v2092
    %v2095 = vunpack.c.l.s4 1966171168
    %v2096 = vunpack.c.0.s8 %v2095
    %v2097 = vlaneseq
    %v2098 = vshrl.u32 %v2097, 7
    %v2099 = vsub.s32 %v2096, %v2098
    %v2100 = vrot.slane %v2092, %v2099
    %v2102 = vunpack.c.l.s4 1966171168
    %v2103 = vunpack.c.0.s8 %v2102
    %v2104 = vlaneseq
    %v2105 = vshrl.u32 %v2104, 7
    %v2106 = vsub.s32 %v2103, %v2105
    %v2107 = vrot.slane %v2093, %v2106
    %v2108 = vlaneseq
    %v2109 = vshrl.u32 %v2108, 7
    %v2110 = vsub.s32 0, %v2109
    %v2111 = vrot.slane %v2100, %v2110
    %v2112 = vlaneseq
    %v2113 = vshrl.u32 %v2112, 7
    %v2114 = vsub.s32 0, %v2113
    %v2115 = vrot.slane %v2107, %v2114
    %v2119 = vsel %vm71, %v2083, 0
    %v2122 = vsel %vm71, %v1129, 0
    %2124 = vmatprep.subr.mxu0 0.0
    %2125 = vmatpush1.xpose.msra.mxu0 %v2122
    %2126 = vmatprep.subr.mxu0 0.0
    %2127 = vmatpush1.xpose.msra.mxu0 0.0
    %2128 = vmatprep.subr.mxu0 0.0
    %2129 = vmatpush1.xpose.msra.mxu0 0.0
    %2130 = vmatprep.subr.mxu0 0.0
    %2131 = vmatpush1.xpose.msra.mxu0 0.0
    %2132 = vmatprep.subr.mxu0 0.0
    %2133 = vmatpush1.xpose.msra.mxu0 0.0
    %2134 = vmatprep.subr.mxu0 0.0
    %2135 = vmatpush1.xpose.msra.mxu0 0.0
    %2136 = vmatprep.subr.mxu0 0.0
    %2137 = vmatpush1.xpose.msra.mxu0 0.0
    %2138 = vmatprep.subr.mxu0 0.0
    %2139 = vmatpush1.xpose.msra.mxu0 0.0
    %2140 = vmatprep.subr.mxu0 0.0
    %2141 = vmatpush1.xpose.msra.mxu0 0.0
    %2142 = vmatprep.subr.mxu0 0.0
    %2143 = vmatpush1.xpose.msra.mxu0 0.0
    %2144 = vmatprep.subr.mxu0 0.0
    %2145 = vmatpush1.xpose.msra.mxu0 0.0
    %2146 = vmatprep.subr.mxu0 0.0
    %2147 = vmatpush1.xpose.msra.mxu0 0.0
    %2148 = vmatprep.subr.mxu0 0.0
    %2149 = vmatpush1.xpose.msra.mxu0 0.0
    %2150 = vmatprep.subr.mxu0 0.0
    %2151 = vmatpush1.xpose.msra.mxu0 0.0
    %2152 = vmatprep.subr.mxu0 0.0
    %2153 = vmatpush1.xpose.msra.mxu0 0.0
    %2154 = vmatprep.subr.mxu0 0.0
    %2155 = vmatpush1.xpose.msra.mxu0 0.0
    %2156 = vmatprep.subr.mxu0 0.0
    %2157 = vmatpush1.xpose.msra.mxu0 0.0
    %2158 = vmatprep.subr.mxu0 0.0
    %2159 = vmatpush1.xpose.msra.mxu0 0.0
    %2160 = vmatprep.subr.mxu0 0.0
    %2161 = vmatpush1.xpose.msra.mxu0 0.0
    %2162 = vmatprep.subr.mxu0 0.0
    %2163 = vmatpush1.xpose.msra.mxu0 0.0
    %2164 = vmatprep.subr.mxu0 0.0
    %2165 = vmatpush1.xpose.msra.mxu0 0.0
    %2166 = vmatprep.subr.mxu0 0.0
    %2167 = vmatpush1.xpose.msra.mxu0 0.0
    %2168 = vmatprep.subr.mxu0 0.0
    %2169 = vmatpush1.xpose.msra.mxu0 0.0
    %2170 = vmatprep.subr.mxu0 0.0
    %2171 = vmatpush1.xpose.msra.mxu0 0.0
    %2172 = vmatprep.subr.mxu0 0.0
    %2173 = vmatpush1.xpose.msra.mxu0 0.0
    %2174 = vmatprep.subr.mxu0 0.0
    %2175 = vmatpush1.xpose.msra.mxu0 0.0
    %2176 = vmatprep.subr.mxu0 0.0
    %2177 = vmatpush1.xpose.msra.mxu0 0.0
    %2178 = vmatprep.subr.mxu0 0.0
    %2179 = vmatpush1.xpose.msra.mxu0 0.0
    %2180 = vmatprep.subr.mxu0 0.0
    %2181 = vmatpush1.xpose.msra.mxu0 0.0
    %2182 = vmatprep.subr.mxu0 0.0
    %2183 = vmatpush1.xpose.msra.mxu0 0.0
    %2184 = vmatprep.subr.mxu0 0.0
    %2185 = vmatpush1.xpose.msra.mxu0 0.0
    %2186 = vmatprep.subr.mxu0 0.0
    %2187 = vmatpush1.xpose.msra.mxu0 0.0
    %2188 = vmatprep.mubr.f32.mxu0 0.0
    %2189 = vmatmul.mubr.f32.gmra.mrb[0].mxu0 %v2119
    %v2190 = vpop.f32.mrb[0].mxu0
    %v2191 = vadd.f32 %v2111, %v2190
    %v2192 = vpop.f32.mrb[0].mxu0
    %2193 = vdwg.mxu0
    %v2195 = vsel %vm71, %v2084, 0
    %v2198 = vsel %vm71, %v1134, 0
    %2200 = vmatprep.subr.mxu0 0.0
    %2201 = vmatpush1.xpose.msra.mxu0 %v2198
    %2202 = vmatprep.subr.mxu0 0.0
    %2203 = vmatpush1.xpose.msra.mxu0 0.0
    %2204 = vmatprep.subr.mxu0 0.0
    %2205 = vmatpush1.xpose.msra.mxu0 0.0
    %2206 = vmatprep.subr.mxu0 0.0
    %2207 = vmatpush1.xpose.msra.mxu0 0.0
    %2208 = vmatprep.subr.mxu0 0.0
    %2209 = vmatpush1.xpose.msra.mxu0 0.0
    %2210 = vmatprep.subr.mxu0 0.0
    %2211 = vmatpush1.xpose.msra.mxu0 0.0
    %2212 = vmatprep.subr.mxu0 0.0
    %2213 = vmatpush1.xpose.msra.mxu0 0.0
    %2214 = vmatprep.subr.mxu0 0.0
    %2215 = vmatpush1.xpose.msra.mxu0 0.0
    %2216 = vmatprep.subr.mxu0 0.0
    %2217 = vmatpush1.xpose.msra.mxu0 0.0
    %2218 = vmatprep.subr.mxu0 0.0
    %2219 = vmatpush1.xpose.msra.mxu0 0.0
    %2220 = vmatprep.subr.mxu0 0.0
    %2221 = vmatpush1.xpose.msra.mxu0 0.0
    %2222 = vmatprep.subr.mxu0 0.0
    %2223 = vmatpush1.xpose.msra.mxu0 0.0
    %2224 = vmatprep.subr.mxu0 0.0
    %2225 = vmatpush1.xpose.msra.mxu0 0.0
    %2226 = vmatprep.subr.mxu0 0.0
    %2227 = vmatpush1.xpose.msra.mxu0 0.0
    %2228 = vmatprep.subr.mxu0 0.0
    %2229 = vmatpush1.xpose.msra.mxu0 0.0
    %2230 = vmatprep.subr.mxu0 0.0
    %2231 = vmatpush1.xpose.msra.mxu0 0.0
    %2232 = vmatprep.subr.mxu0 0.0
    %2233 = vmatpush1.xpose.msra.mxu0 0.0
    %2234 = vmatprep.subr.mxu0 0.0
    %2235 = vmatpush1.xpose.msra.mxu0 0.0
    %2236 = vmatprep.subr.mxu0 0.0
    %2237 = vmatpush1.xpose.msra.mxu0 0.0
    %2238 = vmatprep.subr.mxu0 0.0
    %2239 = vmatpush1.xpose.msra.mxu0 0.0
    %2240 = vmatprep.subr.mxu0 0.0
    %2241 = vmatpush1.xpose.msra.mxu0 0.0
    %2242 = vmatprep.subr.mxu0 0.0
    %2243 = vmatpush1.xpose.msra.mxu0 0.0
    %2244 = vmatprep.subr.mxu0 0.0
    %2245 = vmatpush1.xpose.msra.mxu0 0.0
    %2246 = vmatprep.subr.mxu0 0.0
    %2247 = vmatpush1.xpose.msra.mxu0 0.0
    %2248 = vmatprep.subr.mxu0 0.0
    %2249 = vmatpush1.xpose.msra.mxu0 0.0
    %2250 = vmatprep.subr.mxu0 0.0
    %2251 = vmatpush1.xpose.msra.mxu0 0.0
    %2252 = vmatprep.subr.mxu0 0.0
    %2253 = vmatpush1.xpose.msra.mxu0 0.0
    %2254 = vmatprep.subr.mxu0 0.0
    %2255 = vmatpush1.xpose.msra.mxu0 0.0
    %2256 = vmatprep.subr.mxu0 0.0
    %2257 = vmatpush1.xpose.msra.mxu0 0.0
    %2258 = vmatprep.subr.mxu0 0.0
    %2259 = vmatpush1.xpose.msra.mxu0 0.0
    %2260 = vmatprep.subr.mxu0 0.0
    %2261 = vmatpush1.xpose.msra.mxu0 0.0
    %2262 = vmatprep.subr.mxu0 0.0
    %2263 = vmatpush1.xpose.msra.mxu0 0.0
    %2264 = vmatprep.mubr.f32.mxu0 0.0
    %2265 = vmatmul.mubr.f32.gmra.mrb[0].mxu0 %v2195
    %v2266 = vpop.f32.mrb[0].mxu0
    %v2267 = vadd.f32 %v2115, %v2266
    %v2268 = vpop.f32.mrb[0].mxu0
    %2269 = vdwg.mxu0
    %vm2270 = vcmask 64512
    %v2271 = vsel %vm2270, %v2191, -inf
    %2272 = vmax.xlane.f32.xlu0 %v2271
    %v2273 = vpop.xlane.xlu0 %2272
    %v2274 = vsel %vm2270, %v2267, -inf
    %2275 = vmax.xlane.f32.xlu0 %v2274
    %v2276 = vpop.xlane.xlu0 %2275
    %v2277 = vsub.f32 %v2191, %v2273
    %v2278 = vsub.f32 %v2267, %v2276
    %v2279 = vmul.f32 %v2277, 1.442695
    %v2280 = vpow.pop %v2279
    %v2281 = vmul.f32 %v2278, 1.442695
    %v2282 = vpow.pop %v2281
    %v2283 = vsel %vm2270, %v2280, 0.0
    %2284 = vadd.xlane.f32.xlu0 %v2283
    %v2285 = vpop.xlane.xlu0 %2284
    %v2286 = vsel %vm2270, %v2282, 0.0
    %2287 = vadd.xlane.f32.xlu0 %v2286
    %v2288 = vpop.xlane.xlu0 %2287
    %v2289 = vrcp.pop %v2285
    %v2290 = vmul.f32 %v2280, %v2289
    %v2291 = vrcp.pop %v2288
    %v2292 = vmul.f32 %v2282, %v2291
    %2293 = vst.msk [vmem:[%s17] sm:$0xff] %vm2270, %v2290
    %2294 = vst.msk [vmem:[%s17 + $0x8] sm:$0xff] %vm2270, %v2292
    %v2296 = vsel %vm2270, %v2290, 0
    %2298 = vmatprep.subr.mxu0 0.0
    %2299 = vmatpush1.msra.mxu0 %v1050
    %2300 = vmatprep.subr.mxu0 0.0
    %2301 = vmatpush1.msra.mxu0 0.0
    %2302 = vmatprep.subr.mxu0 0.0
    %2303 = vmatpush1.msra.mxu0 0.0
    %2304 = vmatprep.subr.mxu0 0.0
    %2305 = vmatpush1.msra.mxu0 0.0
    %2306 = vmatprep.subr.mxu0 0.0
    %2307 = vmatpush1.msra.mxu0 0.0
    %2308 = vmatprep.subr.mxu0 0.0
    %2309 = vmatpush1.msra.mxu0 0.0
    %2310 = vmatprep.subr.mxu0 0.0
    %2311 = vmatpush1.msra.mxu0 0.0
    %2312 = vmatprep.subr.mxu0 0.0
    %2313 = vmatpush1.msra.mxu0 0.0
    %2314 = vmatprep.subr.mxu0 0.0
    %2315 = vmatpush1.msra.mxu0 0.0
    %2316 = vmatprep.subr.mxu0 0.0
    %2317 = vmatpush1.msra.mxu0 0.0
    %2318 = vmatprep.subr.mxu0 0.0
    %2319 = vmatpush1.msra.mxu0 0.0
    %2320 = vmatprep.subr.mxu0 0.0
    %2321 = vmatpush1.msra.mxu0 0.0
    %2322 = vmatprep.subr.mxu0 0.0
    %2323 = vmatpush1.msra.mxu0 0.0
    %2324 = vmatprep.subr.mxu0 0.0
    %2325 = vmatpush1.msra.mxu0 0.0
    %2326 = vmatprep.subr.mxu0 0.0
    %2327 = vmatpush1.msra.mxu0 0.0
    %2328 = vmatprep.subr.mxu0 0.0
    %2329 = vmatpush1.msra.mxu0 0.0
    %2330 = vmatprep.subr.mxu0 0.0
    %2331 = vmatpush1.msra.mxu0 0.0
    %2332 = vmatprep.subr.mxu0 0.0
    %2333 = vmatpush1.msra.mxu0 0.0
    %2334 = vmatprep.subr.mxu0 0.0
    %2335 = vmatpush1.msra.mxu0 0.0
    %2336 = vmatprep.subr.mxu0 0.0
    %2337 = vmatpush1.msra.mxu0 0.0
    %2338 = vmatprep.subr.mxu0 0.0
    %2339 = vmatpush1.msra.mxu0 0.0
    %2340 = vmatprep.subr.mxu0 0.0
    %2341 = vmatpush1.msra.mxu0 0.0
    %2342 = vmatprep.subr.mxu0 0.0
    %2343 = vmatpush1.msra.mxu0 0.0
    %2344 = vmatprep.subr.mxu0 0.0
    %2345 = vmatpush1.msra.mxu0 0.0
    %2346 = vmatprep.subr.mxu0 0.0
    %2347 = vmatpush1.msra.mxu0 0.0
    %2348 = vmatprep.subr.mxu0 0.0
    %2349 = vmatpush1.msra.mxu0 0.0
    %2350 = vmatprep.subr.mxu0 0.0
    %2351 = vmatpush1.msra.mxu0 0.0
    %2352 = vmatprep.subr.mxu0 0.0
    %2353 = vmatpush1.msra.mxu0 0.0
    %2354 = vmatprep.subr.mxu0 0.0
    %2355 = vmatpush1.msra.mxu0 0.0
    %2356 = vmatprep.subr.mxu0 0.0
    %2357 = vmatpush1.msra.mxu0 0.0
    %2358 = vmatprep.subr.mxu0 0.0
    %2359 = vmatpush1.msra.mxu0 0.0
    %2360 = vmatprep.subr.mxu0 0.0
    %2361 = vmatpush1.msra.mxu0 0.0
    %2362 = vmatprep.mubr.f32.mxu0 0.0
    %2363 = vmatmul.mubr.f32.gmra.mrb[0].mxu0 %v2296
    %v2364 = vpop.f32.mrb[0].mxu0
    %v2365 = vadd.f32 0.0, %v2364
    %v2366 = vpop.f32.mrb[0].mxu0
    %2367 = vdwg.mxu0
    %v2369 = vsel %vm2270, %v2292, 0
    %2371 = vmatprep.subr.mxu0 0.0
    %2372 = vmatpush1.msra.mxu0 %v1051
    %2373 = vmatprep.subr.mxu0 0.0
    %2374 = vmatpush1.msra.mxu0 0.0
    %2375 = vmatprep.subr.mxu0 0.0
    %2376 = vmatpush1.msra.mxu0 0.0
    %2377 = vmatprep.subr.mxu0 0.0
    %2378 = vmatpush1.msra.mxu0 0.0
    %2379 = vmatprep.subr.mxu0 0.0
    %2380 = vmatpush1.msra.mxu0 0.0
    %2381 = vmatprep.subr.mxu0 0.0
    %2382 = vmatpush1.msra.mxu0 0.0
    %2383 = vmatprep.subr.mxu0 0.0
    %2384 = vmatpush1.msra.mxu0 0.0
    %2385 = vmatprep.subr.mxu0 0.0
    %2386 = vmatpush1.msra.mxu0 0.0
    %2387 = vmatprep.subr.mxu0 0.0
    %2388 = vmatpush1.msra.mxu0 0.0
    %2389 = vmatprep.subr.mxu0 0.0
    %2390 = vmatpush1.msra.mxu0 0.0
    %2391 = vmatprep.subr.mxu0 0.0
    %2392 = vmatpush1.msra.mxu0 0.0
    %2393 = vmatprep.subr.mxu0 0.0
    %2394 = vmatpush1.msra.mxu0 0.0
    %2395 = vmatprep.subr.mxu0 0.0
    %2396 = vmatpush1.msra.mxu0 0.0
    %2397 = vmatprep.subr.mxu0 0.0
    %2398 = vmatpush1.msra.mxu0 0.0
    %2399 = vmatprep.subr.mxu0 0.0
    %2400 = vmatpush1.msra.mxu0 0.0
    %2401 = vmatprep.subr.mxu0 0.0
    %2402 = vmatpush1.msra.mxu0 0.0
    %2403 = vmatprep.subr.mxu0 0.0
    %2404 = vmatpush1.msra.mxu0 0.0
    %2405 = vmatprep.subr.mxu0 0.0
    %2406 = vmatpush1.msra.mxu0 0.0
    %2407 = vmatprep.subr.mxu0 0.0
    %2408 = vmatpush1.msra.mxu0 0.0
    %2409 = vmatprep.subr.mxu0 0.0
    %2410 = vmatpush1.msra.mxu0 0.0
    %2411 = vmatprep.subr.mxu0 0.0
    %2412 = vmatpush1.msra.mxu0 0.0
    %2413 = vmatprep.subr.mxu0 0.0
    %2414 = vmatpush1.msra.mxu0 0.0
    %2415 = vmatprep.subr.mxu0 0.0
    %2416 = vmatpush1.msra.mxu0 0.0
    %2417 = vmatprep.subr.mxu0 0.0
    %2418 = vmatpush1.msra.mxu0 0.0
    %2419 = vmatprep.subr.mxu0 0.0
    %2420 = vmatpush1.msra.mxu0 0.0
    %2421 = vmatprep.subr.mxu0 0.0
    %2422 = vmatpush1.msra.mxu0 0.0
    %2423 = vmatprep.subr.mxu0 0.0
    %2424 = vmatpush1.msra.mxu0 0.0
    %2425 = vmatprep.subr.mxu0 0.0
    %2426 = vmatpush1.msra.mxu0 0.0
    %2427 = vmatprep.subr.mxu0 0.0
    %2428 = vmatpush1.msra.mxu0 0.0
    %2429 = vmatprep.subr.mxu0 0.0
    %2430 = vmatpush1.msra.mxu0 0.0
    %2431 = vmatprep.subr.mxu0 0.0
    %2432 = vmatpush1.msra.mxu0 0.0
    %2433 = vmatprep.subr.mxu0 0.0
    %2434 = vmatpush1.msra.mxu0 0.0
    %2435 = vmatprep.mubr.f32.mxu0 0.0
    %2436 = vmatmul.mubr.f32.gmra.mrb[0].mxu0 %v2369
    %v2437 = vpop.f32.mrb[0].mxu0
    %v2438 = vadd.f32 0.0, %v2437
    %v2439 = vpop.f32.mrb[0].mxu0
    %2440 = vdwg.mxu0
    %v2441 = vld [vmem:[%s12] sm:$0xff]
    %v2442 = vld [vmem:[%s12 + $0x8] sm:$0xff]
    %v2443 = vld [vmem:[%s12 + $0x10] sm:$0xff]
    %v2444 = vld [vmem:[%s12 + $0x18] sm:$0xff]
    %v2445 = vld [vmem:[%s13] sm:$0xff]
    %v2446 = vld [vmem:[%s13 + $0x8] sm:$0xff]
    %v2447 = vld [vmem:[%s13 + $0x10] sm:$0xff]
    %v2448 = vld [vmem:[%s13 + $0x18] sm:$0xff]
    %2449 = vmatprep.subr.mxu0 0.0
    %2450 = vmatpush1.msra.mxu0 %v2445
    %2451 = vmatprep.subr.mxu0 0.0
    %2452 = vmatpush1.msra.mxu0 %v2446
    %2453 = vmatprep.subr.mxu0 0.0
    %2454 = vmatpush1.msra.mxu0 %v2447
    %2455 = vmatprep.subr.mxu0 0.0
    %2456 = vmatpush1.msra.mxu0 %v2448
    %2457 = vmatprep.subr.mxu0 0.0
    %2458 = vmatpush1.msra.mxu0 0.0
    %2459 = vmatprep.subr.mxu0 0.0
    %2460 = vmatpush1.msra.mxu0 0.0
    %2461 = vmatprep.subr.mxu0 0.0
    %2462 = vmatpush1.msra.mxu0 0.0
    %2463 = vmatprep.subr.mxu0 0.0
    %2464 = vmatpush1.msra.mxu0 0.0
    %2465 = vmatprep.subr.mxu0 0.0
    %2466 = vmatpush1.msra.mxu0 0.0
    %2467 = vmatprep.subr.mxu0 0.0
    %2468 = vmatpush1.msra.mxu0 0.0
    %2469 = vmatprep.subr.mxu0 0.0
    %2470 = vmatpush1.msra.mxu0 0.0
    %2471 = vmatprep.subr.mxu0 0.0
    %2472 = vmatpush1.msra.mxu0 0.0
    %2473 = vmatprep.subr.mxu0 0.0
    %2474 = vmatpush1.msra.mxu0 0.0
    %2475 = vmatprep.subr.mxu0 0.0
    %2476 = vmatpush1.msra.mxu0 0.0
    %2477 = vmatprep.subr.mxu0 0.0
    %2478 = vmatpush1.msra.mxu0 0.0
    %2479 = vmatprep.subr.mxu0 0.0
    %2480 = vmatpush1.msra.mxu0 0.0
    %2481 = vmatprep.subr.mxu0 0.0
    %2482 = vmatpush1.msra.mxu0 0.0
    %2483 = vmatprep.subr.mxu0 0.0
    %2484 = vmatpush1.msra.mxu0 0.0
    %2485 = vmatprep.subr.mxu0 0.0
    %2486 = vmatpush1.msra.mxu0 0.0
    %2487 = vmatprep.subr.mxu0 0.0
    %2488 = vmatpush1.msra.mxu0 0.0
    %2489 = vmatprep.subr.mxu0 0.0
    %2490 = vmatpush1.msra.mxu0 0.0
    %2491 = vmatprep.subr.mxu0 0.0
    %2492 = vmatpush1.msra.mxu0 0.0
    %2493 = vmatprep.subr.mxu0 0.0
    %2494 = vmatpush1.msra.mxu0 0.0
    %2495 = vmatprep.subr.mxu0 0.0
    %2496 = vmatpush1.msra.mxu0 0.0
    %2497 = vmatprep.subr.mxu0 0.0
    %2498 = vmatpush1.msra.mxu0 0.0
    %2499 = vmatprep.subr.mxu0 0.0
    %2500 = vmatpush1.msra.mxu0 0.0
    %2501 = vmatprep.subr.mxu0 0.0
    %2502 = vmatpush1.msra.mxu0 0.0
    %2503 = vmatprep.subr.mxu0 0.0
    %2504 = vmatpush1.msra.mxu0 0.0
    %2505 = vmatprep.subr.mxu0 0.0
    %2506 = vmatpush1.msra.mxu0 0.0
    %2507 = vmatprep.subr.mxu0 0.0
    %2508 = vmatpush1.msra.mxu0 0.0
    %2509 = vmatprep.subr.mxu0 0.0
    %2510 = vmatpush1.msra.mxu0 0.0
    %2511 = vmatprep.subr.mxu0 0.0
    %2512 = vmatpush1.msra.mxu0 0.0
    %2513 = vmatprep.mubr.f32.mxu0 0.0
    %2514 = vmatmul.mubr.f32.gmra.mrb[0].mxu0 %v2119
    %v2515 = vpop.f32.mrb[0].mxu0
    %v2516 = vadd.f32 0.0, %v2515
    %v2517 = vpop.f32.mrb[0].mxu0
    %2518 = vmatprep.mubr.f32.mxu0 0.0
    %2519 = vmatmul.mubr.f32.gmra.mrb[0].mxu0 %v2195
    %v2520 = vpop.f32.mrb[0].mxu0
    %v2521 = vadd.f32 0.0, %v2520
    %v2522 = vpop.f32.mrb[0].mxu0
    %2523 = vdwg.mxu0
    %v2525 = vsel %vm71, %v2365, 0
    %v2528 = vsel %vm71, %v2438, 0
    %2530 = vmatprep.subr.mxu0 0.0
    %2531 = vmatpush1.msra.mxu0 %v2441
    %2532 = vmatprep.subr.mxu0 0.0
    %2533 = vmatpush1.msra.mxu0 %v2442
    %2534 = vmatprep.subr.mxu0 0.0
    %2535 = vmatpush1.msra.mxu0 %v2443
    %2536 = vmatprep.subr.mxu0 0.0
    %2537 = vmatpush1.msra.mxu0 %v2444
    %2538 = vmatprep.subr.mxu0 0.0
    %2539 = vmatpush1.msra.mxu0 0.0
    %2540 = vmatprep.subr.mxu0 0.0
    %2541 = vmatpush1.msra.mxu0 0.0
    %2542 = vmatprep.subr.mxu0 0.0
    %2543 = vmatpush1.msra.mxu0 0.0
    %2544 = vmatprep.subr.mxu0 0.0
    %2545 = vmatpush1.msra.mxu0 0.0
    %2546 = vmatprep.subr.mxu0 0.0
    %2547 = vmatpush1.msra.mxu0 0.0
    %2548 = vmatprep.subr.mxu0 0.0
    %2549 = vmatpush1.msra.mxu0 0.0
    %2550 = vmatprep.subr.mxu0 0.0
    %2551 = vmatpush1.msra.mxu0 0.0
    %2552 = vmatprep.subr.mxu0 0.0
    %2553 = vmatpush1.msra.mxu0 0.0
    %2554 = vmatprep.subr.mxu0 0.0
    %2555 = vmatpush1.msra.mxu0 0.0
    %2556 = vmatprep.subr.mxu0 0.0
    %2557 = vmatpush1.msra.mxu0 0.0
    %2558 = vmatprep.subr.mxu0 0.0
    %2559 = vmatpush1.msra.mxu0 0.0
    %2560 = vmatprep.subr.mxu0 0.0
    %2561 = vmatpush1.msra.mxu0 0.0
    %2562 = vmatprep.subr.mxu0 0.0
    %2563 = vmatpush1.msra.mxu0 0.0
    %2564 = vmatprep.subr.mxu0 0.0
    %2565 = vmatpush1.msra.mxu0 0.0
    %2566 = vmatprep.subr.mxu0 0.0
    %2567 = vmatpush1.msra.mxu0 0.0
    %2568 = vmatprep.subr.mxu0 0.0
    %2569 = vmatpush1.msra.mxu0 0.0
    %2570 = vmatprep.subr.mxu0 0.0
    %2571 = vmatpush1.msra.mxu0 0.0
    %2572 = vmatprep.subr.mxu0 0.0
    %2573 = vmatpush1.msra.mxu0 0.0
    %2574 = vmatprep.subr.mxu0 0.0
    %2575 = vmatpush1.msra.mxu0 0.0
    %2576 = vmatprep.subr.mxu0 0.0
    %2577 = vmatpush1.msra.mxu0 0.0
    %2578 = vmatprep.subr.mxu0 0.0
    %2579 = vmatpush1.msra.mxu0 0.0
    %2580 = vmatprep.subr.mxu0 0.0
    %2581 = vmatpush1.msra.mxu0 0.0
    %2582 = vmatprep.subr.mxu0 0.0
    %2583 = vmatpush1.msra.mxu0 0.0
    %2584 = vmatprep.subr.mxu0 0.0
    %2585 = vmatpush1.msra.mxu0 0.0
    %2586 = vmatprep.subr.mxu0 0.0
    %2587 = vmatpush1.msra.mxu0 0.0
    %2588 = vmatprep.subr.mxu0 0.0
    %2589 = vmatpush1.msra.mxu0 0.0
    %2590 = vmatprep.subr.mxu0 0.0
    %2591 = vmatpush1.msra.mxu0 0.0
    %2592 = vmatprep.subr.mxu0 0.0
    %2593 = vmatpush1.msra.mxu0 0.0
    %2594 = vmatprep.mubr.f32.mxu0 0.0
    %2595 = vmatmul.mubr.f32.gmra.mrb[0].mxu0 %v2525
    %v2596 = vpop.f32.mrb[0].mxu0
    %v2597 = vadd.f32 %v2516, %v2596
    %v2598 = vpop.f32.mrb[0].mxu0
    %2599 = vmatprep.mubr.f32.mxu0 0.0
    %2600 = vmatmul.mubr.f32.gmra.mrb[0].mxu0 %v2528
    %v2601 = vpop.f32.mrb[0].mxu0
    %v2602 = vadd.f32 %v2521, %v2601
    %v2603 = vpop.f32.mrb[0].mxu0
    %2604 = vdwg.mxu0
    %v2605 = vld [vmem:[%s14] sm:$0x1]
    %v2607 = vlaneseq
    %v2608 = vshrl.u32 %v2607, 7
    %v2609 = vsub.s32 0, %v2608
    %v2610 = vrot.slane %v2605, %v2609
    %v2612 = vadd.f32 %v2597, %v2610
    %v2613 = vadd.f32 %v2602, %v2610
    %v2614 = vtanh.pop %v2612
    %v2615 = vtanh.pop %v2613
    %2616 = vst.msk [vmem:[%s16] sm:$0xff] %vm71, %v2614
    %2617 = vst.msk [vmem:[%s16 + $0x8] sm:$0xff] %vm71, %v2615
    %v2618 = vld [vmem:[%s3] sm:$0xff]
    %v2619 = vld [vmem:[%s3 + $0x8] sm:$0xff]
    %v2620 = vld [vmem:[%s15] sm:$0xff]
    %v2621 = vld [vmem:[%s15 + $0x8] sm:$0xff]
    %v2622 = vld [vmem:[%s15 + $0x10] sm:$0xff]
    %v2623 = vld [vmem:[%s15 + $0x18] sm:$0xff]
    %v2625 = vsel %vm71, %v2618, 0
    %v2628 = vsel %vm71, %v2619, 0
    %2630 = vmatprep.subr.mxu0 0.0
    %2631 = vmatpush1.msra.mxu0 %v2620
    %2632 = vmatprep.subr.mxu0 0.0
    %2633 = vmatpush1.msra.mxu0 %v2621
    %2634 = vmatprep.subr.mxu0 0.0
    %2635 = vmatpush1.msra.mxu0 %v2622
    %2636 = vmatprep.subr.mxu0 0.0
    %2637 = vmatpush1.msra.mxu0 %v2623
    %2638 = vmatprep.subr.mxu0 0.0
    %2639 = vmatpush1.msra.mxu0 0.0
    %2640 = vmatprep.subr.mxu0 0.0
    %2641 = vmatpush1.msra.mxu0 0.0
    %2642 = vmatprep.subr.mxu0 0.0
    %2643 = vmatpush1.msra.mxu0 0.0
    %2644 = vmatprep.subr.mxu0 0.0
    %2645 = vmatpush1.msra.mxu0 0.0
    %2646 = vmatprep.subr.mxu0 0.0
    %2647 = vmatpush1.msra.mxu0 0.0
    %2648 = vmatprep.subr.mxu0 0.0
    %2649 = vmatpush1.msra.mxu0 0.0
    %2650 = vmatprep.subr.mxu0 0.0
    %2651 = vmatpush1.msra.mxu0 0.0
    %2652 = vmatprep.subr.mxu0 0.0
    %2653 = vmatpush1.msra.mxu0 0.0
    %2654 = vmatprep.subr.mxu0 0.0
    %2655 = vmatpush1.msra.mxu0 0.0
    %2656 = vmatprep.subr.mxu0 0.0
    %2657 = vmatpush1.msra.mxu0 0.0
    %2658 = vmatprep.subr.mxu0 0.0
    %2659 = vmatpush1.msra.mxu0 0.0
    %2660 = vmatprep.subr.mxu0 0.0
    %2661 = vmatpush1.msra.mxu0 0.0
    %2662 = vmatprep.subr.mxu0 0.0
    %2663 = vmatpush1.msra.mxu0 0.0
    %2664 = vmatprep.subr.mxu0 0.0
    %2665 = vmatpush1.msra.mxu0 0.0
    %2666 = vmatprep.subr.mxu0 0.0
    %2667 = vmatpush1.msra.mxu0 0.0
    %2668 = vmatprep.subr.mxu0 0.0
    %2669 = vmatpush1.msra.mxu0 0.0
    %2670 = vmatprep.subr.mxu0 0.0
    %2671 = vmatpush1.msra.mxu0 0.0
    %2672 = vmatprep.subr.mxu0 0.0
    %2673 = vmatpush1.msra.mxu0 0.0
    %2674 = vmatprep.subr.mxu0 0.0
    %2675 = vmatpush1.msra.mxu0 0.0
    %2676 = vmatprep.subr.mxu0 0.0
    %2677 = vmatpush1.msra.mxu0 0.0
    %2678 = vmatprep.subr.mxu0 0.0
    %2679 = vmatpush1.msra.mxu0 0.0
    %2680 = vmatprep.subr.mxu0 0.0
    %2681 = vmatpush1.msra.mxu0 0.0
    %2682 = vmatprep.subr.mxu0 0.0
    %2683 = vmatpush1.msra.mxu0 0.0
    %2684 = vmatprep.subr.mxu0 0.0
    %2685 = vmatpush1.msra.mxu0 0.0
    %2686 = vmatprep.subr.mxu0 0.0
    %2687 = vmatpush1.msra.mxu0 0.0
    %2688 = vmatprep.subr.mxu0 0.0
    %2689 = vmatpush1.msra.mxu0 0.0
    %2690 = vmatprep.subr.mxu0 0.0
    %2691 = vmatpush1.msra.mxu0 0.0
    %2692 = vmatprep.subr.mxu0 0.0
    %2693 = vmatpush1.msra.mxu0 0.0
    %2694 = vmatprep.mubr.f32.mxu0 0.0
    %2695 = vmatmul.mubr.f32.gmra.mrb[0].mxu0 %v2625
    %v2696 = vpop.f32.mrb[0].mxu0
    %v2697 = vadd.f32 0.0, %v2696
    %v2698 = vpop.f32.mrb[0].mxu0
    %2699 = vmatprep.mubr.f32.mxu0 0.0
    %2700 = vmatmul.mubr.f32.gmra.mrb[0].mxu0 %v2628
    %v2701 = vpop.f32.mrb[0].mxu0
    %v2702 = vadd.f32 0.0, %v2701
    %v2703 = vpop.f32.mrb[0].mxu0
    %2704 = vdwg.mxu0
    %v2705 = vtanh.pop %v2697
    %v2706 = vtanh.pop %v2702
    %v2708 = vsel %vm71, %v2705, 0
    %2710 = vmatprep.subr.mxu0 0.0
    %2711 = vmatpush1.xpose.msra.mxu0 %v1057
    %2712 = vmatprep.subr.mxu0 0.0
    %2713 = vmatpush1.xpose.msra.mxu0 0.0
    %2714 = vmatprep.subr.mxu0 0.0
    %2715 = vmatpush1.xpose.msra.mxu0 0.0
    %2716 = vmatprep.subr.mxu0 0.0
    %2717 = vmatpush1.xpose.msra.mxu0 0.0
    %2718 = vmatprep.subr.mxu0 0.0
    %2719 = vmatpush1.xpose.msra.mxu0 0.0
    %2720 = vmatprep.subr.mxu0 0.0
    %2721 = vmatpush1.xpose.msra.mxu0 0.0
    %2722 = vmatprep.subr.mxu0 0.0
    %2723 = vmatpush1.xpose.msra.mxu0 0.0
    %2724 = vmatprep.subr.mxu0 0.0
    %2725 = vmatpush1.xpose.msra.mxu0 0.0
    %2726 = vmatprep.subr.mxu0 0.0
    %2727 = vmatpush1.xpose.msra.mxu0 0.0
    %2728 = vmatprep.subr.mxu0 0.0
    %2729 = vmatpush1.xpose.msra.mxu0 0.0
    %2730 = vmatprep.subr.mxu0 0.0
    %2731 = vmatpush1.xpose.msra.mxu0 0.0
    %2732 = vmatprep.subr.mxu0 0.0
    %2733 = vmatpush1.xpose.msra.mxu0 0.0
    %2734 = vmatprep.subr.mxu0 0.0
    %2735 = vmatpush1.xpose.msra.mxu0 0.0
    %2736 = vmatprep.subr.mxu0 0.0
    %2737 = vmatpush1.xpose.msra.mxu0 0.0
    %2738 = vmatprep.subr.mxu0 0.0
    %2739 = vmatpush1.xpose.msra.mxu0 0.0
    %2740 = vmatprep.subr.mxu0 0.0
    %2741 = vmatpush1.xpose.msra.mxu0 0.0
    %2742 = vmatprep.subr.mxu0 0.0
    %2743 = vmatpush1.xpose.msra.mxu0 0.0
    %2744 = vmatprep.subr.mxu0 0.0
    %2745 = vmatpush1.xpose.msra.mxu0 0.0
    %2746 = vmatprep.subr.mxu0 0.0
    %2747 = vmatpush1.xpose.msra.mxu0 0.0
    %2748 = vmatprep.subr.mxu0 0.0
    %2749 = vmatpush1.xpose.msra.mxu0 0.0
    %2750 = vmatprep.subr.mxu0 0.0
    %2751 = vmatpush1.xpose.msra.mxu0 0.0
    %2752 = vmatprep.subr.mxu0 0.0
    %2753 = vmatpush1.xpose.msra.mxu0 0.0
    %2754 = vmatprep.subr.mxu0 0.0
    %2755 = vmatpush1.xpose.msra.mxu0 0.0
    %2756 = vmatprep.subr.mxu0 0.0
    %2757 = vmatpush1.xpose.msra.mxu0 0.0
    %2758 = vmatprep.subr.mxu0 0.0
    %2759 = vmatpush1.xpose.msra.mxu0 0.0
    %2760 = vmatprep.subr.mxu0 0.0
    %2761 = vmatpush1.xpose.msra.mxu0 0.0
    %2762 = vmatprep.subr.mxu0 0.0
    %2763 = vmatpush1.xpose.msra.mxu0 0.0
    %2764 = vmatprep.subr.mxu0 0.0
    %2765 = vmatpush1.xpose.msra.mxu0 0.0
    %2766 = vmatprep.subr.mxu0 0.0
    %2767 = vmatpush1.xpose.msra.mxu0 0.0
    %2768 = vmatprep.subr.mxu0 0.0
    %2769 = vmatpush1.xpose.msra.mxu0 0.0
    %2770 = vmatprep.subr.mxu0 0.0
    %2771 = vmatpush1.xpose.msra.mxu0 0.0
    %2772 = vmatprep.subr.mxu0 0.0
    %2773 = vmatpush1.xpose.msra.mxu0 0.0
    %2774 = vmatprep.mubr.f32.mxu0 0.0
    %2775 = vmatmul.mubr.f32.gmra.mrb[0].mxu0 %v2708
    %v2776 = vpop.f32.mrb[0].mxu0
    %v2777 = vadd.f32 %v2111, %v2776
    %v2778 = vpop.f32.mrb[0].mxu0
    %2779 = vdwg.mxu0
    %v2781 = vsel %vm71, %v2706, 0
    %2783 = vmatprep.subr.mxu0 0.0
    %2784 = vmatpush1.xpose.msra.mxu0 %v1060
    %2785 = vmatprep.subr.mxu0 0.0
    %2786 = vmatpush1.xpose.msra.mxu0 0.0
    %2787 = vmatprep.subr.mxu0 0.0
    %2788 = vmatpush1.xpose.msra.mxu0 0.0
    %2789 = vmatprep.subr.mxu0 0.0
    %2790 = vmatpush1.xpose.msra.mxu0 0.0
    %2791 = vmatprep.subr.mxu0 0.0
    %2792 = vmatpush1.xpose.msra.mxu0 0.0
    %2793 = vmatprep.subr.mxu0 0.0
    %2794 = vmatpush1.xpose.msra.mxu0 0.0
    %2795 = vmatprep.subr.mxu0 0.0
    %2796 = vmatpush1.xpose.msra.mxu0 0.0
    %2797 = vmatprep.subr.mxu0 0.0
    %2798 = vmatpush1.xpose.msra.mxu0 0.0
    %2799 = vmatprep.subr.mxu0 0.0
    %2800 = vmatpush1.xpose.msra.mxu0 0.0
    %2801 = vmatprep.subr.mxu0 0.0
    %2802 = vmatpush1.xpose.msra.mxu0 0.0
    %2803 = vmatprep.subr.mxu0 0.0
    %2804 = vmatpush1.xpose.msra.mxu0 0.0
    %2805 = vmatprep.subr.mxu0 0.0
    %2806 = vmatpush1.xpose.msra.mxu0 0.0
    %2807 = vmatprep.subr.mxu0 0.0
    %2808 = vmatpush1.xpose.msra.mxu0 0.0
    %2809 = vmatprep.subr.mxu0 0.0
    %2810 = vmatpush1.xpose.msra.mxu0 0.0
    %2811 = vmatprep.subr.mxu0 0.0
    %2812 = vmatpush1.xpose.msra.mxu0 0.0
    %2813 = vmatprep.subr.mxu0 0.0
    %2814 = vmatpush1.xpose.msra.mxu0 0.0
    %2815 = vmatprep.subr.mxu0 0.0
    %2816 = vmatpush1.xpose.msra.mxu0 0.0
    %2817 = vmatprep.subr.mxu0 0.0
    %2818 = vmatpush1.xpose.msra.mxu0 0.0
    %2819 = vmatprep.subr.mxu0 0.0
    %2820 = vmatpush1.xpose.msra.mxu0 0.0
    %2821 = vmatprep.subr.mxu0 0.0
    %2822 = vmatpush1.xpose.msra.mxu0 0.0
    %2823 = vmatprep.subr.mxu0 0.0
    %2824 = vmatpush1.xpose.msra.mxu0 0.0
    %2825 = vmatprep.subr.mxu0 0.0
    %2826 = vmatpush1.xpose.msra.mxu0 0.0
    %2827 = vmatprep.subr.mxu0 0.0
    %2828 = vmatpush1.xpose.msra.mxu0 0.0
    %2829 = vmatprep.subr.mxu0 0.0
    %2830 = vmatpush1.xpose.msra.mxu0 0.0
    %2831 = vmatprep.subr.mxu0 0.0
    %2832 = vmatpush1.xpose.msra.mxu0 0.0
    %2833 = vmatprep.subr.mxu0 0.0
    %2834 = vmatpush1.xpose.msra.mxu0 0.0
    %2835 = vmatprep.subr.mxu0 0.0
    %2836 = vmatpush1.xpose.msra.mxu0 0.0
    %2837 = vmatprep.subr.mxu0 0.0
    %2838 = vmatpush1.xpose.msra.mxu0 0.0
    %2839 = vmatprep.subr.mxu0 0.0
    %2840 = vmatpush1.xpose.msra.mxu0 0.0
    %2841 = vmatprep.subr.mxu0 0.0
    %2842 = vmatpush1.xpose.msra.mxu0 0.0
    %2843 = vmatprep.subr.mxu0 0.0
    %2844 = vmatpush1.xpose.msra.mxu0 0.0
    %2845 = vmatprep.subr.mxu0 0.0
    %2846 = vmatpush1.xpose.msra.mxu0 0.0
    %2847 = vmatprep.mubr.f32.mxu0 0.0
    %2848 = vmatmul.mubr.f32.gmra.mrb[0].mxu0 %v2781
    %v2849 = vpop.f32.mrb[0].mxu0
    %v2850 = vadd.f32 %v2115, %v2849
    %v2851 = vpop.f32.mrb[0].mxu0
    %2852 = vdwg.mxu0
    %v2853 = vsel %vm2270, %v2777, -inf
    %2854 = vmax.xlane.f32.xlu0 %v2853
    %v2855 = vpop.xlane.xlu0 %2854
    %v2856 = vsel %vm2270, %v2850, -inf
    %2857 = vmax.xlane.f32.xlu0 %v2856
    %v2858 = vpop.xlane.xlu0 %2857
    %v2859 = vsub.f32 %v2777, %v2855
    %v2860 = vsub.f32 %v2850, %v2858
    %v2861 = vmul.f32 %v2859, 1.442695
    %v2862 = vpow.pop %v2861
    %v2863 = vmul.f32 %v2860, 1.442695
    %v2864 = vpow.pop %v2863
    %v2865 = vsel %vm2270, %v2862, 0.0
    %2866 = vadd.xlane.f32.xlu0 %v2865
    %v2867 = vpop.xlane.xlu0 %2866
    %v2868 = vsel %vm2270, %v2864, 0.0
    %2869 = vadd.xlane.f32.xlu0 %v2868
    %v2870 = vpop.xlane.xlu0 %2869
    %v2871 = vrcp.pop %v2867
    %v2872 = vmul.f32 %v2862, %v2871
    %v2873 = vrcp.pop %v2870
    %v2874 = vmul.f32 %v2864, %v2873
    %2875 = vst.msk [vmem:[%s18] sm:$0xff] %vm2270, %v2872
    %2876 = vst.msk [vmem:[%s18 + $0x8] sm:$0xff] %vm2270, %v2874
    // Predicated region
    $region66: #{vi_nmt_forward.1} parent=1 // pred_check
      _
    $region67: #{vi_nmt_forward.1} parent=1 // pred_check_branch
      %2878 = sbr.rel (0) target = $region69
    $region68: #{vi_nmt_forward.1} parent=1 // pred_region
      _
    $region69: #{vi_nmt_forward.1} parent=1 // pred_fallthru
      _
    // Predicated region
    $region70: #{vi_nmt_forward.1} parent=1 // pred_check
      _
    $region71: #{vi_nmt_forward.1} parent=1 // pred_check_branch
      %2880 = sbr.rel (0) target = $region73
    $region72: #{vi_nmt_forward.1} parent=1 // pred_region
      _
    $region73: #{vi_nmt_forward.1} parent=1 // pred_fallthru
      _
    // Predicated region
    $region74: #{vi_nmt_forward.1} parent=1 // pred_check
      _
    $region75: #{vi_nmt_forward.1} parent=1 // pred_check_branch
      %2882 = sbr.rel (0) target = $region77
    $region76: #{vi_nmt_forward.1} parent=1 // pred_region
      _
    $region77: #{vi_nmt_forward.1} parent=1 // pred_fallthru
      _
    // Predicated region
    $region78: #{vi_nmt_forward.1} parent=1 // pred_check
      _
    $region79: #{vi_nmt_forward.1} parent=1 // pred_check_branch
      %2884 = sbr.rel (0) target = $region81
    $region80: #{vi_nmt_forward.1} parent=1 // pred_region
      %s2886 = ssub.s32 32, 32
      %2887 = vsyncadd [#allocation5], %s2886
      %s2889 = sshll.u32 [#allocation4], 4
      %s2890 = int_to_ptr.vmem [resolvable:$true] %s2889
      %2892 = dma.vmem_to_hbm [thread:$0]  %s2890, 32, %s19, [#allocation5]
    $region81: #{vi_nmt_forward.1} parent=1 // pred_fallthru
      _
    // Predicated region
    $region82: #{vi_nmt_forward.1} parent=1 // pred_check
      _
    $region83: #{vi_nmt_forward.1} parent=1 // pred_check_branch
      %2894 = sbr.rel (0) target = $region85
    $region84: #{vi_nmt_forward.1} parent=1 // pred_region
      _
    $region85: #{vi_nmt_forward.1} parent=1 // pred_fallthru
      _
    // Predicated region
    $region86: #{vi_nmt_forward.1} parent=1 // pred_check
      _
    $region87: #{vi_nmt_forward.1} parent=1 // pred_check_branch
      %2896 = sbr.rel (0) target = $region89
    $region88: #{vi_nmt_forward.1} parent=1 // pred_region
      _
    $region89: #{vi_nmt_forward.1} parent=1 // pred_fallthru
      _
    // Predicated region
    $region90: #{vi_nmt_forward.1} parent=1 // pred_check
      _
    $region91: #{vi_nmt_forward.1} parent=1 // pred_check_branch
      %2898 = sbr.rel (0) target = $region93
    $region92: #{vi_nmt_forward.1} parent=1 // pred_region
      _
    $region93: #{vi_nmt_forward.1} parent=1 // pred_fallthru
      _
    // Predicated region
    $region94: #{vi_nmt_forward.1} parent=1 // pred_check
      _
    $region95: #{vi_nmt_forward.1} parent=1 // pred_check_branch
      %2900 = sbr.rel (0) target = $region97
    $region96: #{vi_nmt_forward.1} parent=1 // pred_region
      %2901 = dma.done [#allocation5], 32
    $region97: #{vi_nmt_forward.1} parent=1 // pred_fallthru
      _
    %2902 = vsyncpa [#allocation5], 1

</llo_original>
